<compile_context>
chip_gen: v6e
topology: v6e:2x2x1
jax: 0.10.0
libtpu: 0.0.40
codegen_flags: <defaults>
</compile_context>

<pallas_src>
import functools

import jax
import jax.numpy as jnp
from jax.experimental import pallas as pl
from jax.experimental.pallas import tpu as pltpu

EPS = 1e-5
LANE = 128


def _round_up(x, m):
    return (x + m - 1) // m * m


def _pick_batch_block(n):
    """Images per grid step: bigger matmul M, but keep >=2 grid steps for pipelining."""
    for cand in (8, 4, 2):
        if n % cand == 0 and n // cand >= 2:
            return cand
    return 1


def _vmem_limit_bytes():
    """Derive scoped-VMEM limit from the chip (64 MiB v7x, 128 MiB v5e/v6e)."""
    try:
        cap = getattr(pltpu.get_tpu_info(), "vmem_capacity_bytes", 64 * 1024 * 1024)
    except Exception:
        cap = 64 * 1024 * 1024
    return int(min(max(cap * 3 // 4, 32 * 1024 * 1024), 100 * 1024 * 1024))


# ------------------------------ fused kernel --------------------------------

def wide_block_kernel(ph_ref, msk_ref, w1_ref, s1_ref, b1_ref, s2_ref, b2_ref,
                      w2_ref, *rest, stride, nb, ho, wo, cp, pp, projection,
                      sc_phase, sc_off):
    """Whole WideBasicBlock for a block of `nb` images.

    ph_ref : (nb, hph, wph, s*s*cp) bf16  space-to-depth phases of zero-padded x (raw)
    msk_ref: (s*s, hph, wph, 1)     f32   1.0 on real pixels, 0.0 on conv padding
    w1_ref : (3, 3*cp, pp)          bf16  conv1 weights, ky-major, kx taps stacked on K
    s1/b1  : (1, cp) f32 ; s2/b2 : (1, pp) f32   folded BN scale/shift (0 on pad chans)
    w2_ref : (3, 3*pp, pp)          bf16
    ws_ref : (cp, pp)               bf16  (projection shortcut only)
    o_ref  : (nb, ho, wo, pp)       bf16
    scratches: act_ref (nb, hph, wph, s*s*cp) bf16 ; y_ref (nb, ho+2, wo+2, pp) bf16
    """
    if projection:
        ws_ref, o_ref, act_ref, y_ref = rest
    else:
        ws_ref = None
        o_ref, act_ref, y_ref = rest

    nph = stride * stride
    m = nb * ho * wo

    # ---- bn1 + relu prologue, applied ONCE per phase (hoisted out of tap loop) ----
    s1 = s1_ref[...].reshape(1, 1, 1, cp)
    b1 = b1_ref[...].reshape(1, 1, 1, cp)
    for p in range(nph):
        xt = ph_ref[:, :, :, p * cp:(p + 1) * cp]          # bf16 -> f32 math below
        mt = msk_ref[p:p + 1]                               # (1, hph, wph, 1) f32
        act_ref[:, :, :, p * cp:(p + 1) * cp] = jnp.maximum(
            xt * s1 + mt * b1, 0.0).astype(jnp.bfloat16)

    # ---- conv1: 3 matmuls with K = 3*cp (the 3 kx taps concatenated along K) ----
    acc = jnp.zeros((m, pp), jnp.float32)
    for ky in range(3):
        pieces = []
        for kx in range(3):
            p = (ky % stride) * stride + (kx % stride)
            dy, dx = ky // stride, kx // stride
            pieces.append(
                act_ref[:, dy:dy + ho, dx:dx + wo, p * cp:(p + 1) * cp]
                .reshape(m, cp))
        acc = acc + jnp.dot(jnp.concatenate(pieces, axis=-1), w1_ref[ky],
                            preferred_element_type=jnp.float32)

    # ---- bn2 + relu, store into the zero-haloed VMEM scratch for conv2 ----
    y = jnp.maximum(acc * s2_ref[...] + b2_ref[...], 0.0)
    # zero only the four halo strips (re-done every step -> safe under megacore split)
    zrow = jnp.zeros((nb, 1, wo + 2, pp), jnp.bfloat16)
    zcol = jnp.zeros((nb, ho, 1, pp), jnp.bfloat16)
    y_ref[:, 0:1, :, :] = zrow
    y_ref[:, ho + 1:ho + 2, :, :] = zrow
    y_ref[:, 1:1 + ho, 0:1, :] = zcol
    y_ref[:, 1:1 + ho, wo + 1:wo + 2, :] = zcol
    y_ref[:, 1:1 + ho, 1:1 + wo, :] = y.reshape(nb, ho, wo, pp).astype(jnp.bfloat16)

    # ---- conv2 (3x3, stride 1, pad 1): 3 matmuls with K = 3*pp ----
    acc2 = jnp.zeros((m, pp), jnp.float32)
    for ky in range(3):
        pieces = [y_ref[:, ky:ky + ho, kx:kx + wo, :].reshape(m, pp)
                  for kx in range(3)]
        acc2 = acc2 + jnp.dot(jnp.concatenate(pieces, axis=-1), w2_ref[ky],
                              preferred_element_type=jnp.float32)

    # ---- shortcut: strided 1x1 projection (10th matmul) or identity add ----
    xs = ph_ref[:, sc_off:sc_off + ho, sc_off:sc_off + wo,
                sc_phase * cp:(sc_phase + 1) * cp].reshape(m, cp)
    if projection:
        acc2 = acc2 + jnp.dot(xs, ws_ref[...], preferred_element_type=jnp.float32)
    else:
        acc2 = acc2 + xs.astype(jnp.float32)      # identity: cp == pp here

    o_ref[...] = acc2.reshape(nb, ho, wo, pp).astype(o_ref.dtype)


# ------------------------------- glue (JAX) ---------------------------------

def _fold_bn(gamma, beta, mean, var, cpad):
    scale = gamma / jnp.sqrt(var + EPS)
    shift = beta - mean * scale
    pad = (0, cpad - gamma.shape[0])
    return (jnp.pad(scale, pad).reshape(1, cpad).astype(jnp.float32),
            jnp.pad(shift, pad).reshape(1, cpad).astype(jnp.float32))


def _phase_split(x, stride, hph, wph):
    """Zero-pad (conv pad=1) and space-to-depth.

    Returns
      phases: (N, hph, wph, s*s*C), phases[n,i,j,(a*s+b)*C+c] == pad(x)[n, s*i+a, s*j+b, c]
      mask  : (s*s, hph, wph, 1) f32, 1.0 where the padded pixel is a real pixel
    """
    n, h, w, c = x.shape
    pads = ((1, stride * hph - h - 1), (1, stride * wph - w - 1))
    xp = jnp.pad(x, ((0, 0),) + pads + ((0, 0),))
    xp = xp.reshape(n, hph, stride, wph, stride, c)
    phases = jnp.transpose(xp, (0, 1, 3, 2, 4, 5)).reshape(
        n, hph, wph, stride * stride * c)
    mk = jnp.pad(jnp.ones((h, w), jnp.float32), pads)
    mk = mk.reshape(hph, stride, wph, stride)
    mask = jnp.transpose(mk, (1, 3, 0, 2)).reshape(stride * stride, hph, wph, 1)
    return phases, mask


def wide_basic_block(x_nchw, params, stride):
    """WideBasicBlock forward (eval mode). NCHW in, NCHW out (f32)."""
    x = jnp.transpose(x_nchw, (0, 2, 3, 1))                 # NCHW -> NHWC
    n, h, w, cin = x.shape
    planes = params["conv1_w"].shape[0]

    cp = _round_up(cin, LANE)        # lane-dense in-channels
    pp = _round_up(planes, LANE)     # lane-dense out-channels
    ho = (h + 2 - 3) // stride + 1
    wo = (w + 2 - 3) // stride + 1
    hph = ho + (2 // stride)         # NB: intentionally ho + (2//stride), not (ho+2)//stride
    wph = wo + (2 // stride)
    nph = stride * stride

    # zero channel padding; cast activations to bf16 BEFORE the phase split so the
    # XLA-side pad/transpose intermediate and the kernel's HBM read are half-size.
    x_cp = jnp.pad(x, ((0, 0), (0, 0), (0, 0), (0, cp - cin))).astype(jnp.bfloat16)
    phases, mask = _phase_split(x_cp, stride, hph, wph)

    # folded eval-mode batchnorms (padded channels provably stay zero)
    s1, b1 = _fold_bn(params["bn1_gamma"], params["bn1_beta"],
                      params["bn1_mean"], params["bn1_var"], cp)
    s2, b2 = _fold_bn(params["bn2_gamma"], params["bn2_beta"],
                      params["bn2_mean"], params["bn2_var"], pp)

    # conv weights: OIHW -> (ky, 3*Cin, Cout), kx taps stacked along K, bf16 for MXU
    w1 = jnp.transpose(params["conv1_w"], (2, 3, 1, 0))              # (3,3,cin,planes)
    w1 = jnp.pad(w1, ((0, 0), (0, 0), (0, cp - cin), (0, pp - planes)))
    w1 = w1.reshape(3, 3 * cp, pp).astype(jnp.bfloat16)
    w2 = jnp.transpose(params["conv2_w"], (2, 3, 1, 0))
    w2 = jnp.pad(w2, ((0, 0), (0, 0), (0, pp - planes), (0, pp - planes)))
    w2 = w2.reshape(3, 3 * pp, pp).astype(jnp.bfloat16)

    projection = (stride != 1) or (cin != planes)
    # the shortcut reads raw x at (stride*oy, stride*ox) == one phase of `phases`
    sc_phase = (1 % stride) * stride + (1 % stride)
    sc_off = 1 // stride

    nb = _pick_batch_block(n)
    cparams = pltpu.CompilerParams(
        dimension_semantics=("parallel",),
        vmem_limit_bytes=_vmem_limit_bytes())

    in_specs = [
        pl.BlockSpec((nb, hph, wph, nph * cp), lambda i: (i, 0, 0, 0)),
        pl.BlockSpec((nph, hph, wph, 1), lambda i: (0, 0, 0, 0)),
        pl.BlockSpec((3, 3 * cp, pp), lambda i: (0, 0, 0)),
        pl.BlockSpec((1, cp), lambda i: (0, 0)),
        pl.BlockSpec((1, cp), lambda i: (0, 0)),
        pl.BlockSpec((1, pp), lambda i: (0, 0)),
        pl.BlockSpec((1, pp), lambda i: (0, 0)),
        pl.BlockSpec((3, 3 * pp, pp), lambda i: (0, 0, 0)),
    ]
    args = [phases, mask, w1, s1, b1, s2, b2, w2]
    if projection:
        ws = jnp.transpose(params["shortcut_w"][:, :, 0, 0], (1, 0))  # (cin, planes)
        ws = jnp.pad(ws, ((0, cp - cin), (0, pp - planes))).astype(jnp.bfloat16)
        in_specs.append(pl.BlockSpec((cp, pp), lambda i: (0, 0)))
        args.append(ws)

    out = pl.pallas_call(
        functools.partial(wide_block_kernel, stride=stride, nb=nb, ho=ho, wo=wo,
                          cp=cp, pp=pp, projection=projection,
                          sc_phase=sc_phase, sc_off=sc_off),
        out_shape=jax.ShapeDtypeStruct((n, ho, wo, pp), jnp.bfloat16),
        grid=(n // nb,),
        in_specs=in_specs,
        out_specs=pl.BlockSpec((nb, ho, wo, pp), lambda i: (i, 0, 0, 0)),
        scratch_shapes=[
            pltpu.VMEM((nb, hph, wph, nph * cp), jnp.bfloat16),   # relu(bn1(x)) phases
            pltpu.VMEM((nb, ho + 2, wo + 2, pp), jnp.bfloat16),   # relu(bn2(conv1)) + halo
        ],
        compiler_params=cparams,
    )(*args)

    # Trim channel padding and go back to NCHW f32 for the caller. (When stacking
    # blocks, keep the padded bf16 NHWC layout between blocks and do this once.)
    out = out[..., :planes].astype(jnp.float32)
    return jnp.transpose(out, (0, 3, 1, 2))


# ------------------------- pure-JAX reference check --------------------------

def _reference(x, params, stride):
    def bn(z, g, b, m, v):
        g, b, m, v = (t[None, :, None, None] for t in (g, b, m, v))
        return (z - m) / jnp.sqrt(v + EPS) * g + b

    dn = ("NCHW", "OIHW", "NCHW")
    out = jnp.maximum(bn(x, params["bn1_gamma"], params["bn1_beta"],
                         params["bn1_mean"], params["bn1_var"]), 0.0)
    out = jax.lax.conv_general_dilated(out, params["conv1_w"], (stride, stride),
                                       ((1, 1), (1, 1)), dimension_numbers=dn)
    out = jnp.maximum(bn(out, params["bn2_gamma"], params["bn2_beta"],
                         params["bn2_mean"], params["bn2_var"]), 0.0)
    out = jax.lax.conv_general_dilated(out, params["conv2_w"], (1, 1),
                                       ((1, 1), (1, 1)), dimension_numbers=dn)
    cin, planes = x.shape[1], params["conv1_w"].shape[0]
    if stride != 1 or cin != planes:
        sc = jax.lax.conv_general_dilated(x, params["shortcut_w"], (stride, stride),
                                          ((0, 0), (0, 0)), dimension_numbers=dn)
    else:
        sc = x
    return out + sc


def _make_params(key, cin, planes, projection):
    keys = jax.random.split(key, 11)
    f32 = jnp.float32
    p = {
        "bn1_gamma": jax.random.uniform(keys[0], (cin,), f32, 0.5, 1.5),
        "bn1_beta": jax.random.normal(keys[1], (cin,), f32) * 0.1,
        "bn1_mean": jax.random.normal(keys[2], (cin,), f32) * 0.1,
        "bn1_var": jax.random.uniform(keys[3], (cin,), f32, 0.5, 1.5),
        "conv1_w": jax.random.normal(keys[4], (planes, cin, 3, 3), f32) * 0.1,
        "bn2_gamma": jax.random.uniform(keys[5], (planes,), f32, 0.5, 1.5),
        "bn2_beta": jax.random.normal(keys[6], (planes,), f32) * 0.1,
        "bn2_mean": jax.random.normal(keys[7], (planes,), f32) * 0.1,
        "bn2_var": jax.random.uniform(keys[8], (planes,), f32, 0.5, 1.5),
        "conv2_w": jax.random.normal(keys[9], (planes, planes, 3, 3), f32) * 0.1,
    }
    if projection:
        p["shortcut_w"] = jax.random.normal(keys[10], (planes, cin, 1, 1), f32) * 0.1
    return p


# ----------------------------------- main ------------------------------------

if __name__ == "__main__":
    root = jax.random.PRNGKey(0)
    k1, k2, kx1, kx2 = jax.random.split(root, 4)

    # Config 1: projection shortcut (stride=2, in_planes != planes).
    N, Cin, H, W, planes, stride = 2, 4, 16, 16, 8, 2
    params1 = _make_params(k1, Cin, planes, projection=True)
    x1 = jax.random.normal(kx1, (N, Cin, H, W), jnp.float32)
    out1 = jax.block_until_ready(wide_basic_block(x1, params1, stride))
    ref1 = _reference(x1, params1, stride)
    assert out1.shape == ref1.shape == (N, planes, H // stride, W // stride)
    # bf16 activations/weights (f32 accumulation) -> loosened tolerance vs f32 ref.
    assert jnp.allclose(out1, ref1, atol=4e-2, rtol=4e-2), "projection-path mismatch"

    # Config 2: identity shortcut (stride=1, in_planes == planes).
    params2 = _make_params(k2, 8, 8, projection=False)
    x2 = jax.random.normal(kx2, (N, 8, H, W), jnp.float32)
    out2 = jax.block_until_ready(wide_basic_block(x2, params2, 1))
    ref2 = _reference(x2, params2, 1)
    assert out2.shape == ref2.shape == (N, 8, H, W)
    assert jnp.allclose(out2, ref2, atol=4e-2, rtol=4e-2), "identity-path mismatch"

    print("KERNEL_OK")
</pallas_src>

<mosaic_0001>
module attributes {stable_mosaic.version = 11 : i64} {
  func.func @wide_block_kernel(%arg0: i32, %arg1: memref<1x9x9x512xbf16, #tpu.memory_space<vmem>>, %arg2: memref<4x9x9x1xf32, #tpu.memory_space<vmem>>, %arg3: memref<3x384x128xbf16, #tpu.memory_space<vmem>>, %arg4: memref<1x128xf32, #tpu.memory_space<vmem>>, %arg5: memref<1x128xf32, #tpu.memory_space<vmem>>, %arg6: memref<1x128xf32, #tpu.memory_space<vmem>>, %arg7: memref<1x128xf32, #tpu.memory_space<vmem>>, %arg8: memref<3x384x128xbf16, #tpu.memory_space<vmem>>, %arg9: memref<128x128xbf16, #tpu.memory_space<vmem>>, %arg10: memref<1x8x8x128xbf16, #tpu.memory_space<vmem>>, %arg11: memref<1x9x9x512xbf16, #tpu.memory_space<vmem>>, %arg12: memref<1x10x10x128xbf16, #tpu.memory_space<vmem>>) attributes {dimension_semantics = [#tpu.dimension_semantics<parallel>], iteration_bounds = array<i64: 2>, scalar_prefetch = 0 : i64, scratch_operands = 2 : i64, tpu.core_type = #tpu.core_type<tc>, window_params = [{transform_indices = @transform_0, window_bounds = array<i64: 1, 9, 9, 512>}, {pipeline_mode = #tpu.pipeline_mode<synchronous>, transform_indices = @transform_1, window_bounds = array<i64: 4, 9, 9, 1>}, {pipeline_mode = #tpu.pipeline_mode<synchronous>, transform_indices = @transform_2, window_bounds = array<i64: 3, 384, 128>}, {pipeline_mode = #tpu.pipeline_mode<synchronous>, transform_indices = @transform_3, window_bounds = array<i64: 1, 128>}, {pipeline_mode = #tpu.pipeline_mode<synchronous>, transform_indices = @transform_4, window_bounds = array<i64: 1, 128>}, {pipeline_mode = #tpu.pipeline_mode<synchronous>, transform_indices = @transform_5, window_bounds = array<i64: 1, 128>}, {pipeline_mode = #tpu.pipeline_mode<synchronous>, transform_indices = @transform_6, window_bounds = array<i64: 1, 128>}, {pipeline_mode = #tpu.pipeline_mode<synchronous>, transform_indices = @transform_7, window_bounds = array<i64: 3, 384, 128>}, {pipeline_mode = #tpu.pipeline_mode<synchronous>, transform_indices = @transform_8, window_bounds = array<i64: 128, 128>}, {transform_indices = @transform_9, window_bounds = array<i64: 1, 8, 8, 128>}]} {
    %c0 = arith.constant 0 : index
    %c0_0 = arith.constant 0 : index
    %0 = vector.load %arg4[%c0, %c0_0] : memref<1x128xf32, #tpu.memory_space<vmem>>, vector<1x128xf32>
    %1 = vector.shape_cast %0 : vector<1x128xf32> to vector<1x1x1x128xf32>
    %c0_1 = arith.constant 0 : index
    %c0_2 = arith.constant 0 : index
    %2 = vector.load %arg5[%c0_1, %c0_2] : memref<1x128xf32, #tpu.memory_space<vmem>>, vector<1x128xf32>
    %3 = vector.shape_cast %2 : vector<1x128xf32> to vector<1x1x1x128xf32>
    %c0_3 = arith.constant 0 : index
    %c0_4 = arith.constant 0 : index
    %c0_5 = arith.constant 0 : index
    %c0_6 = arith.constant 0 : index
    %4 = vector.load %arg1[%c0_3, %c0_4, %c0_5, %c0_6] : memref<1x9x9x512xbf16, #tpu.memory_space<vmem>>, vector<1x9x9x128xbf16>
    %c0_7 = arith.constant 0 : index
    %c0_8 = arith.constant 0 : index
    %c0_9 = arith.constant 0 : index
    %c0_10 = arith.constant 0 : index
    %5 = vector.load %arg2[%c0_7, %c0_8, %c0_9, %c0_10] : memref<4x9x9x1xf32, #tpu.memory_space<vmem>>, vector<1x9x9x1xf32>
    %6 = arith.extf %4 : vector<1x9x9x128xbf16> to vector<1x9x9x128xf32>
    %7 = vector.broadcast %1 : vector<1x1x1x128xf32> to vector<1x9x9x128xf32>
    %8 = arith.mulf %6, %7 : vector<1x9x9x128xf32>
    %9 = vector.broadcast %5 : vector<1x9x9x1xf32> to vector<1x9x9x128xf32>
    %10 = vector.broadcast %3 : vector<1x1x1x128xf32> to vector<1x9x9x128xf32>
    %11 = arith.mulf %9, %10 : vector<1x9x9x128xf32>
    %12 = arith.addf %8, %11 : vector<1x9x9x128xf32>
    %cst = arith.constant 0.000000e+00 : f32
    %13 = vector.broadcast %cst : f32 to vector<1x9x9x128xf32>
    %14 = arith.maximumf %12, %13 : vector<1x9x9x128xf32>
    %15 = arith.truncf %14 : vector<1x9x9x128xf32> to vector<1x9x9x128xbf16>
    %c0_11 = arith.constant 0 : index
    %c0_12 = arith.constant 0 : index
    %c0_13 = arith.constant 0 : index
    %c0_14 = arith.constant 0 : index
    %16 = vector.load %arg11[%c0_11, %c0_12, %c0_13, %c0_14] : memref<1x9x9x512xbf16, #tpu.memory_space<vmem>>, vector<1x9x9x128xbf16>
    tpu.vector_store %arg11[%c0_11, %c0_12, %c0_13, %c0_14], %15 {strides = array<i32>} : memref<1x9x9x512xbf16, #tpu.memory_space<vmem>>, vector<1x9x9x128xbf16>,
    %c0_15 = arith.constant 0 : index
    %c0_16 = arith.constant 0 : index
    %c0_17 = arith.constant 0 : index
    %c128 = arith.constant 128 : index
    %17 = vector.load %arg1[%c0_15, %c0_16, %c0_17, %c128] : memref<1x9x9x512xbf16, #tpu.memory_space<vmem>>, vector<1x9x9x128xbf16>
    %c1 = arith.constant 1 : index
    %c0_18 = arith.constant 0 : index
    %c0_19 = arith.constant 0 : index
    %c0_20 = arith.constant 0 : index
    %18 = vector.load %arg2[%c1, %c0_18, %c0_19, %c0_20] : memref<4x9x9x1xf32, #tpu.memory_space<vmem>>, vector<1x9x9x1xf32>
    %19 = arith.extf %17 : vector<1x9x9x128xbf16> to vector<1x9x9x128xf32>
    %20 = vector.broadcast %1 : vector<1x1x1x128xf32> to vector<1x9x9x128xf32>
    %21 = arith.mulf %19, %20 : vector<1x9x9x128xf32>
    %22 = vector.broadcast %18 : vector<1x9x9x1xf32> to vector<1x9x9x128xf32>
    %23 = vector.broadcast %3 : vector<1x1x1x128xf32> to vector<1x9x9x128xf32>
    %24 = arith.mulf %22, %23 : vector<1x9x9x128xf32>
    %25 = arith.addf %21, %24 : vector<1x9x9x128xf32>
    %cst_21 = arith.constant 0.000000e+00 : f32
    %26 = vector.broadcast %cst_21 : f32 to vector<1x9x9x128xf32>
    %27 = arith.maximumf %25, %26 : vector<1x9x9x128xf32>
    %28 = arith.truncf %27 : vector<1x9x9x128xf32> to vector<1x9x9x128xbf16>
    %c0_22 = arith.constant 0 : index
    %c0_23 = arith.constant 0 : index
    %c0_24 = arith.constant 0 : index
    %c128_25 = arith.constant 128 : index
    %29 = vector.load %arg11[%c0_22, %c0_23, %c0_24, %c128_25] : memref<1x9x9x512xbf16, #tpu.memory_space<vmem>>, vector<1x9x9x128xbf16>
    tpu.vector_store %arg11[%c0_22, %c0_23, %c0_24, %c128_25], %28 {strides = array<i32>} : memref<1x9x9x512xbf16, #tpu.memory_space<vmem>>, vector<1x9x9x128xbf16>,
    %c0_26 = arith.constant 0 : index
    %c0_27 = arith.constant 0 : index
    %c0_28 = arith.constant 0 : index
    %c256 = arith.constant 256 : index
    %30 = vector.load %arg1[%c0_26, %c0_27, %c0_28, %c256] : memref<1x9x9x512xbf16, #tpu.memory_space<vmem>>, vector<1x9x9x128xbf16>
    %c2 = arith.constant 2 : index
    %c0_29 = arith.constant 0 : index
    %c0_30 = arith.constant 0 : index
    %c0_31 = arith.constant 0 : index
    %31 = vector.load %arg2[%c2, %c0_29, %c0_30, %c0_31] : memref<4x9x9x1xf32, #tpu.memory_space<vmem>>, vector<1x9x9x1xf32>
    %32 = arith.extf %30 : vector<1x9x9x128xbf16> to vector<1x9x9x128xf32>
    %33 = vector.broadcast %1 : vector<1x1x1x128xf32> to vector<1x9x9x128xf32>
    %34 = arith.mulf %32, %33 : vector<1x9x9x128xf32>
    %35 = vector.broadcast %31 : vector<1x9x9x1xf32> to vector<1x9x9x128xf32>
    %36 = vector.broadcast %3 : vector<1x1x1x128xf32> to vector<1x9x9x128xf32>
    %37 = arith.mulf %35, %36 : vector<1x9x9x128xf32>
    %38 = arith.addf %34, %37 : vector<1x9x9x128xf32>
    %cst_32 = arith.constant 0.000000e+00 : f32
    %39 = vector.broadcast %cst_32 : f32 to vector<1x9x9x128xf32>
    %40 = arith.maximumf %38, %39 : vector<1x9x9x128xf32>
    %41 = arith.truncf %40 : vector<1x9x9x128xf32> to vector<1x9x9x128xbf16>
    %c0_33 = arith.constant 0 : index
    %c0_34 = arith.constant 0 : index
    %c0_35 = arith.constant 0 : index
    %c256_36 = arith.constant 256 : index
    %42 = vector.load %arg11[%c0_33, %c0_34, %c0_35, %c256_36] : memref<1x9x9x512xbf16, #tpu.memory_space<vmem>>, vector<1x9x9x128xbf16>
    tpu.vector_store %arg11[%c0_33, %c0_34, %c0_35, %c256_36], %41 {strides = array<i32>} : memref<1x9x9x512xbf16, #tpu.memory_space<vmem>>, vector<1x9x9x128xbf16>,
    %c0_37 = arith.constant 0 : index
    %c0_38 = arith.constant 0 : index
    %c0_39 = arith.constant 0 : index
    %c384 = arith.constant 384 : index
    %43 = vector.load %arg1[%c0_37, %c0_38, %c0_39, %c384] : memref<1x9x9x512xbf16, #tpu.memory_space<vmem>>, vector<1x9x9x128xbf16>
    %c3 = arith.constant 3 : index
    %c0_40 = arith.constant 0 : index
    %c0_41 = arith.constant 0 : index
    %c0_42 = arith.constant 0 : index
    %44 = vector.load %arg2[%c3, %c0_40, %c0_41, %c0_42] : memref<4x9x9x1xf32, #tpu.memory_space<vmem>>, vector<1x9x9x1xf32>
    %45 = arith.extf %43 : vector<1x9x9x128xbf16> to vector<1x9x9x128xf32>
    %46 = vector.broadcast %1 : vector<1x1x1x128xf32> to vector<1x9x9x128xf32>
    %47 = arith.mulf %45, %46 : vector<1x9x9x128xf32>
    %48 = vector.broadcast %44 : vector<1x9x9x1xf32> to vector<1x9x9x128xf32>
    %49 = vector.broadcast %3 : vector<1x1x1x128xf32> to vector<1x9x9x128xf32>
    %50 = arith.mulf %48, %49 : vector<1x9x9x128xf32>
    %51 = arith.addf %47, %50 : vector<1x9x9x128xf32>
    %cst_43 = arith.constant 0.000000e+00 : f32
    %52 = vector.broadcast %cst_43 : f32 to vector<1x9x9x128xf32>
    %53 = arith.maximumf %51, %52 : vector<1x9x9x128xf32>
    %54 = arith.truncf %53 : vector<1x9x9x128xf32> to vector<1x9x9x128xbf16>
    %c0_44 = arith.constant 0 : index
    %c0_45 = arith.constant 0 : index
    %c0_46 = arith.constant 0 : index
    %c384_47 = arith.constant 384 : index
    %55 = vector.load %arg11[%c0_44, %c0_45, %c0_46, %c384_47] : memref<1x9x9x512xbf16, #tpu.memory_space<vmem>>, vector<1x9x9x128xbf16>
    tpu.vector_store %arg11[%c0_44, %c0_45, %c0_46, %c384_47], %54 {strides = array<i32>} : memref<1x9x9x512xbf16, #tpu.memory_space<vmem>>, vector<1x9x9x128xbf16>,
    %cst_48 = arith.constant 0.000000e+00 : f32
    %56 = vector.broadcast %cst_48 : f32 to vector<64x128xf32>
    %c0_49 = arith.constant 0 : index
    %c0_50 = arith.constant 0 : index
    %c0_51 = arith.constant 0 : index
    %c0_52 = arith.constant 0 : index
    %57 = vector.load %arg11[%c0_49, %c0_50, %c0_51, %c0_52] : memref<1x9x9x512xbf16, #tpu.memory_space<vmem>>, vector<1x8x8x128xbf16>
    %58 = vector.shape_cast %57 : vector<1x8x8x128xbf16> to vector<64x128xbf16>
    %c0_53 = arith.constant 0 : index
    %c0_54 = arith.constant 0 : index
    %c0_55 = arith.constant 0 : index
    %c128_56 = arith.constant 128 : index
    %59 = vector.load %arg11[%c0_53, %c0_54, %c0_55, %c128_56] : memref<1x9x9x512xbf16, #tpu.memory_space<vmem>>, vector<1x8x8x128xbf16>
    %60 = vector.shape_cast %59 : vector<1x8x8x128xbf16> to vector<64x128xbf16>
    %c0_57 = arith.constant 0 : index
    %c0_58 = arith.constant 0 : index
    %c1_59 = arith.constant 1 : index
    %c0_60 = arith.constant 0 : index
    %61 = vector.load %arg11[%c0_57, %c0_58, %c1_59, %c0_60] : memref<1x9x9x512xbf16, #tpu.memory_space<vmem>>, vector<1x8x8x128xbf16>
    %62 = vector.shape_cast %61 : vector<1x8x8x128xbf16> to vector<64x128xbf16>
    %63 = tpu.concatenate %58, %60, %62 in 1 : vector<64x128xbf16>, vector<64x128xbf16>, vector<64x128xbf16> -> vector<64x384xbf16>
    %c0_61 = arith.constant 0 : index
    %c0_62 = arith.constant 0 : index
    %c0_63 = arith.constant 0 : index
    %64 = vector.load %arg3[%c0_61, %c0_62, %c0_63] : memref<3x384x128xbf16, #tpu.memory_space<vmem>>, vector<1x384x128xbf16>
    %65 = vector.shape_cast %64 : vector<1x384x128xbf16> to vector<384x128xbf16>
    %cst_64 = arith.constant dense<0.000000e+00> : vector<64x128xf32>
    %66 = tpu.matmul %63, %65, %cst_64 {dimension_numbers = #tpu.dot_dimension_numbers<[1], [0], [0], [1], [0, 0, 1, 1], [], []>} : vector<64x384xbf16>, vector<384x128xbf16>, vector<64x128xf32> -> vector<64x128xf32>
    %67 = arith.addf %56, %66 : vector<64x128xf32>
    %c0_65 = arith.constant 0 : index
    %c0_66 = arith.constant 0 : index
    %c0_67 = arith.constant 0 : index
    %c256_68 = arith.constant 256 : index
    %68 = vector.load %arg11[%c0_65, %c0_66, %c0_67, %c256_68] : memref<1x9x9x512xbf16, #tpu.memory_space<vmem>>, vector<1x8x8x128xbf16>
    %69 = vector.shape_cast %68 : vector<1x8x8x128xbf16> to vector<64x128xbf16>
    %c0_69 = arith.constant 0 : index
    %c0_70 = arith.constant 0 : index
    %c0_71 = arith.constant 0 : index
    %c384_72 = arith.constant 384 : index
    %70 = vector.load %arg11[%c0_69, %c0_70, %c0_71, %c384_72] : memref<1x9x9x512xbf16, #tpu.memory_space<vmem>>, vector<1x8x8x128xbf16>
    %71 = vector.shape_cast %70 : vector<1x8x8x128xbf16> to vector<64x128xbf16>
    %c0_73 = arith.constant 0 : index
    %c0_74 = arith.constant 0 : index
    %c1_75 = arith.constant 1 : index
    %c256_76 = arith.constant 256 : index
    %72 = vector.load %arg11[%c0_73, %c0_74, %c1_75, %c256_76] : memref<1x9x9x512xbf16, #tpu.memory_space<vmem>>, vector<1x8x8x128xbf16>
    %73 = vector.shape_cast %72 : vector<1x8x8x128xbf16> to vector<64x128xbf16>
    %74 = tpu.concatenate %69, %71, %73 in 1 : vector<64x128xbf16>, vector<64x128xbf16>, vector<64x128xbf16> -> vector<64x384xbf16>
    %c1_77 = arith.constant 1 : index
    %c0_78 = arith.constant 0 : index
    %c0_79 = arith.constant 0 : index
    %75 = vector.load %arg3[%c1_77, %c0_78, %c0_79] : memref<3x384x128xbf16, #tpu.memory_space<vmem>>, vector<1x384x128xbf16>
    %76 = vector.shape_cast %75 : vector<1x384x128xbf16> to vector<384x128xbf16>
    %cst_80 = arith.constant dense<0.000000e+00> : vector<64x128xf32>
    %77 = tpu.matmul %74, %76, %cst_80 {dimension_numbers = #tpu.dot_dimension_numbers<[1], [0], [0], [1], [0, 0, 1, 1], [], []>} : vector<64x384xbf16>, vector<384x128xbf16>, vector<64x128xf32> -> vector<64x128xf32>
    %78 = arith.addf %67, %77 : vector<64x128xf32>
    %c0_81 = arith.constant 0 : index
    %c1_82 = arith.constant 1 : index
    %c0_83 = arith.constant 0 : index
    %c0_84 = arith.constant 0 : index
    %79 = vector.load %arg11[%c0_81, %c1_82, %c0_83, %c0_84] : memref<1x9x9x512xbf16, #tpu.memory_space<vmem>>, vector<1x8x8x128xbf16>
    %80 = vector.shape_cast %79 : vector<1x8x8x128xbf16> to vector<64x128xbf16>
    %c0_85 = arith.constant 0 : index
    %c1_86 = arith.constant 1 : index
    %c0_87 = arith.constant 0 : index
    %c128_88 = arith.constant 128 : index
    %81 = vector.load %arg11[%c0_85, %c1_86, %c0_87, %c128_88] : memref<1x9x9x512xbf16, #tpu.memory_space<vmem>>, vector<1x8x8x128xbf16>
    %82 = vector.shape_cast %81 : vector<1x8x8x128xbf16> to vector<64x128xbf16>
    %c0_89 = arith.constant 0 : index
    %c1_90 = arith.constant 1 : index
    %c1_91 = arith.constant 1 : index
    %c0_92 = arith.constant 0 : index
    %83 = vector.load %arg11[%c0_89, %c1_90, %c1_91, %c0_92] : memref<1x9x9x512xbf16, #tpu.memory_space<vmem>>, vector<1x8x8x128xbf16>
    %84 = vector.shape_cast %83 : vector<1x8x8x128xbf16> to vector<64x128xbf16>
    %85 = tpu.concatenate %80, %82, %84 in 1 : vector<64x128xbf16>, vector<64x128xbf16>, vector<64x128xbf16> -> vector<64x384xbf16>
    %c2_93 = arith.constant 2 : index
    %c0_94 = arith.constant 0 : index
    %c0_95 = arith.constant 0 : index
    %86 = vector.load %arg3[%c2_93, %c0_94, %c0_95] : memref<3x384x128xbf16, #tpu.memory_space<vmem>>, vector<1x384x128xbf16>
    %87 = vector.shape_cast %86 : vector<1x384x128xbf16> to vector<384x128xbf16>
    %cst_96 = arith.constant dense<0.000000e+00> : vector<64x128xf32>
    %88 = tpu.matmul %85, %87, %cst_96 {dimension_numbers = #tpu.dot_dimension_numbers<[1], [0], [0], [1], [0, 0, 1, 1], [], []>} : vector<64x384xbf16>, vector<384x128xbf16>, vector<64x128xf32> -> vector<64x128xf32>
    %89 = arith.addf %78, %88 : vector<64x128xf32>
    %c0_97 = arith.constant 0 : index
    %c0_98 = arith.constant 0 : index
    %90 = vector.load %arg6[%c0_97, %c0_98] : memref<1x128xf32, #tpu.memory_space<vmem>>, vector<1x128xf32>
    %91 = vector.broadcast %90 : vector<1x128xf32> to vector<64x128xf32>
    %92 = arith.mulf %89, %91 : vector<64x128xf32>
    %c0_99 = arith.constant 0 : index
    %c0_100 = arith.constant 0 : index
    %93 = vector.load %arg7[%c0_99, %c0_100] : memref<1x128xf32, #tpu.memory_space<vmem>>, vector<1x128xf32>
    %94 = vector.broadcast %93 : vector<1x128xf32> to vector<64x128xf32>
    %95 = arith.addf %92, %94 : vector<64x128xf32>
    %cst_101 = arith.constant 0.000000e+00 : f32
    %96 = vector.broadcast %cst_101 : f32 to vector<64x128xf32>
    %97 = arith.maximumf %95, %96 : vector<64x128xf32>
    %cst_102 = arith.constant 0.000000e+00 : bf16
    %98 = vector.broadcast %cst_102 : bf16 to vector<1x1x10x128xbf16>
    %cst_103 = arith.constant 0.000000e+00 : bf16
    %99 = vector.broadcast %cst_103 : bf16 to vector<1x8x1x128xbf16>
    %c0_104 = arith.constant 0 : index
    %c0_105 = arith.constant 0 : index
    %c0_106 = arith.constant 0 : index
    %c0_107 = arith.constant 0 : index
    %100 = vector.load %arg12[%c0_104, %c0_105, %c0_106, %c0_107] : memref<1x10x10x128xbf16, #tpu.memory_space<vmem>>, vector<1x1x10x128xbf16>
    tpu.vector_store %arg12[%c0_104, %c0_105, %c0_106, %c0_107], %98 {strides = array<i32>} : memref<1x10x10x128xbf16, #tpu.memory_space<vmem>>, vector<1x1x10x128xbf16>,
    %c0_108 = arith.constant 0 : index
    %c9 = arith.constant 9 : index
    %c0_109 = arith.constant 0 : index
    %c0_110 = arith.constant 0 : index
    %101 = vector.load %arg12[%c0_108, %c9, %c0_109, %c0_110] : memref<1x10x10x128xbf16, #tpu.memory_space<vmem>>, vector<1x1x10x128xbf16>
    tpu.vector_store %arg12[%c0_108, %c9, %c0_109, %c0_110], %98 {strides = array<i32>} : memref<1x10x10x128xbf16, #tpu.memory_space<vmem>>, vector<1x1x10x128xbf16>,
    %c0_111 = arith.constant 0 : index
    %c1_112 = arith.constant 1 : index
    %c0_113 = arith.constant 0 : index
    %c0_114 = arith.constant 0 : index
    %102 = vector.load %arg12[%c0_111, %c1_112, %c0_113, %c0_114] : memref<1x10x10x128xbf16, #tpu.memory_space<vmem>>, vector<1x8x1x128xbf16>
    tpu.vector_store %arg12[%c0_111, %c1_112, %c0_113, %c0_114], %99 {strides = array<i32>} : memref<1x10x10x128xbf16, #tpu.memory_space<vmem>>, vector<1x8x1x128xbf16>,
    %c0_115 = arith.constant 0 : index
    %c1_116 = arith.constant 1 : index
    %c9_117 = arith.constant 9 : index
    %c0_118 = arith.constant 0 : index
    %103 = vector.load %arg12[%c0_115, %c1_116, %c9_117, %c0_118] : memref<1x10x10x128xbf16, #tpu.memory_space<vmem>>, vector<1x8x1x128xbf16>
    tpu.vector_store %arg12[%c0_115, %c1_116, %c9_117, %c0_118], %99 {strides = array<i32>} : memref<1x10x10x128xbf16, #tpu.memory_space<vmem>>, vector<1x8x1x128xbf16>,
    %104 = vector.shape_cast %97 : vector<64x128xf32> to vector<1x8x8x128xf32>
    %105 = arith.truncf %104 : vector<1x8x8x128xf32> to vector<1x8x8x128xbf16>
    %c0_119 = arith.constant 0 : index
    %c1_120 = arith.constant 1 : index
    %c1_121 = arith.constant 1 : index
    %c0_122 = arith.constant 0 : index
    %106 = vector.load %arg12[%c0_119, %c1_120, %c1_121, %c0_122] : memref<1x10x10x128xbf16, #tpu.memory_space<vmem>>, vector<1x8x8x128xbf16>
    tpu.vector_store %arg12[%c0_119, %c1_120, %c1_121, %c0_122], %105 {strides = array<i32>} : memref<1x10x10x128xbf16, #tpu.memory_space<vmem>>, vector<1x8x8x128xbf16>,
    %cst_123 = arith.constant 0.000000e+00 : f32
    %107 = vector.broadcast %cst_123 : f32 to vector<64x128xf32>
    %c0_124 = arith.constant 0 : index
    %c0_125 = arith.constant 0 : index
    %c0_126 = arith.constant 0 : index
    %c0_127 = arith.constant 0 : index
    %108 = vector.load %arg12[%c0_124, %c0_125, %c0_126, %c0_127] : memref<1x10x10x128xbf16, #tpu.memory_space<vmem>>, vector<1x8x8x128xbf16>
    %109 = vector.shape_cast %108 : vector<1x8x8x128xbf16> to vector<64x128xbf16>
    %c0_128 = arith.constant 0 : index
    %c0_129 = arith.constant 0 : index
    %c1_130 = arith.constant 1 : index
    %c0_131 = arith.constant 0 : index
    %110 = vector.load %arg12[%c0_128, %c0_129, %c1_130, %c0_131] : memref<1x10x10x128xbf16, #tpu.memory_space<vmem>>, vector<1x8x8x128xbf16>
    %111 = vector.shape_cast %110 : vector<1x8x8x128xbf16> to vector<64x128xbf16>
    %c0_132 = arith.constant 0 : index
    %c0_133 = arith.constant 0 : index
    %c2_134 = arith.constant 2 : index
    %c0_135 = arith.constant 0 : index
    %112 = vector.load %arg12[%c0_132, %c0_133, %c2_134, %c0_135] : memref<1x10x10x128xbf16, #tpu.memory_space<vmem>>, vector<1x8x8x128xbf16>
    %113 = vector.shape_cast %112 : vector<1x8x8x128xbf16> to vector<64x128xbf16>
    %114 = tpu.concatenate %109, %111, %113 in 1 : vector<64x128xbf16>, vector<64x128xbf16>, vector<64x128xbf16> -> vector<64x384xbf16>
    %c0_136 = arith.constant 0 : index
    %c0_137 = arith.constant 0 : index
    %c0_138 = arith.constant 0 : index
    %115 = vector.load %arg8[%c0_136, %c0_137, %c0_138] : memref<3x384x128xbf16, #tpu.memory_space<vmem>>, vector<1x384x128xbf16>
    %116 = vector.shape_cast %115 : vector<1x384x128xbf16> to vector<384x128xbf16>
    %cst_139 = arith.constant dense<0.000000e+00> : vector<64x128xf32>
    %117 = tpu.matmul %114, %116, %cst_139 {dimension_numbers = #tpu.dot_dimension_numbers<[1], [0], [0], [1], [0, 0, 1, 1], [], []>} : vector<64x384xbf16>, vector<384x128xbf16>, vector<64x128xf32> -> vector<64x128xf32>
    %118 = arith.addf %107, %117 : vector<64x128xf32>
    %c0_140 = arith.constant 0 : index
    %c1_141 = arith.constant 1 : index
    %c0_142 = arith.constant 0 : index
    %c0_143 = arith.constant 0 : index
    %119 = vector.load %arg12[%c0_140, %c1_141, %c0_142, %c0_143] : memref<1x10x10x128xbf16, #tpu.memory_space<vmem>>, vector<1x8x8x128xbf16>
    %120 = vector.shape_cast %119 : vector<1x8x8x128xbf16> to vector<64x128xbf16>
    %c0_144 = arith.constant 0 : index
    %c1_145 = arith.constant 1 : index
    %c1_146 = arith.constant 1 : index
    %c0_147 = arith.constant 0 : index
    %121 = vector.load %arg12[%c0_144, %c1_145, %c1_146, %c0_147] : memref<1x10x10x128xbf16, #tpu.memory_space<vmem>>, vector<1x8x8x128xbf16>
    %122 = vector.shape_cast %121 : vector<1x8x8x128xbf16> to vector<64x128xbf16>
    %c0_148 = arith.constant 0 : index
    %c1_149 = arith.constant 1 : index
    %c2_150 = arith.constant 2 : index
    %c0_151 = arith.constant 0 : index
    %123 = vector.load %arg12[%c0_148, %c1_149, %c2_150, %c0_151] : memref<1x10x10x128xbf16, #tpu.memory_space<vmem>>, vector<1x8x8x128xbf16>
    %124 = vector.shape_cast %123 : vector<1x8x8x128xbf16> to vector<64x128xbf16>
    %125 = tpu.concatenate %120, %122, %124 in 1 : vector<64x128xbf16>, vector<64x128xbf16>, vector<64x128xbf16> -> vector<64x384xbf16>
    %c1_152 = arith.constant 1 : index
    %c0_153 = arith.constant 0 : index
    %c0_154 = arith.constant 0 : index
    %126 = vector.load %arg8[%c1_152, %c0_153, %c0_154] : memref<3x384x128xbf16, #tpu.memory_space<vmem>>, vector<1x384x128xbf16>
    %127 = vector.shape_cast %126 : vector<1x384x128xbf16> to vector<384x128xbf16>
    %cst_155 = arith.constant dense<0.000000e+00> : vector<64x128xf32>
    %128 = tpu.matmul %125, %127, %cst_155 {dimension_numbers = #tpu.dot_dimension_numbers<[1], [0], [0], [1], [0, 0, 1, 1], [], []>} : vector<64x384xbf16>, vector<384x128xbf16>, vector<64x128xf32> -> vector<64x128xf32>
    %129 = arith.addf %118, %128 : vector<64x128xf32>
    %c0_156 = arith.constant 0 : index
    %c2_157 = arith.constant 2 : index
    %c0_158 = arith.constant 0 : index
    %c0_159 = arith.constant 0 : index
    %130 = vector.load %arg12[%c0_156, %c2_157, %c0_158, %c0_159] : memref<1x10x10x128xbf16, #tpu.memory_space<vmem>>, vector<1x8x8x128xbf16>
    %131 = vector.shape_cast %130 : vector<1x8x8x128xbf16> to vector<64x128xbf16>
    %c0_160 = arith.constant 0 : index
    %c2_161 = arith.constant 2 : index
    %c1_162 = arith.constant 1 : index
    %c0_163 = arith.constant 0 : index
    %132 = vector.load %arg12[%c0_160, %c2_161, %c1_162, %c0_163] : memref<1x10x10x128xbf16, #tpu.memory_space<vmem>>, vector<1x8x8x128xbf16>
    %133 = vector.shape_cast %132 : vector<1x8x8x128xbf16> to vector<64x128xbf16>
    %c0_164 = arith.constant 0 : index
    %c2_165 = arith.constant 2 : index
    %c2_166 = arith.constant 2 : index
    %c0_167 = arith.constant 0 : index
    %134 = vector.load %arg12[%c0_164, %c2_165, %c2_166, %c0_167] : memref<1x10x10x128xbf16, #tpu.memory_space<vmem>>, vector<1x8x8x128xbf16>
    %135 = vector.shape_cast %134 : vector<1x8x8x128xbf16> to vector<64x128xbf16>
    %136 = tpu.concatenate %131, %133, %135 in 1 : vector<64x128xbf16>, vector<64x128xbf16>, vector<64x128xbf16> -> vector<64x384xbf16>
    %c2_168 = arith.constant 2 : index
    %c0_169 = arith.constant 0 : index
    %c0_170 = arith.constant 0 : index
    %137 = vector.load %arg8[%c2_168, %c0_169, %c0_170] : memref<3x384x128xbf16, #tpu.memory_space<vmem>>, vector<1x384x128xbf16>
    %138 = vector.shape_cast %137 : vector<1x384x128xbf16> to vector<384x128xbf16>
    %cst_171 = arith.constant dense<0.000000e+00> : vector<64x128xf32>
    %139 = tpu.matmul %136, %138, %cst_171 {dimension_numbers = #tpu.dot_dimension_numbers<[1], [0], [0], [1], [0, 0, 1, 1], [], []>} : vector<64x384xbf16>, vector<384x128xbf16>, vector<64x128xf32> -> vector<64x128xf32>
    %140 = arith.addf %129, %139 : vector<64x128xf32>
    %c0_172 = arith.constant 0 : index
    %c0_173 = arith.constant 0 : index
    %c0_174 = arith.constant 0 : index
    %c384_175 = arith.constant 384 : index
    %141 = vector.load %arg1[%c0_172, %c0_173, %c0_174, %c384_175] : memref<1x9x9x512xbf16, #tpu.memory_space<vmem>>, vector<1x8x8x128xbf16>
    %142 = vector.shape_cast %141 : vector<1x8x8x128xbf16> to vector<64x128xbf16>
    %c0_176 = arith.constant 0 : index
    %c0_177 = arith.constant 0 : index
    %143 = vector.load %arg9[%c0_176, %c0_177] : memref<128x128xbf16, #tpu.memory_space<vmem>>, vector<128x128xbf16>
    %cst_178 = arith.constant dense<0.000000e+00> : vector<64x128xf32>
    %144 = tpu.matmul %142, %143, %cst_178 {dimension_numbers = #tpu.dot_dimension_numbers<[1], [0], [0], [1], [0, 0, 1, 1], [], []>} : vector<64x128xbf16>, vector<128x128xbf16>, vector<64x128xf32> -> vector<64x128xf32>
    %145 = arith.addf %140, %144 : vector<64x128xf32>
    %146 = vector.shape_cast %145 : vector<64x128xf32> to vector<1x8x8x128xf32>
    %147 = arith.truncf %146 : vector<1x8x8x128xf32> to vector<1x8x8x128xbf16>
    %c0_179 = arith.constant 0 : index
    %c0_180 = arith.constant 0 : index
    %c0_181 = arith.constant 0 : index
    %c0_182 = arith.constant 0 : index
    %148 = vector.load %arg10[%c0_179, %c0_180, %c0_181, %c0_182] : memref<1x8x8x128xbf16, #tpu.memory_space<vmem>>, vector<1x8x8x128xbf16>
    tpu.vector_store %arg10[%c0_179, %c0_180, %c0_181, %c0_182], %147 {strides = array<i32>} : memref<1x8x8x128xbf16, #tpu.memory_space<vmem>>, vector<1x8x8x128xbf16>,
    return
  }
  func.func @transform_0(%arg0: i32) -> (i32, i32, i32, i32) {
    %c0_i32 = arith.constant 0 : i32
    %c0_i32_0 = arith.constant 0 : i32
    %c0_i32_1 = arith.constant 0 : i32
    %c0_i32_2 = arith.constant 0 : i32
    return %arg0, %c0_i32, %c0_i32_0, %c0_i32_1 : i32, i32, i32, i32
  }
  func.func @transform_1(%arg0: i32) -> (i32, i32, i32, i32) {
    %c0_i32 = arith.constant 0 : i32
    %c0_i32_0 = arith.constant 0 : i32
    %c0_i32_1 = arith.constant 0 : i32
    %c0_i32_2 = arith.constant 0 : i32
    %c0_i32_3 = arith.constant 0 : i32
    return %c0_i32, %c0_i32_0, %c0_i32_1, %c0_i32_2 : i32, i32, i32, i32
  }
  func.func @transform_2(%arg0: i32) -> (i32, i32, i32) {
    %c0_i32 = arith.constant 0 : i32
    %c0_i32_0 = arith.constant 0 : i32
    %c0_i32_1 = arith.constant 0 : i32
    %c0_i32_2 = arith.constant 0 : i32
    return %c0_i32, %c0_i32_0, %c0_i32_1 : i32, i32, i32
  }
  func.func @transform_3(%arg0: i32) -> (i32, i32) {
    %c0_i32 = arith.constant 0 : i32
    %c0_i32_0 = arith.constant 0 : i32
    %c0_i32_1 = arith.constant 0 : i32
    return %c0_i32, %c0_i32_0 : i32, i32
  }
  func.func @transform_4(%arg0: i32) -> (i32, i32) {
    %c0_i32 = arith.constant 0 : i32
    %c0_i32_0 = arith.constant 0 : i32
    %c0_i32_1 = arith.constant 0 : i32
    return %c0_i32, %c0_i32_0 : i32, i32
  }
  func.func @transform_5(%arg0: i32) -> (i32, i32) {
    %c0_i32 = arith.constant 0 : i32
    %c0_i32_0 = arith.constant 0 : i32
    %c0_i32_1 = arith.constant 0 : i32
    return %c0_i32, %c0_i32_0 : i32, i32
  }
  func.func @transform_6(%arg0: i32) -> (i32, i32) {
    %c0_i32 = arith.constant 0 : i32
    %c0_i32_0 = arith.constant 0 : i32
    %c0_i32_1 = arith.constant 0 : i32
    return %c0_i32, %c0_i32_0 : i32, i32
  }
  func.func @transform_7(%arg0: i32) -> (i32, i32, i32) {
    %c0_i32 = arith.constant 0 : i32
    %c0_i32_0 = arith.constant 0 : i32
    %c0_i32_1 = arith.constant 0 : i32
    %c0_i32_2 = arith.constant 0 : i32
    return %c0_i32, %c0_i32_0, %c0_i32_1 : i32, i32, i32
  }
  func.func @transform_8(%arg0: i32) -> (i32, i32) {
    %c0_i32 = arith.constant 0 : i32
    %c0_i32_0 = arith.constant 0 : i32
    %c0_i32_1 = arith.constant 0 : i32
    return %c0_i32, %c0_i32_0 : i32, i32
  }
  func.func @transform_9(%arg0: i32) -> (i32, i32, i32, i32) {
    %c0_i32 = arith.constant 0 : i32
    %c0_i32_0 = arith.constant 0 : i32
    %c0_i32_1 = arith.constant 0 : i32
    %c0_i32_2 = arith.constant 0 : i32
    return %arg0, %c0_i32, %c0_i32_0, %c0_i32_1 : i32, i32, i32, i32
  }
}

</mosaic_0001>

<llo_original>
// kernel: tpu_custom_call.1
$region0: #{tpu_custom_call.1}
  #allocation0 [shape = 'u32[]', space=smem, size = 0x4, offset = 0x4, fixed_abs, tag = 'smem constant byte address 0x4 - core index']
  #allocation1 [shape = 'u32[144,128]{1,0:T(1,128)}', space=vmem, size = 0x12000, scoped, tag = 'internal scratch']
  #allocation2 [shape = 'bf16[1,9,9,512]{3,2,1,0:T(8,128)(2,1)}', space=vmem, size = 0x24000, scoped, tag = 'scratch operand']
  #allocation3 [shape = 'bf16[1,10,10,128]{3,2,1,0:T(8,128)(2,1)}', space=vmem, size = 0xa000, scoped, tag = 'scratch operand']
  %s0 = inlined_call_operand.vmem [shape: bf16[2,9,9,512], index: 0, kind: input, shape index: {}]
  %s1 = inlined_call_operand.vmem [shape: f32[4,9,9,1], index: 1, kind: input, shape index: {}]
  %s2 = inlined_call_operand.vmem [shape: bf16[3,384,128], index: 2, kind: input, shape index: {}]
  %s3 = inlined_call_operand.vmem [shape: f32[1,128], index: 3, kind: input, shape index: {}]
  %s4 = inlined_call_operand.vmem [shape: f32[1,128], index: 4, kind: input, shape index: {}]
  %s5 = inlined_call_operand.vmem [shape: f32[1,128], index: 5, kind: input, shape index: {}]
  %s6 = inlined_call_operand.vmem [shape: f32[1,128], index: 6, kind: input, shape index: {}]
  %s7 = inlined_call_operand.vmem [shape: bf16[3,384,128], index: 7, kind: input, shape index: {}]
  %s8 = inlined_call_operand.vmem [shape: bf16[128,128], index: 8, kind: input, shape index: {}]
  %s9 = inlined_call_operand.hbm [shape: bf16[2,8,8,128], index: 9, kind: output, shape index: {}]
  %s10 = sld [smem:[#allocation0]]
  $region69: #{tpu_custom_call.1} parent=0
    _
  %s12 = ssub.s32 1, %s10
  %s13 = scalar_select 0, %s12, %s10
  $region1: #{tpu_custom_call.1} parent=0
    #allocation4 [shape = 'u8[32768]{0}', space=vmem, size = 0x8000, scoped, tag = 'output window, operand 0']
    #allocation5 [shape = 's32[2]{0}', space=sflag, size = 0x8, scoped, tag = 'scoped memory for tpu_custom_call.1']
    %14 = vsyncpa [#allocation5], 0
    %s15 = scalar_lea.sflag [#allocation5], 1
    %16 = vsyncpa %s15, 0
    loop: start=0, step=1, limit=4
    $region2: #{tpu_custom_call.1} parent=1 // loop_pre_header
      _
    $region3: #{tpu_custom_call.1} parent=1 // loop_header
      %s18 = sphi 0, %s22
      %p19 = scmp.ge.s32.totalorder %s18, 4
      %s28 = sphi 0, %s30
      %s31 = sphi 0, %s28
      %s32 = sphi 0, %s31
      %s48 = sphi 0, %s32
      %s52 = sphi 0, %s52
      %s54 = sphi 0, %s52
      %s55 = sphi 0, %s54
      %s69 = sphi 0, %s55
      %s73 = sphi 0, %s73
      %s75 = sphi 0, %s73
      %s76 = sphi 0, %s75
      %s90 = sphi 0, %s76
      %s94 = sphi 0, %s94
      %s96 = sphi 0, %s94
      %s97 = sphi 0, %s96
      %s111 = sphi 0, %s97
      %s115 = sphi 0, %s115
      %s117 = sphi 0, %s115
      %s118 = sphi 0, %s117
      %s132 = sphi 0, %s118
      %s136 = sphi 0, %s136
      %s138 = sphi 0, %s136
      %s139 = sphi 0, %s138
      %s153 = sphi 0, %s139
      %s157 = sphi 0, %s157
      %s159 = sphi 0, %s157
      %s160 = sphi 0, %s159
      %s174 = sphi 0, %s160
      %s178 = sphi 0, %s178
      %s180 = sphi 0, %s178
      %s181 = sphi 0, %s180
      %s195 = sphi 0, %s181
      %s199 = sphi 0, %s199
      %s201 = sphi 0, %s199
      %s202 = sphi 0, %s201
      %s216 = sphi 0, %s202
      %s222 = sphi 0, %s224
      %s225 = sphi 0, %s222
      %s226 = sphi 0, %s225
      %s242 = sphi 0, %s226
    $region4: #{tpu_custom_call.1} parent=1 // loop_header_branch
      %21 = sbr.rel (%p19) target = $region8
    $region5: #{tpu_custom_call.1} parent=1 // loop_body
      %s23 = ssub.s32 %s18, 1
      %s24 = ssub.s32 %s18, 2
      %s25 = sadd.s32 %s18, 1
      %s26 = ssub.s32 %s18, %s25
      %p27 = scmp.eq.s32.totalorder %s26, 0
      %s29 = sadd.s32 %s28, 1
      %s30 = scalar_select %p27, %s28, %s29
      %p33 = pneg %p27
      %p34 = scmp.eq.s32.totalorder %s18, 1
      %p35 = por %p33, %p34
      %p36 = scmp.ne.s32.totalorder %s28, %s31
      %p37 = scmp.eq.s32.totalorder %s18, 0
      %p38 = por %p36, %p37
      %p39 = scmp.ne.s32.totalorder %s28, %s31
      %p40 = scmp.eq.s32.totalorder %s23, 1
      %p41 = por %p39, %p40
      %p42 = scmp.ne.s32.totalorder %s31, %s32
      %p43 = scmp.eq.s32.totalorder %s23, 0
      %p44 = por %p42, %p43
      %p45 = scmp.ne.s32.totalorder %s31, %s32
      %p46 = scmp.eq.s32.totalorder %s24, 1
      %p47 = por %p45, %p46
      %p49 = scmp.ne.s32.totalorder %s32, %s48
      %p50 = scmp.eq.s32.totalorder %s24, 0
      %p51 = por %p49, %p50
      %s53 = sadd.s32 %s52, 1
      %p56 = scmp.eq.s32.totalorder %s18, 1
      %p57 = scmp.ne.s32.totalorder %s52, %s54
      %p58 = scmp.eq.s32.totalorder %s18, 0
      %p59 = por %p57, %p58
      %p60 = scmp.ne.s32.totalorder %s52, %s54
      %p61 = scmp.eq.s32.totalorder %s23, 1
      %p62 = por %p60, %p61
      %p63 = scmp.ne.s32.totalorder %s54, %s55
      %p64 = scmp.eq.s32.totalorder %s23, 0
      %p65 = por %p63, %p64
      %p66 = scmp.ne.s32.totalorder %s54, %s55
      %p67 = scmp.eq.s32.totalorder %s24, 1
      %p68 = por %p66, %p67
      %p70 = scmp.ne.s32.totalorder %s55, %s69
      %p71 = scmp.eq.s32.totalorder %s24, 0
      %p72 = por %p70, %p71
      %s74 = sadd.s32 %s73, 1
      %p77 = scmp.eq.s32.totalorder %s18, 1
      %p78 = scmp.ne.s32.totalorder %s73, %s75
      %p79 = scmp.eq.s32.totalorder %s18, 0
      %p80 = por %p78, %p79
      %p81 = scmp.ne.s32.totalorder %s73, %s75
      %p82 = scmp.eq.s32.totalorder %s23, 1
      %p83 = por %p81, %p82
      %p84 = scmp.ne.s32.totalorder %s75, %s76
      %p85 = scmp.eq.s32.totalorder %s23, 0
      %p86 = por %p84, %p85
      %p87 = scmp.ne.s32.totalorder %s75, %s76
      %p88 = scmp.eq.s32.totalorder %s24, 1
      %p89 = por %p87, %p88
      %p91 = scmp.ne.s32.totalorder %s76, %s90
      %p92 = scmp.eq.s32.totalorder %s24, 0
      %p93 = por %p91, %p92
      %s95 = sadd.s32 %s94, 1
      %p98 = scmp.eq.s32.totalorder %s18, 1
      %p99 = scmp.ne.s32.totalorder %s94, %s96
      %p100 = scmp.eq.s32.totalorder %s18, 0
      %p101 = por %p99, %p100
      %p102 = scmp.ne.s32.totalorder %s94, %s96
      %p103 = scmp.eq.s32.totalorder %s23, 1
      %p104 = por %p102, %p103
      %p105 = scmp.ne.s32.totalorder %s96, %s97
      %p106 = scmp.eq.s32.totalorder %s23, 0
      %p107 = por %p105, %p106
      %p108 = scmp.ne.s32.totalorder %s96, %s97
      %p109 = scmp.eq.s32.totalorder %s24, 1
      %p110 = por %p108, %p109
      %p112 = scmp.ne.s32.totalorder %s97, %s111
      %p113 = scmp.eq.s32.totalorder %s24, 0
      %p114 = por %p112, %p113
      %s116 = sadd.s32 %s115, 1
      %p119 = scmp.eq.s32.totalorder %s18, 1
      %p120 = scmp.ne.s32.totalorder %s115, %s117
      %p121 = scmp.eq.s32.totalorder %s18, 0
      %p122 = por %p120, %p121
      %p123 = scmp.ne.s32.totalorder %s115, %s117
      %p124 = scmp.eq.s32.totalorder %s23, 1
      %p125 = por %p123, %p124
      %p126 = scmp.ne.s32.totalorder %s117, %s118
      %p127 = scmp.eq.s32.totalorder %s23, 0
      %p128 = por %p126, %p127
      %p129 = scmp.ne.s32.totalorder %s117, %s118
      %p130 = scmp.eq.s32.totalorder %s24, 1
      %p131 = por %p129, %p130
      %p133 = scmp.ne.s32.totalorder %s118, %s132
      %p134 = scmp.eq.s32.totalorder %s24, 0
      %p135 = por %p133, %p134
      %s137 = sadd.s32 %s136, 1
      %p140 = scmp.eq.s32.totalorder %s18, 1
      %p141 = scmp.ne.s32.totalorder %s136, %s138
      %p142 = scmp.eq.s32.totalorder %s18, 0
      %p143 = por %p141, %p142
      %p144 = scmp.ne.s32.totalorder %s136, %s138
      %p145 = scmp.eq.s32.totalorder %s23, 1
      %p146 = por %p144, %p145
      %p147 = scmp.ne.s32.totalorder %s138, %s139
      %p148 = scmp.eq.s32.totalorder %s23, 0
      %p149 = por %p147, %p148
      %p150 = scmp.ne.s32.totalorder %s138, %s139
      %p151 = scmp.eq.s32.totalorder %s24, 1
      %p152 = por %p150, %p151
      %p154 = scmp.ne.s32.totalorder %s139, %s153
      %p155 = scmp.eq.s32.totalorder %s24, 0
      %p156 = por %p154, %p155
      %s158 = sadd.s32 %s157, 1
      %p161 = scmp.eq.s32.totalorder %s18, 1
      %p162 = scmp.ne.s32.totalorder %s157, %s159
      %p163 = scmp.eq.s32.totalorder %s18, 0
      %p164 = por %p162, %p163
      %p165 = scmp.ne.s32.totalorder %s157, %s159
      %p166 = scmp.eq.s32.totalorder %s23, 1
      %p167 = por %p165, %p166
      %p168 = scmp.ne.s32.totalorder %s159, %s160
      %p169 = scmp.eq.s32.totalorder %s23, 0
      %p170 = por %p168, %p169
      %p171 = scmp.ne.s32.totalorder %s159, %s160
      %p172 = scmp.eq.s32.totalorder %s24, 1
      %p173 = por %p171, %p172
      %p175 = scmp.ne.s32.totalorder %s160, %s174
      %p176 = scmp.eq.s32.totalorder %s24, 0
      %p177 = por %p175, %p176
      %s179 = sadd.s32 %s178, 1
      %p182 = scmp.eq.s32.totalorder %s18, 1
      %p183 = scmp.ne.s32.totalorder %s178, %s180
      %p184 = scmp.eq.s32.totalorder %s18, 0
      %p185 = por %p183, %p184
      %p186 = scmp.ne.s32.totalorder %s178, %s180
      %p187 = scmp.eq.s32.totalorder %s23, 1
      %p188 = por %p186, %p187
      %p189 = scmp.ne.s32.totalorder %s180, %s181
      %p190 = scmp.eq.s32.totalorder %s23, 0
      %p191 = por %p189, %p190
      %p192 = scmp.ne.s32.totalorder %s180, %s181
      %p193 = scmp.eq.s32.totalorder %s24, 1
      %p194 = por %p192, %p193
      %p196 = scmp.ne.s32.totalorder %s181, %s195
      %p197 = scmp.eq.s32.totalorder %s24, 0
      %p198 = por %p196, %p197
      %s200 = sadd.s32 %s199, 1
      %p203 = scmp.eq.s32.totalorder %s18, 1
      %p204 = scmp.ne.s32.totalorder %s199, %s201
      %p205 = scmp.eq.s32.totalorder %s18, 0
      %p206 = por %p204, %p205
      %p207 = scmp.ne.s32.totalorder %s199, %s201
      %p208 = scmp.eq.s32.totalorder %s23, 1
      %p209 = por %p207, %p208
      %p210 = scmp.ne.s32.totalorder %s201, %s202
      %p211 = scmp.eq.s32.totalorder %s23, 0
      %p212 = por %p210, %p211
      %p213 = scmp.ne.s32.totalorder %s201, %s202
      %p214 = scmp.eq.s32.totalorder %s24, 1
      %p215 = por %p213, %p214
      %p217 = scmp.ne.s32.totalorder %s202, %s216
      %p218 = scmp.eq.s32.totalorder %s24, 0
      %p219 = por %p217, %p218
      %s220 = ssub.s32 %s18, %s25
      %p221 = scmp.eq.s32.totalorder %s220, 0
      %s223 = sadd.s32 %s222, 1
      %s224 = scalar_select %p221, %s222, %s223
      %p227 = pneg %p221
      %p228 = scmp.eq.s32.totalorder %s18, 1
      %p229 = por %p227, %p228
      %p230 = scmp.ne.s32.totalorder %s222, %s225
      %p231 = scmp.eq.s32.totalorder %s18, 0
      %p232 = por %p230, %p231
      %p233 = scmp.ne.s32.totalorder %s222, %s225
      %p234 = scmp.eq.s32.totalorder %s23, 1
      %p235 = por %p233, %p234
      %p236 = scmp.ne.s32.totalorder %s225, %s226
      %p237 = scmp.eq.s32.totalorder %s23, 0
      %p238 = por %p236, %p237
      %p239 = scmp.ne.s32.totalorder %s225, %s226
      %p240 = scmp.eq.s32.totalorder %s24, 1
      %p241 = por %p239, %p240
      %p243 = scmp.ne.s32.totalorder %s226, %s242
      %p244 = scmp.eq.s32.totalorder %s24, 0
      %p245 = por %p243, %p244
      %p246 = scmp.le.s32.totalorder 1, %s18
      %p247 = scmp.lt.s32.totalorder %s18, 3
      %p248 = pnand %p246, %p247
      %p249 = pneg %p248
      // Predicated region
      $region9: #{tpu_custom_call.1} parent=5 // pred_check
        _
      $region10: #{tpu_custom_call.1} parent=5 // pred_check_branch
        %251 = sbr.rel (%p248) target = $region12
      $region11: #{tpu_custom_call.1} parent=5 // pred_region
        %s252 = ssub.s32 %s18, 1
        // Predicated region
        $region13: #{tpu_custom_call.1} parent=11 // pred_check
          %p253 = pneg %p65
        $region14: #{tpu_custom_call.1} parent=11 // pred_check_branch
          %255 = sbr.rel (%p253) target = $region16
        $region15: #{tpu_custom_call.1} parent=11 // pred_region
          _
        $region16: #{tpu_custom_call.1} parent=11 // pred_fallthru
          _
        // Predicated region
        $region17: #{tpu_custom_call.1} parent=11 // pred_check
          %p256 = pneg %p86
        $region18: #{tpu_custom_call.1} parent=11 // pred_check_branch
          %258 = sbr.rel (%p256) target = $region20
        $region19: #{tpu_custom_call.1} parent=11 // pred_region
          _
        $region20: #{tpu_custom_call.1} parent=11 // pred_fallthru
          _
        // Predicated region
        $region21: #{tpu_custom_call.1} parent=11 // pred_check
          %p259 = pneg %p107
        $region22: #{tpu_custom_call.1} parent=11 // pred_check_branch
          %261 = sbr.rel (%p259) target = $region24
        $region23: #{tpu_custom_call.1} parent=11 // pred_region
          _
        $region24: #{tpu_custom_call.1} parent=11 // pred_fallthru
          _
        // Predicated region
        $region25: #{tpu_custom_call.1} parent=11 // pred_check
          %p262 = pneg %p128
        $region26: #{tpu_custom_call.1} parent=11 // pred_check_branch
          %264 = sbr.rel (%p262) target = $region28
        $region27: #{tpu_custom_call.1} parent=11 // pred_region
          _
        $region28: #{tpu_custom_call.1} parent=11 // pred_fallthru
          _
        // Predicated region
        $region29: #{tpu_custom_call.1} parent=11 // pred_check
          %p265 = pneg %p149
        $region30: #{tpu_custom_call.1} parent=11 // pred_check_branch
          %267 = sbr.rel (%p265) target = $region32
        $region31: #{tpu_custom_call.1} parent=11 // pred_region
          _
        $region32: #{tpu_custom_call.1} parent=11 // pred_fallthru
          _
        // Predicated region
        $region33: #{tpu_custom_call.1} parent=11 // pred_check
          %p268 = pneg %p170
        $region34: #{tpu_custom_call.1} parent=11 // pred_check_branch
          %270 = sbr.rel (%p268) target = $region36
        $region35: #{tpu_custom_call.1} parent=11 // pred_region
          _
        $region36: #{tpu_custom_call.1} parent=11 // pred_fallthru
          _
        // Predicated region
        $region37: #{tpu_custom_call.1} parent=11 // pred_check
          %p271 = pneg %p191
        $region38: #{tpu_custom_call.1} parent=11 // pred_check_branch
          %273 = sbr.rel (%p271) target = $region40
        $region39: #{tpu_custom_call.1} parent=11 // pred_region
          _
        $region40: #{tpu_custom_call.1} parent=11 // pred_fallthru
          _
        // Predicated region
        $region41: #{tpu_custom_call.1} parent=11 // pred_check
          %p274 = pneg %p212
        $region42: #{tpu_custom_call.1} parent=11 // pred_check_branch
          %276 = sbr.rel (%p274) target = $region44
        $region43: #{tpu_custom_call.1} parent=11 // pred_region
          _
        $region44: #{tpu_custom_call.1} parent=11 // pred_fallthru
          _
      $region12: #{tpu_custom_call.1} parent=5 // pred_fallthru
        _
      %p277 = scmp.lt.s32.totalorder %s18, 2
      // Predicated region
      $region45: #{tpu_custom_call.1} parent=5 // pred_check
        %p278 = pneg %p277
      $region46: #{tpu_custom_call.1} parent=5 // pred_check_branch
        %280 = sbr.rel (%p278) target = $region48
      $region47: #{tpu_custom_call.1} parent=5 // pred_region
        // Predicated region
        $region49: #{tpu_custom_call.1} parent=47 // pred_check
          %p281 = pneg %p38
        $region50: #{tpu_custom_call.1} parent=47 // pred_check_branch
          %283 = sbr.rel (%p281) target = $region52
        $region51: #{tpu_custom_call.1} parent=47 // pred_region
          %p284 = scmp.lt.s32.totalorder %s18, 1
          %s285 = scalar_select %p284, %s18, 1
          %s286 = smul.addr %s285, 72
          %s287 = smul.addr %s286, 4
          %s288 = scalar_lea.vmem %s0, %s287
        $region52: #{tpu_custom_call.1} parent=47 // pred_fallthru
          _
      $region48: #{tpu_custom_call.1} parent=5 // pred_fallthru
        _
      %p289 = scmp.le.s32.totalorder 1, %s18
      %p290 = scmp.lt.s32.totalorder %s18, 3
      %p291 = pnand %p289, %p290
      %p292 = pneg %p291
      // Predicated region
      $region53: #{tpu_custom_call.1} parent=5 // pred_check
        _
      $region54: #{tpu_custom_call.1} parent=5 // pred_check_branch
        %294 = sbr.rel (%p291) target = $region56
      $region55: #{tpu_custom_call.1} parent=5 // pred_region
        %s295 = ssub.s32 %s18, 1
        %p296 = scmp.lt.s32.totalorder %s23, 1
        %s297 = scalar_select %p296, %s23, 1
        %s298 = smul.addr %s297, 72
        %s299 = smul.addr %s298, 4
        %s300 = scalar_lea.vmem %s0, %s299
        %p301 = pneg %p44
        %p302 = pneg %p41
        %p303 = pneg %p65
        %p304 = pneg %p62
        %p305 = pneg %p86
        %p306 = pneg %p83
        %p307 = pneg %p107
        %p308 = pneg %p104
        %p309 = pneg %p128
        %p310 = pneg %p125
        %p311 = pneg %p149
        %p312 = pneg %p146
        %p313 = pneg %p170
        %p314 = pneg %p167
        %p315 = pneg %p191
        %p316 = pneg %p188
        %p317 = pneg %p212
        %p318 = pneg %p209
        %p319 = pneg %p238
        %p320 = pneg %p235
        %s321 = sand.u32 %s225, 1
        %s322 = scalar_lea.sflag [#allocation5], %s321
        %s323 = sand.u32 %s225, 1
        %s324 = smul.addr %s323, 32
        %s325 = scalar_lea.vmem [#allocation4], %s324
        %p326 = scmp.lt.s32.totalorder %s23, 1
        %s327 = scalar_select %p326, %s23, 1
        %s328 = smul.addr %s327, 72
        %s329 = smul.addr %s328, 4
        %s330 = scalar_lea.vmem %s0, %s329
        %v332 = vld [vmem:[%s3] sm:$0x1]
        %v333 = vld [vmem:[%s4] sm:$0x1]
        %v334 = vld [vmem:[%s330] sm:$0xf]
        %v335 = vld [vmem:[%s330 + $0x10] sm:$0x1]
        %v336 = vld [vmem:[%s330 + $0x20] sm:$0xf]
        %v337 = vld [vmem:[%s330 + $0x30] sm:$0x1]
        %v338 = vld [vmem:[%s330 + $0x40] sm:$0xf]
        %v339 = vld [vmem:[%s330 + $0x50] sm:$0x1]
        %v340 = vld [vmem:[%s330 + $0x60] sm:$0xf]
        %v341 = vld [vmem:[%s330 + $0x70] sm:$0x1]
        %v342 = vld [vmem:[%s330 + $0x80] sm:$0xf]
        %v343 = vld [vmem:[%s330 + $0x90] sm:$0x1]
        %v344 = vld [vmem:[%s330 + $0xa0] sm:$0xf]
        %v345 = vld [vmem:[%s330 + $0xb0] sm:$0x1]
        %v346 = vld [vmem:[%s330 + $0xc0] sm:$0xf]
        %v347 = vld [vmem:[%s330 + $0xd0] sm:$0x1]
        %v348 = vld [vmem:[%s330 + $0xe0] sm:$0xf]
        %v349 = vld [vmem:[%s330 + $0xf0] sm:$0x1]
        %v350 = vld [vmem:[%s330 + $0x100] sm:$0xf]
        %v351 = vld [vmem:[%s330 + $0x110] sm:$0x1]
        %v352 = vld [vmem:[%s1] sm:$0xff]
        %v353 = vld [vmem:[%s1 + $0x8] sm:$0x1]
        %v354 = vld [vmem:[%s1 + $0x10] sm:$0xff]
        %v355 = vld [vmem:[%s1 + $0x18] sm:$0x1]
        %v356 = vld [vmem:[%s1 + $0x20] sm:$0xff]
        %v357 = vld [vmem:[%s1 + $0x28] sm:$0x1]
        %v358 = vld [vmem:[%s1 + $0x30] sm:$0xff]
        %v359 = vld [vmem:[%s1 + $0x38] sm:$0x1]
        %v360 = vld [vmem:[%s1 + $0x40] sm:$0xff]
        %v361 = vld [vmem:[%s1 + $0x48] sm:$0x1]
        %v362 = vld [vmem:[%s1 + $0x50] sm:$0xff]
        %v363 = vld [vmem:[%s1 + $0x58] sm:$0x1]
        %v364 = vld [vmem:[%s1 + $0x60] sm:$0xff]
        %v365 = vld [vmem:[%s1 + $0x68] sm:$0x1]
        %v366 = vld [vmem:[%s1 + $0x70] sm:$0xff]
        %v367 = vld [vmem:[%s1 + $0x78] sm:$0x1]
        %v368 = vld [vmem:[%s1 + $0x80] sm:$0xff]
        %v369 = vld [vmem:[%s1 + $0x88] sm:$0x1]
        %v370 = vunpack.c.l.bf16 %v334
        %v371 = vunpack.c.l.bf16 %v335
        %v372 = vunpack.c.l.bf16 %v336
        %v373 = vunpack.c.l.bf16 %v337
        %v374 = vunpack.c.l.bf16 %v338
        %v375 = vunpack.c.l.bf16 %v339
        %v376 = vunpack.c.l.bf16 %v340
        %v377 = vunpack.c.l.bf16 %v341
        %v378 = vunpack.c.l.bf16 %v342
        %v379 = vunpack.c.l.bf16 %v343
        %v380 = vunpack.c.l.bf16 %v344
        %v381 = vunpack.c.l.bf16 %v345
        %v382 = vunpack.c.l.bf16 %v346
        %v383 = vunpack.c.l.bf16 %v347
        %v384 = vunpack.c.l.bf16 %v348
        %v385 = vunpack.c.l.bf16 %v349
        %v386 = vunpack.c.l.bf16 %v350
        %v387 = vunpack.c.l.bf16 %v351
        %v389 = vlaneseq
        %v390 = vshrl.u32 %v389, 7
        %v391 = vsub.s32 0, %v390
        %v392 = vrot.slane %v332, %v391
        %v394 = vmul.f32 %v370, %v392
        %v395 = vmul.f32 %v371, %v392
        %v396 = vmul.f32 %v372, %v392
        %v397 = vmul.f32 %v373, %v392
        %v398 = vmul.f32 %v374, %v392
        %v399 = vmul.f32 %v375, %v392
        %v400 = vmul.f32 %v376, %v392
        %v401 = vmul.f32 %v377, %v392
        %v402 = vmul.f32 %v378, %v392
        %v403 = vmul.f32 %v379, %v392
        %v404 = vmul.f32 %v380, %v392
        %v405 = vmul.f32 %v381, %v392
        %v406 = vmul.f32 %v382, %v392
        %v407 = vmul.f32 %v383, %v392
        %v408 = vmul.f32 %v384, %v392
        %v409 = vmul.f32 %v385, %v392
        %v410 = vmul.f32 %v386, %v392
        %v411 = vmul.f32 %v387, %v392
        %413 = vset.pattern.permute.xlu0 0
        %414 = vperm.xlu0 %413, %v352
        %v415 = vpop.permute.xlu0 %414
        %418 = vset.pattern.permute.xlu0 0
        %419 = vperm.xlu0 %418, %v353
        %v420 = vpop.permute.xlu0 %419
        %423 = vset.pattern.permute.xlu0 0
        %424 = vperm.xlu0 %423, %v354
        %v425 = vpop.permute.xlu0 %424
        %428 = vset.pattern.permute.xlu0 0
        %429 = vperm.xlu0 %428, %v355
        %v430 = vpop.permute.xlu0 %429
        %433 = vset.pattern.permute.xlu0 0
        %434 = vperm.xlu0 %433, %v356
        %v435 = vpop.permute.xlu0 %434
        %438 = vset.pattern.permute.xlu0 0
        %439 = vperm.xlu0 %438, %v357
        %v440 = vpop.permute.xlu0 %439
        %443 = vset.pattern.permute.xlu0 0
        %444 = vperm.xlu0 %443, %v358
        %v445 = vpop.permute.xlu0 %444
        %448 = vset.pattern.permute.xlu0 0
        %449 = vperm.xlu0 %448, %v359
        %v450 = vpop.permute.xlu0 %449
        %453 = vset.pattern.permute.xlu0 0
        %454 = vperm.xlu0 %453, %v360
        %v455 = vpop.permute.xlu0 %454
        %458 = vset.pattern.permute.xlu0 0
        %459 = vperm.xlu0 %458, %v361
        %v460 = vpop.permute.xlu0 %459
        %463 = vset.pattern.permute.xlu0 0
        %464 = vperm.xlu0 %463, %v362
        %v465 = vpop.permute.xlu0 %464
        %468 = vset.pattern.permute.xlu0 0
        %469 = vperm.xlu0 %468, %v363
        %v470 = vpop.permute.xlu0 %469
        %473 = vset.pattern.permute.xlu0 0
        %474 = vperm.xlu0 %473, %v364
        %v475 = vpop.permute.xlu0 %474
        %478 = vset.pattern.permute.xlu0 0
        %479 = vperm.xlu0 %478, %v365
        %v480 = vpop.permute.xlu0 %479
        %483 = vset.pattern.permute.xlu0 0
        %484 = vperm.xlu0 %483, %v366
        %v485 = vpop.permute.xlu0 %484
        %488 = vset.pattern.permute.xlu0 0
        %489 = vperm.xlu0 %488, %v367
        %v490 = vpop.permute.xlu0 %489
        %493 = vset.pattern.permute.xlu0 0
        %494 = vperm.xlu0 %493, %v368
        %v495 = vpop.permute.xlu0 %494
        %498 = vset.pattern.permute.xlu0 0
        %499 = vperm.xlu0 %498, %v369
        %v500 = vpop.permute.xlu0 %499
        %v503 = vlaneseq
        %v504 = vshrl.u32 %v503, 7
        %v505 = vsub.s32 0, %v504
        %v506 = vrot.slane %v333, %v505
        %v508 = vmul.f32 %v415, %v506
        %v509 = vmul.f32 %v420, %v506
        %v510 = vmul.f32 %v425, %v506
        %v511 = vmul.f32 %v430, %v506
        %v512 = vmul.f32 %v435, %v506
        %v513 = vmul.f32 %v440, %v506
        %v514 = vmul.f32 %v445, %v506
        %v515 = vmul.f32 %v450, %v506
        %v516 = vmul.f32 %v455, %v506
        %v517 = vmul.f32 %v460, %v506
        %v518 = vmul.f32 %v465, %v506
        %v519 = vmul.f32 %v470, %v506
        %v520 = vmul.f32 %v475, %v506
        %v521 = vmul.f32 %v480, %v506
        %v522 = vmul.f32 %v485, %v506
        %v523 = vmul.f32 %v490, %v506
        %v524 = vmul.f32 %v495, %v506
        %v525 = vmul.f32 %v500, %v506
        %v526 = vadd.f32 %v394, %v508
        %v527 = vadd.f32 %v395, %v509
        %v528 = vadd.f32 %v396, %v510
        %v529 = vadd.f32 %v397, %v511
        %v530 = vadd.f32 %v398, %v512
        %v531 = vadd.f32 %v399, %v513
        %v532 = vadd.f32 %v400, %v514
        %v533 = vadd.f32 %v401, %v515
        %v534 = vadd.f32 %v402, %v516
        %v535 = vadd.f32 %v403, %v517
        %v536 = vadd.f32 %v404, %v518
        %v537 = vadd.f32 %v405, %v519
        %v538 = vadd.f32 %v406, %v520
        %v539 = vadd.f32 %v407, %v521
        %v540 = vadd.f32 %v408, %v522
        %v541 = vadd.f32 %v409, %v523
        %v542 = vadd.f32 %v410, %v524
        %v543 = vadd.f32 %v411, %v525
        %v544 = vmax.f32 %v526, 0.0
        %v545 = vmax.f32 %v527, 0.0
        %v546 = vmax.f32 %v528, 0.0
        %v547 = vmax.f32 %v529, 0.0
        %v548 = vmax.f32 %v530, 0.0
        %v549 = vmax.f32 %v531, 0.0
        %v550 = vmax.f32 %v532, 0.0
        %v551 = vmax.f32 %v533, 0.0
        %v552 = vmax.f32 %v534, 0.0
        %v553 = vmax.f32 %v535, 0.0
        %v554 = vmax.f32 %v536, 0.0
        %v555 = vmax.f32 %v537, 0.0
        %v556 = vmax.f32 %v538, 0.0
        %v557 = vmax.f32 %v539, 0.0
        %v558 = vmax.f32 %v540, 0.0
        %v559 = vmax.f32 %v541, 0.0
        %v560 = vmax.f32 %v542, 0.0
        %v561 = vmax.f32 %v543, 0.0
        %v562 = vpack.c.bf16 %v545, %v544
        %v563 = vpack.c.bf16 %v547, %v546
        %v564 = vpack.c.bf16 %v549, %v548
        %v565 = vpack.c.bf16 %v551, %v550
        %v566 = vpack.c.bf16 %v553, %v552
        %v567 = vpack.c.bf16 %v555, %v554
        %v568 = vpack.c.bf16 %v557, %v556
        %v569 = vpack.c.bf16 %v559, %v558
        %v570 = vpack.c.bf16 %v561, %v560
        %v580 = vunpack.c.l.b16 %v562
        %v581 = vunpack.c.h.b16 %v562
        %v582 = vunpack.c.l.b16 %v563
        %v583 = vunpack.c.h.b16 %v563
        %v584 = vunpack.c.l.b16 %v564
        %v585 = vunpack.c.h.b16 %v564
        %v586 = vunpack.c.l.b16 %v565
        %v587 = vunpack.c.h.b16 %v565
        %v588 = vunpack.c.l.b16 %v566
        %v589 = vunpack.c.h.b16 %v566
        %v590 = vunpack.c.l.b16 %v567
        %v591 = vunpack.c.h.b16 %v567
        %v592 = vunpack.c.l.b16 %v568
        %v593 = vunpack.c.h.b16 %v568
        %v594 = vunpack.c.l.b16 %v569
        %v595 = vunpack.c.h.b16 %v569
        %v596 = vunpack.c.l.b16 %v570
        %v597 = vunpack.c.h.b16 %v570
        %v598 = vpack.c.b16 %v580, %v580
        %v599 = vpack.c.b16 %v581, %v581
        %v600 = vpack.c.b16 %v582, %v582
        %v601 = vpack.c.b16 %v583, %v583
        %v602 = vpack.c.b16 %v584, %v584
        %v603 = vpack.c.b16 %v585, %v585
        %v604 = vpack.c.b16 %v586, %v586
        %v605 = vpack.c.b16 %v587, %v587
        %v606 = vpack.c.b16 %v588, %v588
        %v607 = vpack.c.b16 %v589, %v589
        %v608 = vpack.c.b16 %v590, %v590
        %v609 = vpack.c.b16 %v591, %v591
        %v610 = vpack.c.b16 %v592, %v592
        %v611 = vpack.c.b16 %v593, %v593
        %v612 = vpack.c.b16 %v594, %v594
        %v613 = vpack.c.b16 %v595, %v595
        %v614 = vpack.c.b16 %v596, %v596
        %v615 = vpack.c.b16 %v597, %v597
        %634 = vst [vmem:[#allocation2] sm:$0xf] %v598
        %vm635 = vcmask 1040384
        %vm636 = vsmask.f32 256
        %vm637 = vmand %vm635, %vm636
        %v638 = vld [vmem:[#allocation2 + $0x10] sm:$0x1]
        %v639 = vsel %vm637, %v599, %v638
        %640 = vst [vmem:[#allocation2 + $0x10] sm:$0x1] %v639
        %641 = vst [vmem:[#allocation2 + $0x20] sm:$0xf] %v600
        %v642 = vld [vmem:[#allocation2 + $0x30] sm:$0x1]
        %v643 = vsel %vm637, %v601, %v642
        %644 = vst [vmem:[#allocation2 + $0x30] sm:$0x1] %v643
        %645 = vst [vmem:[#allocation2 + $0x40] sm:$0xf] %v602
        %v646 = vld [vmem:[#allocation2 + $0x50] sm:$0x1]
        %v647 = vsel %vm637, %v603, %v646
        %648 = vst [vmem:[#allocation2 + $0x50] sm:$0x1] %v647
        %649 = vst [vmem:[#allocation2 + $0x60] sm:$0xf] %v604
        %v650 = vld [vmem:[#allocation2 + $0x70] sm:$0x1]
        %v651 = vsel %vm637, %v605, %v650
        %652 = vst [vmem:[#allocation2 + $0x70] sm:$0x1] %v651
        %653 = vst [vmem:[#allocation2 + $0x80] sm:$0xf] %v606
        %v654 = vld [vmem:[#allocation2 + $0x90] sm:$0x1]
        %v655 = vsel %vm637, %v607, %v654
        %656 = vst [vmem:[#allocation2 + $0x90] sm:$0x1] %v655
        %657 = vst [vmem:[#allocation2 + $0xa0] sm:$0xf] %v608
        %v658 = vld [vmem:[#allocation2 + $0xb0] sm:$0x1]
        %v659 = vsel %vm637, %v609, %v658
        %660 = vst [vmem:[#allocation2 + $0xb0] sm:$0x1] %v659
        %661 = vst [vmem:[#allocation2 + $0xc0] sm:$0xf] %v610
        %v662 = vld [vmem:[#allocation2 + $0xd0] sm:$0x1]
        %v663 = vsel %vm637, %v611, %v662
        %664 = vst [vmem:[#allocation2 + $0xd0] sm:$0x1] %v663
        %665 = vst [vmem:[#allocation2 + $0xe0] sm:$0xf] %v612
        %v666 = vld [vmem:[#allocation2 + $0xf0] sm:$0x1]
        %v667 = vsel %vm637, %v613, %v666
        %668 = vst [vmem:[#allocation2 + $0xf0] sm:$0x1] %v667
        %669 = vst [vmem:[#allocation2 + $0x100] sm:$0xf] %v614
        %v670 = vld [vmem:[#allocation2 + $0x110] sm:$0x1]
        %v671 = vsel %vm637, %v615, %v670
        %672 = vst [vmem:[#allocation2 + $0x110] sm:$0x1] %v671
        %v673 = vld [vmem:[%s330 + $0x4] sm:$0xf]
        %v674 = vld [vmem:[%s330 + $0x14] sm:$0x1]
        %v675 = vld [vmem:[%s330 + $0x24] sm:$0xf]
        %v676 = vld [vmem:[%s330 + $0x34] sm:$0x1]
        %v677 = vld [vmem:[%s330 + $0x44] sm:$0xf]
        %v678 = vld [vmem:[%s330 + $0x54] sm:$0x1]
        %v679 = vld [vmem:[%s330 + $0x64] sm:$0xf]
        %v680 = vld [vmem:[%s330 + $0x74] sm:$0x1]
        %v681 = vld [vmem:[%s330 + $0x84] sm:$0xf]
        %v682 = vld [vmem:[%s330 + $0x94] sm:$0x1]
        %v683 = vld [vmem:[%s330 + $0xa4] sm:$0xf]
        %v684 = vld [vmem:[%s330 + $0xb4] sm:$0x1]
        %v685 = vld [vmem:[%s330 + $0xc4] sm:$0xf]
        %v686 = vld [vmem:[%s330 + $0xd4] sm:$0x1]
        %v687 = vld [vmem:[%s330 + $0xe4] sm:$0xf]
        %v688 = vld [vmem:[%s330 + $0xf4] sm:$0x1]
        %v689 = vld [vmem:[%s330 + $0x104] sm:$0xf]
        %v690 = vld [vmem:[%s330 + $0x114] sm:$0x1]
        %s691 = scalar_lea.vmem %s1, 144
        %v692 = vld [vmem:[%s691] sm:$0xff]
        %v693 = vld [vmem:[%s691 + $0x8] sm:$0x1]
        %v694 = vld [vmem:[%s691 + $0x10] sm:$0xff]
        %v695 = vld [vmem:[%s691 + $0x18] sm:$0x1]
        %v696 = vld [vmem:[%s691 + $0x20] sm:$0xff]
        %v697 = vld [vmem:[%s691 + $0x28] sm:$0x1]
        %v698 = vld [vmem:[%s691 + $0x30] sm:$0xff]
        %v699 = vld [vmem:[%s691 + $0x38] sm:$0x1]
        %v700 = vld [vmem:[%s691 + $0x40] sm:$0xff]
        %v701 = vld [vmem:[%s691 + $0x48] sm:$0x1]
        %v702 = vld [vmem:[%s691 + $0x50] sm:$0xff]
        %v703 = vld [vmem:[%s691 + $0x58] sm:$0x1]
        %v704 = vld [vmem:[%s691 + $0x60] sm:$0xff]
        %v705 = vld [vmem:[%s691 + $0x68] sm:$0x1]
        %v706 = vld [vmem:[%s691 + $0x70] sm:$0xff]
        %v707 = vld [vmem:[%s691 + $0x78] sm:$0x1]
        %v708 = vld [vmem:[%s691 + $0x80] sm:$0xff]
        %v709 = vld [vmem:[%s691 + $0x88] sm:$0x1]
        %v710 = vunpack.c.l.bf16 %v673
        %v711 = vunpack.c.l.bf16 %v674
        %v712 = vunpack.c.l.bf16 %v675
        %v713 = vunpack.c.l.bf16 %v676
        %v714 = vunpack.c.l.bf16 %v677
        %v715 = vunpack.c.l.bf16 %v678
        %v716 = vunpack.c.l.bf16 %v679
        %v717 = vunpack.c.l.bf16 %v680
        %v718 = vunpack.c.l.bf16 %v681
        %v719 = vunpack.c.l.bf16 %v682
        %v720 = vunpack.c.l.bf16 %v683
        %v721 = vunpack.c.l.bf16 %v684
        %v722 = vunpack.c.l.bf16 %v685
        %v723 = vunpack.c.l.bf16 %v686
        %v724 = vunpack.c.l.bf16 %v687
        %v725 = vunpack.c.l.bf16 %v688
        %v726 = vunpack.c.l.bf16 %v689
        %v727 = vunpack.c.l.bf16 %v690
        %v728 = vmul.f32 %v710, %v392
        %v729 = vmul.f32 %v711, %v392
        %v730 = vmul.f32 %v712, %v392
        %v731 = vmul.f32 %v713, %v392
        %v732 = vmul.f32 %v714, %v392
        %v733 = vmul.f32 %v715, %v392
        %v734 = vmul.f32 %v716, %v392
        %v735 = vmul.f32 %v717, %v392
        %v736 = vmul.f32 %v718, %v392
        %v737 = vmul.f32 %v719, %v392
        %v738 = vmul.f32 %v720, %v392
        %v739 = vmul.f32 %v721, %v392
        %v740 = vmul.f32 %v722, %v392
        %v741 = vmul.f32 %v723, %v392
        %v742 = vmul.f32 %v724, %v392
        %v743 = vmul.f32 %v725, %v392
        %v744 = vmul.f32 %v726, %v392
        %v745 = vmul.f32 %v727, %v392
        %747 = vset.pattern.permute.xlu0 0
        %748 = vperm.xlu0 %747, %v692
        %v749 = vpop.permute.xlu0 %748
        %752 = vset.pattern.permute.xlu0 0
        %753 = vperm.xlu0 %752, %v693
        %v754 = vpop.permute.xlu0 %753
        %757 = vset.pattern.permute.xlu0 0
        %758 = vperm.xlu0 %757, %v694
        %v759 = vpop.permute.xlu0 %758
        %762 = vset.pattern.permute.xlu0 0
        %763 = vperm.xlu0 %762, %v695
        %v764 = vpop.permute.xlu0 %763
        %767 = vset.pattern.permute.xlu0 0
        %768 = vperm.xlu0 %767, %v696
        %v769 = vpop.permute.xlu0 %768
        %772 = vset.pattern.permute.xlu0 0
        %773 = vperm.xlu0 %772, %v697
        %v774 = vpop.permute.xlu0 %773
        %777 = vset.pattern.permute.xlu0 0
        %778 = vperm.xlu0 %777, %v698
        %v779 = vpop.permute.xlu0 %778
        %782 = vset.pattern.permute.xlu0 0
        %783 = vperm.xlu0 %782, %v699
        %v784 = vpop.permute.xlu0 %783
        %787 = vset.pattern.permute.xlu0 0
        %788 = vperm.xlu0 %787, %v700
        %v789 = vpop.permute.xlu0 %788
        %792 = vset.pattern.permute.xlu0 0
        %793 = vperm.xlu0 %792, %v701
        %v794 = vpop.permute.xlu0 %793
        %797 = vset.pattern.permute.xlu0 0
        %798 = vperm.xlu0 %797, %v702
        %v799 = vpop.permute.xlu0 %798
        %802 = vset.pattern.permute.xlu0 0
        %803 = vperm.xlu0 %802, %v703
        %v804 = vpop.permute.xlu0 %803
        %807 = vset.pattern.permute.xlu0 0
        %808 = vperm.xlu0 %807, %v704
        %v809 = vpop.permute.xlu0 %808
        %812 = vset.pattern.permute.xlu0 0
        %813 = vperm.xlu0 %812, %v705
        %v814 = vpop.permute.xlu0 %813
        %817 = vset.pattern.permute.xlu0 0
        %818 = vperm.xlu0 %817, %v706
        %v819 = vpop.permute.xlu0 %818
        %822 = vset.pattern.permute.xlu0 0
        %823 = vperm.xlu0 %822, %v707
        %v824 = vpop.permute.xlu0 %823
        %827 = vset.pattern.permute.xlu0 0
        %828 = vperm.xlu0 %827, %v708
        %v829 = vpop.permute.xlu0 %828
        %832 = vset.pattern.permute.xlu0 0
        %833 = vperm.xlu0 %832, %v709
        %v834 = vpop.permute.xlu0 %833
        %v836 = vmul.f32 %v749, %v506
        %v837 = vmul.f32 %v754, %v506
        %v838 = vmul.f32 %v759, %v506
        %v839 = vmul.f32 %v764, %v506
        %v840 = vmul.f32 %v769, %v506
        %v841 = vmul.f32 %v774, %v506
        %v842 = vmul.f32 %v779, %v506
        %v843 = vmul.f32 %v784, %v506
        %v844 = vmul.f32 %v789, %v506
        %v845 = vmul.f32 %v794, %v506
        %v846 = vmul.f32 %v799, %v506
        %v847 = vmul.f32 %v804, %v506
        %v848 = vmul.f32 %v809, %v506
        %v849 = vmul.f32 %v814, %v506
        %v850 = vmul.f32 %v819, %v506
        %v851 = vmul.f32 %v824, %v506
        %v852 = vmul.f32 %v829, %v506
        %v853 = vmul.f32 %v834, %v506
        %v854 = vadd.f32 %v728, %v836
        %v855 = vadd.f32 %v729, %v837
        %v856 = vadd.f32 %v730, %v838
        %v857 = vadd.f32 %v731, %v839
        %v858 = vadd.f32 %v732, %v840
        %v859 = vadd.f32 %v733, %v841
        %v860 = vadd.f32 %v734, %v842
        %v861 = vadd.f32 %v735, %v843
        %v862 = vadd.f32 %v736, %v844
        %v863 = vadd.f32 %v737, %v845
        %v864 = vadd.f32 %v738, %v846
        %v865 = vadd.f32 %v739, %v847
        %v866 = vadd.f32 %v740, %v848
        %v867 = vadd.f32 %v741, %v849
        %v868 = vadd.f32 %v742, %v850
        %v869 = vadd.f32 %v743, %v851
        %v870 = vadd.f32 %v744, %v852
        %v871 = vadd.f32 %v745, %v853
        %v872 = vmax.f32 %v854, 0.0
        %v873 = vmax.f32 %v855, 0.0
        %v874 = vmax.f32 %v856, 0.0
        %v875 = vmax.f32 %v857, 0.0
        %v876 = vmax.f32 %v858, 0.0
        %v877 = vmax.f32 %v859, 0.0
        %v878 = vmax.f32 %v860, 0.0
        %v879 = vmax.f32 %v861, 0.0
        %v880 = vmax.f32 %v862, 0.0
        %v881 = vmax.f32 %v863, 0.0
        %v882 = vmax.f32 %v864, 0.0
        %v883 = vmax.f32 %v865, 0.0
        %v884 = vmax.f32 %v866, 0.0
        %v885 = vmax.f32 %v867, 0.0
        %v886 = vmax.f32 %v868, 0.0
        %v887 = vmax.f32 %v869, 0.0
        %v888 = vmax.f32 %v870, 0.0
        %v889 = vmax.f32 %v871, 0.0
        %v890 = vpack.c.bf16 %v873, %v872
        %v891 = vpack.c.bf16 %v875, %v874
        %v892 = vpack.c.bf16 %v877, %v876
        %v893 = vpack.c.bf16 %v879, %v878
        %v894 = vpack.c.bf16 %v881, %v880
        %v895 = vpack.c.bf16 %v883, %v882
        %v896 = vpack.c.bf16 %v885, %v884
        %v897 = vpack.c.bf16 %v887, %v886
        %v898 = vpack.c.bf16 %v889, %v888
        %v908 = vunpack.c.l.b16 %v890
        %v909 = vunpack.c.h.b16 %v890
        %v910 = vunpack.c.l.b16 %v891
        %v911 = vunpack.c.h.b16 %v891
        %v912 = vunpack.c.l.b16 %v892
        %v913 = vunpack.c.h.b16 %v892
        %v914 = vunpack.c.l.b16 %v893
        %v915 = vunpack.c.h.b16 %v893
        %v916 = vunpack.c.l.b16 %v894
        %v917 = vunpack.c.h.b16 %v894
        %v918 = vunpack.c.l.b16 %v895
        %v919 = vunpack.c.h.b16 %v895
        %v920 = vunpack.c.l.b16 %v896
        %v921 = vunpack.c.h.b16 %v896
        %v922 = vunpack.c.l.b16 %v897
        %v923 = vunpack.c.h.b16 %v897
        %v924 = vunpack.c.l.b16 %v898
        %v925 = vunpack.c.h.b16 %v898
        %v926 = vpack.c.b16 %v908, %v908
        %v927 = vpack.c.b16 %v909, %v909
        %v928 = vpack.c.b16 %v910, %v910
        %v929 = vpack.c.b16 %v911, %v911
        %v930 = vpack.c.b16 %v912, %v912
        %v931 = vpack.c.b16 %v913, %v913
        %v932 = vpack.c.b16 %v914, %v914
        %v933 = vpack.c.b16 %v915, %v915
        %v934 = vpack.c.b16 %v916, %v916
        %v935 = vpack.c.b16 %v917, %v917
        %v936 = vpack.c.b16 %v918, %v918
        %v937 = vpack.c.b16 %v919, %v919
        %v938 = vpack.c.b16 %v920, %v920
        %v939 = vpack.c.b16 %v921, %v921
        %v940 = vpack.c.b16 %v922, %v922
        %v941 = vpack.c.b16 %v923, %v923
        %v942 = vpack.c.b16 %v924, %v924
        %v943 = vpack.c.b16 %v925, %v925
        %962 = vst [vmem:[#allocation2 + $0x4] sm:$0xf] %v926
        %v963 = vld [vmem:[#allocation2 + $0x14] sm:$0x1]
        %v964 = vsel %vm637, %v927, %v963
        %965 = vst [vmem:[#allocation2 + $0x14] sm:$0x1] %v964
        %966 = vst [vmem:[#allocation2 + $0x24] sm:$0xf] %v928
        %v967 = vld [vmem:[#allocation2 + $0x34] sm:$0x1]
        %v968 = vsel %vm637, %v929, %v967
        %969 = vst [vmem:[#allocation2 + $0x34] sm:$0x1] %v968
        %970 = vst [vmem:[#allocation2 + $0x44] sm:$0xf] %v930
        %v971 = vld [vmem:[#allocation2 + $0x54] sm:$0x1]
        %v972 = vsel %vm637, %v931, %v971
        %973 = vst [vmem:[#allocation2 + $0x54] sm:$0x1] %v972
        %974 = vst [vmem:[#allocation2 + $0x64] sm:$0xf] %v932
        %v975 = vld [vmem:[#allocation2 + $0x74] sm:$0x1]
        %v976 = vsel %vm637, %v933, %v975
        %977 = vst [vmem:[#allocation2 + $0x74] sm:$0x1] %v976
        %978 = vst [vmem:[#allocation2 + $0x84] sm:$0xf] %v934
        %v979 = vld [vmem:[#allocation2 + $0x94] sm:$0x1]
        %v980 = vsel %vm637, %v935, %v979
        %981 = vst [vmem:[#allocation2 + $0x94] sm:$0x1] %v980
        %982 = vst [vmem:[#allocation2 + $0xa4] sm:$0xf] %v936
        %v983 = vld [vmem:[#allocation2 + $0xb4] sm:$0x1]
        %v984 = vsel %vm637, %v937, %v983
        %985 = vst [vmem:[#allocation2 + $0xb4] sm:$0x1] %v984
        %986 = vst [vmem:[#allocation2 + $0xc4] sm:$0xf] %v938
        %v987 = vld [vmem:[#allocation2 + $0xd4] sm:$0x1]
        %v988 = vsel %vm637, %v939, %v987
        %989 = vst [vmem:[#allocation2 + $0xd4] sm:$0x1] %v988
        %990 = vst [vmem:[#allocation2 + $0xe4] sm:$0xf] %v940
        %v991 = vld [vmem:[#allocation2 + $0xf4] sm:$0x1]
        %v992 = vsel %vm637, %v941, %v991
        %993 = vst [vmem:[#allocation2 + $0xf4] sm:$0x1] %v992
        %994 = vst [vmem:[#allocation2 + $0x104] sm:$0xf] %v942
        %v995 = vld [vmem:[#allocation2 + $0x114] sm:$0x1]
        %v996 = vsel %vm637, %v943, %v995
        %997 = vst [vmem:[#allocation2 + $0x114] sm:$0x1] %v996
        %v998 = vld [vmem:[%s330 + $0x8] sm:$0xf]
        %v999 = vld [vmem:[%s330 + $0x18] sm:$0x1]
        %v1000 = vld [vmem:[%s330 + $0x28] sm:$0xf]
        %v1001 = vld [vmem:[%s330 + $0x38] sm:$0x1]
        %v1002 = vld [vmem:[%s330 + $0x48] sm:$0xf]
        %v1003 = vld [vmem:[%s330 + $0x58] sm:$0x1]
        %v1004 = vld [vmem:[%s330 + $0x68] sm:$0xf]
        %v1005 = vld [vmem:[%s330 + $0x78] sm:$0x1]
        %v1006 = vld [vmem:[%s330 + $0x88] sm:$0xf]
        %v1007 = vld [vmem:[%s330 + $0x98] sm:$0x1]
        %v1008 = vld [vmem:[%s330 + $0xa8] sm:$0xf]
        %v1009 = vld [vmem:[%s330 + $0xb8] sm:$0x1]
        %v1010 = vld [vmem:[%s330 + $0xc8] sm:$0xf]
        %v1011 = vld [vmem:[%s330 + $0xd8] sm:$0x1]
        %v1012 = vld [vmem:[%s330 + $0xe8] sm:$0xf]
        %v1013 = vld [vmem:[%s330 + $0xf8] sm:$0x1]
        %v1014 = vld [vmem:[%s330 + $0x108] sm:$0xf]
        %v1015 = vld [vmem:[%s330 + $0x118] sm:$0x1]
        %s1016 = scalar_lea.vmem %s1, 288
        %v1017 = vld [vmem:[%s1016] sm:$0xff]
        %v1018 = vld [vmem:[%s1016 + $0x8] sm:$0x1]
        %v1019 = vld [vmem:[%s1016 + $0x10] sm:$0xff]
        %v1020 = vld [vmem:[%s1016 + $0x18] sm:$0x1]
        %v1021 = vld [vmem:[%s1016 + $0x20] sm:$0xff]
        %v1022 = vld [vmem:[%s1016 + $0x28] sm:$0x1]
        %v1023 = vld [vmem:[%s1016 + $0x30] sm:$0xff]
        %v1024 = vld [vmem:[%s1016 + $0x38] sm:$0x1]
        %v1025 = vld [vmem:[%s1016 + $0x40] sm:$0xff]
        %v1026 = vld [vmem:[%s1016 + $0x48] sm:$0x1]
        %v1027 = vld [vmem:[%s1016 + $0x50] sm:$0xff]
        %v1028 = vld [vmem:[%s1016 + $0x58] sm:$0x1]
        %v1029 = vld [vmem:[%s1016 + $0x60] sm:$0xff]
        %v1030 = vld [vmem:[%s1016 + $0x68] sm:$0x1]
        %v1031 = vld [vmem:[%s1016 + $0x70] sm:$0xff]
        %v1032 = vld [vmem:[%s1016 + $0x78] sm:$0x1]
        %v1033 = vld [vmem:[%s1016 + $0x80] sm:$0xff]
        %v1034 = vld [vmem:[%s1016 + $0x88] sm:$0x1]
        %v1035 = vunpack.c.l.bf16 %v998
        %v1036 = vunpack.c.l.bf16 %v999
        %v1037 = vunpack.c.l.bf16 %v1000
        %v1038 = vunpack.c.l.bf16 %v1001
        %v1039 = vunpack.c.l.bf16 %v1002
        %v1040 = vunpack.c.l.bf16 %v1003
        %v1041 = vunpack.c.l.bf16 %v1004
        %v1042 = vunpack.c.l.bf16 %v1005
        %v1043 = vunpack.c.l.bf16 %v1006
        %v1044 = vunpack.c.l.bf16 %v1007
        %v1045 = vunpack.c.l.bf16 %v1008
        %v1046 = vunpack.c.l.bf16 %v1009
        %v1047 = vunpack.c.l.bf16 %v1010
        %v1048 = vunpack.c.l.bf16 %v1011
        %v1049 = vunpack.c.l.bf16 %v1012
        %v1050 = vunpack.c.l.bf16 %v1013
        %v1051 = vunpack.c.l.bf16 %v1014
        %v1052 = vunpack.c.l.bf16 %v1015
        %v1053 = vmul.f32 %v1035, %v392
        %v1054 = vmul.f32 %v1036, %v392
        %v1055 = vmul.f32 %v1037, %v392
        %v1056 = vmul.f32 %v1038, %v392
        %v1057 = vmul.f32 %v1039, %v392
        %v1058 = vmul.f32 %v1040, %v392
        %v1059 = vmul.f32 %v1041, %v392
        %v1060 = vmul.f32 %v1042, %v392
        %v1061 = vmul.f32 %v1043, %v392
        %v1062 = vmul.f32 %v1044, %v392
        %v1063 = vmul.f32 %v1045, %v392
        %v1064 = vmul.f32 %v1046, %v392
        %v1065 = vmul.f32 %v1047, %v392
        %v1066 = vmul.f32 %v1048, %v392
        %v1067 = vmul.f32 %v1049, %v392
        %v1068 = vmul.f32 %v1050, %v392
        %v1069 = vmul.f32 %v1051, %v392
        %v1070 = vmul.f32 %v1052, %v392
        %1072 = vset.pattern.permute.xlu0 0
        %1073 = vperm.xlu0 %1072, %v1017
        %v1074 = vpop.permute.xlu0 %1073
        %1077 = vset.pattern.permute.xlu0 0
        %1078 = vperm.xlu0 %1077, %v1018
        %v1079 = vpop.permute.xlu0 %1078
        %1082 = vset.pattern.permute.xlu0 0
        %1083 = vperm.xlu0 %1082, %v1019
        %v1084 = vpop.permute.xlu0 %1083
        %1087 = vset.pattern.permute.xlu0 0
        %1088 = vperm.xlu0 %1087, %v1020
        %v1089 = vpop.permute.xlu0 %1088
        %1092 = vset.pattern.permute.xlu0 0
        %1093 = vperm.xlu0 %1092, %v1021
        %v1094 = vpop.permute.xlu0 %1093
        %1097 = vset.pattern.permute.xlu0 0
        %1098 = vperm.xlu0 %1097, %v1022
        %v1099 = vpop.permute.xlu0 %1098
        %1102 = vset.pattern.permute.xlu0 0
        %1103 = vperm.xlu0 %1102, %v1023
        %v1104 = vpop.permute.xlu0 %1103
        %1107 = vset.pattern.permute.xlu0 0
        %1108 = vperm.xlu0 %1107, %v1024
        %v1109 = vpop.permute.xlu0 %1108
        %1112 = vset.pattern.permute.xlu0 0
        %1113 = vperm.xlu0 %1112, %v1025
        %v1114 = vpop.permute.xlu0 %1113
        %1117 = vset.pattern.permute.xlu0 0
        %1118 = vperm.xlu0 %1117, %v1026
        %v1119 = vpop.permute.xlu0 %1118
        %1122 = vset.pattern.permute.xlu0 0
        %1123 = vperm.xlu0 %1122, %v1027
        %v1124 = vpop.permute.xlu0 %1123
        %1127 = vset.pattern.permute.xlu0 0
        %1128 = vperm.xlu0 %1127, %v1028
        %v1129 = vpop.permute.xlu0 %1128
        %1132 = vset.pattern.permute.xlu0 0
        %1133 = vperm.xlu0 %1132, %v1029
        %v1134 = vpop.permute.xlu0 %1133
        %1137 = vset.pattern.permute.xlu0 0
        %1138 = vperm.xlu0 %1137, %v1030
        %v1139 = vpop.permute.xlu0 %1138
        %1142 = vset.pattern.permute.xlu0 0
        %1143 = vperm.xlu0 %1142, %v1031
        %v1144 = vpop.permute.xlu0 %1143
        %1147 = vset.pattern.permute.xlu0 0
        %1148 = vperm.xlu0 %1147, %v1032
        %v1149 = vpop.permute.xlu0 %1148
        %1152 = vset.pattern.permute.xlu0 0
        %1153 = vperm.xlu0 %1152, %v1033
        %v1154 = vpop.permute.xlu0 %1153
        %1157 = vset.pattern.permute.xlu0 0
        %1158 = vperm.xlu0 %1157, %v1034
        %v1159 = vpop.permute.xlu0 %1158
        %v1161 = vmul.f32 %v1074, %v506
        %v1162 = vmul.f32 %v1079, %v506
        %v1163 = vmul.f32 %v1084, %v506
        %v1164 = vmul.f32 %v1089, %v506
        %v1165 = vmul.f32 %v1094, %v506
        %v1166 = vmul.f32 %v1099, %v506
        %v1167 = vmul.f32 %v1104, %v506
        %v1168 = vmul.f32 %v1109, %v506
        %v1169 = vmul.f32 %v1114, %v506
        %v1170 = vmul.f32 %v1119, %v506
        %v1171 = vmul.f32 %v1124, %v506
        %v1172 = vmul.f32 %v1129, %v506
        %v1173 = vmul.f32 %v1134, %v506
        %v1174 = vmul.f32 %v1139, %v506
        %v1175 = vmul.f32 %v1144, %v506
        %v1176 = vmul.f32 %v1149, %v506
        %v1177 = vmul.f32 %v1154, %v506
        %v1178 = vmul.f32 %v1159, %v506
        %v1179 = vadd.f32 %v1053, %v1161
        %v1180 = vadd.f32 %v1054, %v1162
        %v1181 = vadd.f32 %v1055, %v1163
        %v1182 = vadd.f32 %v1056, %v1164
        %v1183 = vadd.f32 %v1057, %v1165
        %v1184 = vadd.f32 %v1058, %v1166
        %v1185 = vadd.f32 %v1059, %v1167
        %v1186 = vadd.f32 %v1060, %v1168
        %v1187 = vadd.f32 %v1061, %v1169
        %v1188 = vadd.f32 %v1062, %v1170
        %v1189 = vadd.f32 %v1063, %v1171
        %v1190 = vadd.f32 %v1064, %v1172
        %v1191 = vadd.f32 %v1065, %v1173
        %v1192 = vadd.f32 %v1066, %v1174
        %v1193 = vadd.f32 %v1067, %v1175
        %v1194 = vadd.f32 %v1068, %v1176
        %v1195 = vadd.f32 %v1069, %v1177
        %v1196 = vadd.f32 %v1070, %v1178
        %v1197 = vmax.f32 %v1179, 0.0
        %v1198 = vmax.f32 %v1180, 0.0
        %v1199 = vmax.f32 %v1181, 0.0
        %v1200 = vmax.f32 %v1182, 0.0
        %v1201 = vmax.f32 %v1183, 0.0
        %v1202 = vmax.f32 %v1184, 0.0
        %v1203 = vmax.f32 %v1185, 0.0
        %v1204 = vmax.f32 %v1186, 0.0
        %v1205 = vmax.f32 %v1187, 0.0
        %v1206 = vmax.f32 %v1188, 0.0
        %v1207 = vmax.f32 %v1189, 0.0
        %v1208 = vmax.f32 %v1190, 0.0
        %v1209 = vmax.f32 %v1191, 0.0
        %v1210 = vmax.f32 %v1192, 0.0
        %v1211 = vmax.f32 %v1193, 0.0
        %v1212 = vmax.f32 %v1194, 0.0
        %v1213 = vmax.f32 %v1195, 0.0
        %v1214 = vmax.f32 %v1196, 0.0
        %v1215 = vpack.c.bf16 %v1198, %v1197
        %v1216 = vpack.c.bf16 %v1200, %v1199
        %v1217 = vpack.c.bf16 %v1202, %v1201
        %v1218 = vpack.c.bf16 %v1204, %v1203
        %v1219 = vpack.c.bf16 %v1206, %v1205
        %v1220 = vpack.c.bf16 %v1208, %v1207
        %v1221 = vpack.c.bf16 %v1210, %v1209
        %v1222 = vpack.c.bf16 %v1212, %v1211
        %v1223 = vpack.c.bf16 %v1214, %v1213
        %v1233 = vunpack.c.l.b16 %v1215
        %v1234 = vunpack.c.h.b16 %v1215
        %v1235 = vunpack.c.l.b16 %v1216
        %v1236 = vunpack.c.h.b16 %v1216
        %v1237 = vunpack.c.l.b16 %v1217
        %v1238 = vunpack.c.h.b16 %v1217
        %v1239 = vunpack.c.l.b16 %v1218
        %v1240 = vunpack.c.h.b16 %v1218
        %v1241 = vunpack.c.l.b16 %v1219
        %v1242 = vunpack.c.h.b16 %v1219
        %v1243 = vunpack.c.l.b16 %v1220
        %v1244 = vunpack.c.h.b16 %v1220
        %v1245 = vunpack.c.l.b16 %v1221
        %v1246 = vunpack.c.h.b16 %v1221
        %v1247 = vunpack.c.l.b16 %v1222
        %v1248 = vunpack.c.h.b16 %v1222
        %v1249 = vunpack.c.l.b16 %v1223
        %v1250 = vunpack.c.h.b16 %v1223
        %v1251 = vpack.c.b16 %v1233, %v1233
        %v1252 = vpack.c.b16 %v1234, %v1234
        %v1253 = vpack.c.b16 %v1235, %v1235
        %v1254 = vpack.c.b16 %v1236, %v1236
        %v1255 = vpack.c.b16 %v1237, %v1237
        %v1256 = vpack.c.b16 %v1238, %v1238
        %v1257 = vpack.c.b16 %v1239, %v1239
        %v1258 = vpack.c.b16 %v1240, %v1240
        %v1259 = vpack.c.b16 %v1241, %v1241
        %v1260 = vpack.c.b16 %v1242, %v1242
        %v1261 = vpack.c.b16 %v1243, %v1243
        %v1262 = vpack.c.b16 %v1244, %v1244
        %v1263 = vpack.c.b16 %v1245, %v1245
        %v1264 = vpack.c.b16 %v1246, %v1246
        %v1265 = vpack.c.b16 %v1247, %v1247
        %v1266 = vpack.c.b16 %v1248, %v1248
        %v1267 = vpack.c.b16 %v1249, %v1249
        %v1268 = vpack.c.b16 %v1250, %v1250
        %1287 = vst [vmem:[#allocation2 + $0x8] sm:$0xf] %v1251
        %v1288 = vld [vmem:[#allocation2 + $0x18] sm:$0x1]
        %v1289 = vsel %vm637, %v1252, %v1288
        %1290 = vst [vmem:[#allocation2 + $0x18] sm:$0x1] %v1289
        %1291 = vst [vmem:[#allocation2 + $0x28] sm:$0xf] %v1253
        %v1292 = vld [vmem:[#allocation2 + $0x38] sm:$0x1]
        %v1293 = vsel %vm637, %v1254, %v1292
        %1294 = vst [vmem:[#allocation2 + $0x38] sm:$0x1] %v1293
        %1295 = vst [vmem:[#allocation2 + $0x48] sm:$0xf] %v1255
        %v1296 = vld [vmem:[#allocation2 + $0x58] sm:$0x1]
        %v1297 = vsel %vm637, %v1256, %v1296
        %1298 = vst [vmem:[#allocation2 + $0x58] sm:$0x1] %v1297
        %1299 = vst [vmem:[#allocation2 + $0x68] sm:$0xf] %v1257
        %v1300 = vld [vmem:[#allocation2 + $0x78] sm:$0x1]
        %v1301 = vsel %vm637, %v1258, %v1300
        %1302 = vst [vmem:[#allocation2 + $0x78] sm:$0x1] %v1301
        %1303 = vst [vmem:[#allocation2 + $0x88] sm:$0xf] %v1259
        %v1304 = vld [vmem:[#allocation2 + $0x98] sm:$0x1]
        %v1305 = vsel %vm637, %v1260, %v1304
        %1306 = vst [vmem:[#allocation2 + $0x98] sm:$0x1] %v1305
        %1307 = vst [vmem:[#allocation2 + $0xa8] sm:$0xf] %v1261
        %v1308 = vld [vmem:[#allocation2 + $0xb8] sm:$0x1]
        %v1309 = vsel %vm637, %v1262, %v1308
        %1310 = vst [vmem:[#allocation2 + $0xb8] sm:$0x1] %v1309
        %1311 = vst [vmem:[#allocation2 + $0xc8] sm:$0xf] %v1263
        %v1312 = vld [vmem:[#allocation2 + $0xd8] sm:$0x1]
        %v1313 = vsel %vm637, %v1264, %v1312
        %1314 = vst [vmem:[#allocation2 + $0xd8] sm:$0x1] %v1313
        %1315 = vst [vmem:[#allocation2 + $0xe8] sm:$0xf] %v1265
        %v1316 = vld [vmem:[#allocation2 + $0xf8] sm:$0x1]
        %v1317 = vsel %vm637, %v1266, %v1316
        %1318 = vst [vmem:[#allocation2 + $0xf8] sm:$0x1] %v1317
        %1319 = vst [vmem:[#allocation2 + $0x108] sm:$0xf] %v1267
        %v1320 = vld [vmem:[#allocation2 + $0x118] sm:$0x1]
        %v1321 = vsel %vm637, %v1268, %v1320
        %1322 = vst [vmem:[#allocation2 + $0x118] sm:$0x1] %v1321
        %v1323 = vld [vmem:[%s330 + $0xc] sm:$0xf]
        %v1324 = vld [vmem:[%s330 + $0x1c] sm:$0x1]
        %v1325 = vld [vmem:[%s330 + $0x2c] sm:$0xf]
        %v1326 = vld [vmem:[%s330 + $0x3c] sm:$0x1]
        %v1327 = vld [vmem:[%s330 + $0x4c] sm:$0xf]
        %v1328 = vld [vmem:[%s330 + $0x5c] sm:$0x1]
        %v1329 = vld [vmem:[%s330 + $0x6c] sm:$0xf]
        %v1330 = vld [vmem:[%s330 + $0x7c] sm:$0x1]
        %v1331 = vld [vmem:[%s330 + $0x8c] sm:$0xf]
        %v1332 = vld [vmem:[%s330 + $0x9c] sm:$0x1]
        %v1333 = vld [vmem:[%s330 + $0xac] sm:$0xf]
        %v1334 = vld [vmem:[%s330 + $0xbc] sm:$0x1]
        %v1335 = vld [vmem:[%s330 + $0xcc] sm:$0xf]
        %v1336 = vld [vmem:[%s330 + $0xdc] sm:$0x1]
        %v1337 = vld [vmem:[%s330 + $0xec] sm:$0xf]
        %v1338 = vld [vmem:[%s330 + $0xfc] sm:$0x1]
        %v1339 = vld [vmem:[%s330 + $0x10c] sm:$0xf]
        %v1340 = vld [vmem:[%s330 + $0x11c] sm:$0x1]
        %s1341 = scalar_lea.vmem %s1, 432
        %v1342 = vld [vmem:[%s1341] sm:$0xff]
        %v1343 = vld [vmem:[%s1341 + $0x8] sm:$0x1]
        %v1344 = vld [vmem:[%s1341 + $0x10] sm:$0xff]
        %v1345 = vld [vmem:[%s1341 + $0x18] sm:$0x1]
        %v1346 = vld [vmem:[%s1341 + $0x20] sm:$0xff]
        %v1347 = vld [vmem:[%s1341 + $0x28] sm:$0x1]
        %v1348 = vld [vmem:[%s1341 + $0x30] sm:$0xff]
        %v1349 = vld [vmem:[%s1341 + $0x38] sm:$0x1]
        %v1350 = vld [vmem:[%s1341 + $0x40] sm:$0xff]
        %v1351 = vld [vmem:[%s1341 + $0x48] sm:$0x1]
        %v1352 = vld [vmem:[%s1341 + $0x50] sm:$0xff]
        %v1353 = vld [vmem:[%s1341 + $0x58] sm:$0x1]
        %v1354 = vld [vmem:[%s1341 + $0x60] sm:$0xff]
        %v1355 = vld [vmem:[%s1341 + $0x68] sm:$0x1]
        %v1356 = vld [vmem:[%s1341 + $0x70] sm:$0xff]
        %v1357 = vld [vmem:[%s1341 + $0x78] sm:$0x1]
        %v1358 = vld [vmem:[%s1341 + $0x80] sm:$0xff]
        %v1359 = vld [vmem:[%s1341 + $0x88] sm:$0x1]
        %v1360 = vunpack.c.l.bf16 %v1323
        %v1361 = vunpack.c.l.bf16 %v1324
        %v1362 = vunpack.c.l.bf16 %v1325
        %v1363 = vunpack.c.l.bf16 %v1326
        %v1364 = vunpack.c.l.bf16 %v1327
        %v1365 = vunpack.c.l.bf16 %v1328
        %v1366 = vunpack.c.l.bf16 %v1329
        %v1367 = vunpack.c.l.bf16 %v1330
        %v1368 = vunpack.c.l.bf16 %v1331
        %v1369 = vunpack.c.l.bf16 %v1332
        %v1370 = vunpack.c.l.bf16 %v1333
        %v1371 = vunpack.c.l.bf16 %v1334
        %v1372 = vunpack.c.l.bf16 %v1335
        %v1373 = vunpack.c.l.bf16 %v1336
        %v1374 = vunpack.c.l.bf16 %v1337
        %v1375 = vunpack.c.l.bf16 %v1338
        %v1376 = vunpack.c.l.bf16 %v1339
        %v1377 = vunpack.c.l.bf16 %v1340
        %v1378 = vmul.f32 %v1360, %v392
        %v1379 = vmul.f32 %v1361, %v392
        %v1380 = vmul.f32 %v1362, %v392
        %v1381 = vmul.f32 %v1363, %v392
        %v1382 = vmul.f32 %v1364, %v392
        %v1383 = vmul.f32 %v1365, %v392
        %v1384 = vmul.f32 %v1366, %v392
        %v1385 = vmul.f32 %v1367, %v392
        %v1386 = vmul.f32 %v1368, %v392
        %v1387 = vmul.f32 %v1369, %v392
        %v1388 = vmul.f32 %v1370, %v392
        %v1389 = vmul.f32 %v1371, %v392
        %v1390 = vmul.f32 %v1372, %v392
        %v1391 = vmul.f32 %v1373, %v392
        %v1392 = vmul.f32 %v1374, %v392
        %v1393 = vmul.f32 %v1375, %v392
        %v1394 = vmul.f32 %v1376, %v392
        %v1395 = vmul.f32 %v1377, %v392
        %1397 = vset.pattern.permute.xlu0 0
        %1398 = vperm.xlu0 %1397, %v1342
        %v1399 = vpop.permute.xlu0 %1398
        %1402 = vset.pattern.permute.xlu0 0
        %1403 = vperm.xlu0 %1402, %v1343
        %v1404 = vpop.permute.xlu0 %1403
        %1407 = vset.pattern.permute.xlu0 0
        %1408 = vperm.xlu0 %1407, %v1344
        %v1409 = vpop.permute.xlu0 %1408
        %1412 = vset.pattern.permute.xlu0 0
        %1413 = vperm.xlu0 %1412, %v1345
        %v1414 = vpop.permute.xlu0 %1413
        %1417 = vset.pattern.permute.xlu0 0
        %1418 = vperm.xlu0 %1417, %v1346
        %v1419 = vpop.permute.xlu0 %1418
        %1422 = vset.pattern.permute.xlu0 0
        %1423 = vperm.xlu0 %1422, %v1347
        %v1424 = vpop.permute.xlu0 %1423
        %1427 = vset.pattern.permute.xlu0 0
        %1428 = vperm.xlu0 %1427, %v1348
        %v1429 = vpop.permute.xlu0 %1428
        %1432 = vset.pattern.permute.xlu0 0
        %1433 = vperm.xlu0 %1432, %v1349
        %v1434 = vpop.permute.xlu0 %1433
        %1437 = vset.pattern.permute.xlu0 0
        %1438 = vperm.xlu0 %1437, %v1350
        %v1439 = vpop.permute.xlu0 %1438
        %1442 = vset.pattern.permute.xlu0 0
        %1443 = vperm.xlu0 %1442, %v1351
        %v1444 = vpop.permute.xlu0 %1443
        %1447 = vset.pattern.permute.xlu0 0
        %1448 = vperm.xlu0 %1447, %v1352
        %v1449 = vpop.permute.xlu0 %1448
        %1452 = vset.pattern.permute.xlu0 0
        %1453 = vperm.xlu0 %1452, %v1353
        %v1454 = vpop.permute.xlu0 %1453
        %1457 = vset.pattern.permute.xlu0 0
        %1458 = vperm.xlu0 %1457, %v1354
        %v1459 = vpop.permute.xlu0 %1458
        %1462 = vset.pattern.permute.xlu0 0
        %1463 = vperm.xlu0 %1462, %v1355
        %v1464 = vpop.permute.xlu0 %1463
        %1467 = vset.pattern.permute.xlu0 0
        %1468 = vperm.xlu0 %1467, %v1356
        %v1469 = vpop.permute.xlu0 %1468
        %1472 = vset.pattern.permute.xlu0 0
        %1473 = vperm.xlu0 %1472, %v1357
        %v1474 = vpop.permute.xlu0 %1473
        %1477 = vset.pattern.permute.xlu0 0
        %1478 = vperm.xlu0 %1477, %v1358
        %v1479 = vpop.permute.xlu0 %1478
        %1482 = vset.pattern.permute.xlu0 0
        %1483 = vperm.xlu0 %1482, %v1359
        %v1484 = vpop.permute.xlu0 %1483
        %v1486 = vmul.f32 %v1399, %v506
        %v1487 = vmul.f32 %v1404, %v506
        %v1488 = vmul.f32 %v1409, %v506
        %v1489 = vmul.f32 %v1414, %v506
        %v1490 = vmul.f32 %v1419, %v506
        %v1491 = vmul.f32 %v1424, %v506
        %v1492 = vmul.f32 %v1429, %v506
        %v1493 = vmul.f32 %v1434, %v506
        %v1494 = vmul.f32 %v1439, %v506
        %v1495 = vmul.f32 %v1444, %v506
        %v1496 = vmul.f32 %v1449, %v506
        %v1497 = vmul.f32 %v1454, %v506
        %v1498 = vmul.f32 %v1459, %v506
        %v1499 = vmul.f32 %v1464, %v506
        %v1500 = vmul.f32 %v1469, %v506
        %v1501 = vmul.f32 %v1474, %v506
        %v1502 = vmul.f32 %v1479, %v506
        %v1503 = vmul.f32 %v1484, %v506
        %v1504 = vadd.f32 %v1378, %v1486
        %v1505 = vadd.f32 %v1379, %v1487
        %v1506 = vadd.f32 %v1380, %v1488
        %v1507 = vadd.f32 %v1381, %v1489
        %v1508 = vadd.f32 %v1382, %v1490
        %v1509 = vadd.f32 %v1383, %v1491
        %v1510 = vadd.f32 %v1384, %v1492
        %v1511 = vadd.f32 %v1385, %v1493
        %v1512 = vadd.f32 %v1386, %v1494
        %v1513 = vadd.f32 %v1387, %v1495
        %v1514 = vadd.f32 %v1388, %v1496
        %v1515 = vadd.f32 %v1389, %v1497
        %v1516 = vadd.f32 %v1390, %v1498
        %v1517 = vadd.f32 %v1391, %v1499
        %v1518 = vadd.f32 %v1392, %v1500
        %v1519 = vadd.f32 %v1393, %v1501
        %v1520 = vadd.f32 %v1394, %v1502
        %v1521 = vadd.f32 %v1395, %v1503
        %v1522 = vmax.f32 %v1504, 0.0
        %v1523 = vmax.f32 %v1505, 0.0
        %v1524 = vmax.f32 %v1506, 0.0
        %v1525 = vmax.f32 %v1507, 0.0
        %v1526 = vmax.f32 %v1508, 0.0
        %v1527 = vmax.f32 %v1509, 0.0
        %v1528 = vmax.f32 %v1510, 0.0
        %v1529 = vmax.f32 %v1511, 0.0
        %v1530 = vmax.f32 %v1512, 0.0
        %v1531 = vmax.f32 %v1513, 0.0
        %v1532 = vmax.f32 %v1514, 0.0
        %v1533 = vmax.f32 %v1515, 0.0
        %v1534 = vmax.f32 %v1516, 0.0
        %v1535 = vmax.f32 %v1517, 0.0
        %v1536 = vmax.f32 %v1518, 0.0
        %v1537 = vmax.f32 %v1519, 0.0
        %v1538 = vmax.f32 %v1520, 0.0
        %v1539 = vmax.f32 %v1521, 0.0
        %v1540 = vpack.c.bf16 %v1523, %v1522
        %v1541 = vpack.c.bf16 %v1525, %v1524
        %v1542 = vpack.c.bf16 %v1527, %v1526
        %v1543 = vpack.c.bf16 %v1529, %v1528
        %v1544 = vpack.c.bf16 %v1531, %v1530
        %v1545 = vpack.c.bf16 %v1533, %v1532
        %v1546 = vpack.c.bf16 %v1535, %v1534
        %v1547 = vpack.c.bf16 %v1537, %v1536
        %v1548 = vpack.c.bf16 %v1539, %v1538
        %v1558 = vunpack.c.l.b16 %v1540
        %v1559 = vunpack.c.h.b16 %v1540
        %v1560 = vunpack.c.l.b16 %v1541
        %v1561 = vunpack.c.h.b16 %v1541
        %v1562 = vunpack.c.l.b16 %v1542
        %v1563 = vunpack.c.h.b16 %v1542
        %v1564 = vunpack.c.l.b16 %v1543
        %v1565 = vunpack.c.h.b16 %v1543
        %v1566 = vunpack.c.l.b16 %v1544
        %v1567 = vunpack.c.h.b16 %v1544
        %v1568 = vunpack.c.l.b16 %v1545
        %v1569 = vunpack.c.h.b16 %v1545
        %v1570 = vunpack.c.l.b16 %v1546
        %v1571 = vunpack.c.h.b16 %v1546
        %v1572 = vunpack.c.l.b16 %v1547
        %v1573 = vunpack.c.h.b16 %v1547
        %v1574 = vunpack.c.l.b16 %v1548
        %v1575 = vunpack.c.h.b16 %v1548
        %v1576 = vpack.c.b16 %v1558, %v1558
        %v1577 = vpack.c.b16 %v1559, %v1559
        %v1578 = vpack.c.b16 %v1560, %v1560
        %v1579 = vpack.c.b16 %v1561, %v1561
        %v1580 = vpack.c.b16 %v1562, %v1562
        %v1581 = vpack.c.b16 %v1563, %v1563
        %v1582 = vpack.c.b16 %v1564, %v1564
        %v1583 = vpack.c.b16 %v1565, %v1565
        %v1584 = vpack.c.b16 %v1566, %v1566
        %v1585 = vpack.c.b16 %v1567, %v1567
        %v1586 = vpack.c.b16 %v1568, %v1568
        %v1587 = vpack.c.b16 %v1569, %v1569
        %v1588 = vpack.c.b16 %v1570, %v1570
        %v1589 = vpack.c.b16 %v1571, %v1571
        %v1590 = vpack.c.b16 %v1572, %v1572
        %v1591 = vpack.c.b16 %v1573, %v1573
        %v1592 = vpack.c.b16 %v1574, %v1574
        %v1593 = vpack.c.b16 %v1575, %v1575
        %1612 = vst [vmem:[#allocation2 + $0xc] sm:$0xf] %v1576
        %v1613 = vld [vmem:[#allocation2 + $0x1c] sm:$0x1]
        %v1614 = vsel %vm637, %v1577, %v1613
        %1615 = vst [vmem:[#allocation2 + $0x1c] sm:$0x1] %v1614
        %1616 = vst [vmem:[#allocation2 + $0x2c] sm:$0xf] %v1578
        %v1617 = vld [vmem:[#allocation2 + $0x3c] sm:$0x1]
        %v1618 = vsel %vm637, %v1579, %v1617
        %1619 = vst [vmem:[#allocation2 + $0x3c] sm:$0x1] %v1618
        %1620 = vst [vmem:[#allocation2 + $0x4c] sm:$0xf] %v1580
        %v1621 = vld [vmem:[#allocation2 + $0x5c] sm:$0x1]
        %v1622 = vsel %vm637, %v1581, %v1621
        %1623 = vst [vmem:[#allocation2 + $0x5c] sm:$0x1] %v1622
        %1624 = vst [vmem:[#allocation2 + $0x6c] sm:$0xf] %v1582
        %v1625 = vld [vmem:[#allocation2 + $0x7c] sm:$0x1]
        %v1626 = vsel %vm637, %v1583, %v1625
        %1627 = vst [vmem:[#allocation2 + $0x7c] sm:$0x1] %v1626
        %1628 = vst [vmem:[#allocation2 + $0x8c] sm:$0xf] %v1584
        %v1629 = vld [vmem:[#allocation2 + $0x9c] sm:$0x1]
        %v1630 = vsel %vm637, %v1585, %v1629
        %1631 = vst [vmem:[#allocation2 + $0x9c] sm:$0x1] %v1630
        %1632 = vst [vmem:[#allocation2 + $0xac] sm:$0xf] %v1586
        %v1633 = vld [vmem:[#allocation2 + $0xbc] sm:$0x1]
        %v1634 = vsel %vm637, %v1587, %v1633
        %1635 = vst [vmem:[#allocation2 + $0xbc] sm:$0x1] %v1634
        %1636 = vst [vmem:[#allocation2 + $0xcc] sm:$0xf] %v1588
        %v1637 = vld [vmem:[#allocation2 + $0xdc] sm:$0x1]
        %v1638 = vsel %vm637, %v1589, %v1637
        %1639 = vst [vmem:[#allocation2 + $0xdc] sm:$0x1] %v1638
        %1640 = vst [vmem:[#allocation2 + $0xec] sm:$0xf] %v1590
        %v1641 = vld [vmem:[#allocation2 + $0xfc] sm:$0x1]
        %v1642 = vsel %vm637, %v1591, %v1641
        %1643 = vst [vmem:[#allocation2 + $0xfc] sm:$0x1] %v1642
        %1644 = vst [vmem:[#allocation2 + $0x10c] sm:$0xf] %v1592
        %v1645 = vld [vmem:[#allocation2 + $0x11c] sm:$0x1]
        %v1646 = vsel %vm637, %v1593, %v1645
        %1647 = vst [vmem:[#allocation2 + $0x11c] sm:$0x1] %v1646
        %v1648 = vld [vmem:[#allocation2] sm:$0xf]
        %v1649 = vld [vmem:[#allocation2 + $0x20] sm:$0xf]
        %v1650 = vld [vmem:[#allocation2 + $0x40] sm:$0xf]
        %v1651 = vld [vmem:[#allocation2 + $0x60] sm:$0xf]
        %v1652 = vld [vmem:[#allocation2 + $0x80] sm:$0xf]
        %v1653 = vld [vmem:[#allocation2 + $0xa0] sm:$0xf]
        %v1654 = vld [vmem:[#allocation2 + $0xc0] sm:$0xf]
        %v1655 = vld [vmem:[#allocation2 + $0xe0] sm:$0xf]
        %v1656 = vld [vmem:[#allocation2 + $0x4] sm:$0xf]
        %v1657 = vld [vmem:[#allocation2 + $0x24] sm:$0xf]
        %v1658 = vld [vmem:[#allocation2 + $0x44] sm:$0xf]
        %v1659 = vld [vmem:[#allocation2 + $0x64] sm:$0xf]
        %v1660 = vld [vmem:[#allocation2 + $0x84] sm:$0xf]
        %v1661 = vld [vmem:[#allocation2 + $0xa4] sm:$0xf]
        %v1662 = vld [vmem:[#allocation2 + $0xc4] sm:$0xf]
        %v1663 = vld [vmem:[#allocation2 + $0xe4] sm:$0xf]
        %v1664 = vld [vmem:[#allocation2 + $0x10] sm:$0x1]
        %v1665 = vld [vmem:[#allocation2 + $0x30] sm:$0x1]
        %v1666 = vld [vmem:[#allocation2 + $0x50] sm:$0x1]
        %v1667 = vld [vmem:[#allocation2 + $0x70] sm:$0x1]
        %v1668 = vld [vmem:[#allocation2 + $0x90] sm:$0x1]
        %v1669 = vld [vmem:[#allocation2 + $0xb0] sm:$0x1]
        %v1670 = vld [vmem:[#allocation2 + $0xd0] sm:$0x1]
        %v1671 = vld [vmem:[#allocation2 + $0xf0] sm:$0x1]
        %vm1672 = vsmask.f32 3328
        %vm1673 = vsmask.f32 7440
        %vm1674 = vmor %vm1672, %vm1673
        %v1676 = vshrl.u32 %v1648, 16
        %v1678 = vrot.slane %v1676, 4
        %v1679 = vshll.u32 %v1648, 16
        %v1681 = vrot.slane %v1679, 5
        %v1682 = vor.u32 %v1678, %v1681
        %v1683 = vrot.slane %v1682, 4
        %v1685 = vshll.u32 %v1664, 16
        %v1687 = vrot.slane %v1685, 5
        %v1688 = vsel %vm1674, %v1683, %v1687
        %v1690 = vshrl.u32 %v1649, 16
        %v1692 = vrot.slane %v1690, 4
        %v1693 = vshll.u32 %v1649, 16
        %v1695 = vrot.slane %v1693, 5
        %v1696 = vor.u32 %v1692, %v1695
        %v1697 = vrot.slane %v1696, 4
        %v1699 = vshll.u32 %v1665, 16
        %v1701 = vrot.slane %v1699, 5
        %v1702 = vsel %vm1674, %v1697, %v1701
        %v1704 = vshrl.u32 %v1650, 16
        %v1706 = vrot.slane %v1704, 4
        %v1707 = vshll.u32 %v1650, 16
        %v1709 = vrot.slane %v1707, 5
        %v1710 = vor.u32 %v1706, %v1709
        %v1711 = vrot.slane %v1710, 4
        %v1713 = vshll.u32 %v1666, 16
        %v1715 = vrot.slane %v1713, 5
        %v1716 = vsel %vm1674, %v1711, %v1715
        %v1718 = vshrl.u32 %v1651, 16
        %v1720 = vrot.slane %v1718, 4
        %v1721 = vshll.u32 %v1651, 16
        %v1723 = vrot.slane %v1721, 5
        %v1724 = vor.u32 %v1720, %v1723
        %v1725 = vrot.slane %v1724, 4
        %v1727 = vshll.u32 %v1667, 16
        %v1729 = vrot.slane %v1727, 5
        %v1730 = vsel %vm1674, %v1725, %v1729
        %v1732 = vshrl.u32 %v1652, 16
        %v1734 = vrot.slane %v1732, 4
        %v1735 = vshll.u32 %v1652, 16
        %v1737 = vrot.slane %v1735, 5
        %v1738 = vor.u32 %v1734, %v1737
        %v1739 = vrot.slane %v1738, 4
        %v1741 = vshll.u32 %v1668, 16
        %v1743 = vrot.slane %v1741, 5
        %v1744 = vsel %vm1674, %v1739, %v1743
        %v1746 = vshrl.u32 %v1653, 16
        %v1748 = vrot.slane %v1746, 4
        %v1749 = vshll.u32 %v1653, 16
        %v1751 = vrot.slane %v1749, 5
        %v1752 = vor.u32 %v1748, %v1751
        %v1753 = vrot.slane %v1752, 4
        %v1755 = vshll.u32 %v1669, 16
        %v1757 = vrot.slane %v1755, 5
        %v1758 = vsel %vm1674, %v1753, %v1757
        %v1760 = vshrl.u32 %v1654, 16
        %v1762 = vrot.slane %v1760, 4
        %v1763 = vshll.u32 %v1654, 16
        %v1765 = vrot.slane %v1763, 5
        %v1766 = vor.u32 %v1762, %v1765
        %v1767 = vrot.slane %v1766, 4
        %v1769 = vshll.u32 %v1670, 16
        %v1771 = vrot.slane %v1769, 5
        %v1772 = vsel %vm1674, %v1767, %v1771
        %v1774 = vshrl.u32 %v1655, 16
        %v1776 = vrot.slane %v1774, 4
        %v1777 = vshll.u32 %v1655, 16
        %v1779 = vrot.slane %v1777, 5
        %v1780 = vor.u32 %v1776, %v1779
        %v1781 = vrot.slane %v1780, 4
        %v1783 = vshll.u32 %v1671, 16
        %v1785 = vrot.slane %v1783, 5
        %v1786 = vsel %vm1674, %v1781, %v1785
        %v1795 = vunpack.c.l.b16 %v1648
        %v1796 = vunpack.c.l.b16 %v1649
        %v1797 = vunpack.c.l.b16 %v1650
        %v1798 = vunpack.c.l.b16 %v1651
        %v1799 = vunpack.c.l.b16 %v1652
        %v1800 = vunpack.c.l.b16 %v1653
        %v1801 = vunpack.c.l.b16 %v1654
        %v1802 = vunpack.c.l.b16 %v1655
        %v1803 = vpack.c.b16 %v1796, %v1795
        %v1804 = vpack.c.b16 %v1798, %v1797
        %v1805 = vpack.c.b16 %v1800, %v1799
        %v1806 = vpack.c.b16 %v1802, %v1801
        %v1819 = vunpack.c.l.b16 %v1656
        %v1820 = vunpack.c.l.b16 %v1657
        %v1821 = vunpack.c.l.b16 %v1658
        %v1822 = vunpack.c.l.b16 %v1659
        %v1823 = vunpack.c.l.b16 %v1660
        %v1824 = vunpack.c.l.b16 %v1661
        %v1825 = vunpack.c.l.b16 %v1662
        %v1826 = vunpack.c.l.b16 %v1663
        %v1827 = vpack.c.b16 %v1820, %v1819
        %v1828 = vpack.c.b16 %v1822, %v1821
        %v1829 = vpack.c.b16 %v1824, %v1823
        %v1830 = vpack.c.b16 %v1826, %v1825
        %v1835 = vunpack.c.l.b16 %v1688
        %v1836 = vunpack.c.l.b16 %v1702
        %v1837 = vunpack.c.l.b16 %v1716
        %v1838 = vunpack.c.l.b16 %v1730
        %v1839 = vunpack.c.l.b16 %v1744
        %v1840 = vunpack.c.l.b16 %v1758
        %v1841 = vunpack.c.l.b16 %v1772
        %v1842 = vunpack.c.l.b16 %v1786
        %v1843 = vpack.c.b16 %v1836, %v1835
        %v1844 = vpack.c.b16 %v1838, %v1837
        %v1845 = vpack.c.b16 %v1840, %v1839
        %v1846 = vpack.c.b16 %v1842, %v1841
        %v1851 = vld [vmem:[%s2] sm:$0xf]
        %v1852 = vld [vmem:[%s2 + $0x4] sm:$0xf]
        %v1853 = vld [vmem:[%s2 + $0x8] sm:$0xf]
        %v1854 = vld [vmem:[%s2 + $0xc] sm:$0xf]
        %v1855 = vld [vmem:[%s2 + $0x10] sm:$0xf]
        %v1856 = vld [vmem:[%s2 + $0x14] sm:$0xf]
        %v1857 = vld [vmem:[%s2 + $0x18] sm:$0xf]
        %v1858 = vld [vmem:[%s2 + $0x1c] sm:$0xf]
        %v1859 = vld [vmem:[%s2 + $0x20] sm:$0xf]
        %v1860 = vld [vmem:[%s2 + $0x24] sm:$0xf]
        %v1861 = vld [vmem:[%s2 + $0x28] sm:$0xf]
        %v1862 = vld [vmem:[%s2 + $0x2c] sm:$0xf]
        %v1863 = vld [vmem:[%s2 + $0x30] sm:$0xf]
        %v1864 = vld [vmem:[%s2 + $0x34] sm:$0xf]
        %v1865 = vld [vmem:[%s2 + $0x38] sm:$0xf]
        %v1866 = vld [vmem:[%s2 + $0x3c] sm:$0xf]
        %v1867 = vld [vmem:[%s2 + $0x40] sm:$0xf]
        %v1868 = vld [vmem:[%s2 + $0x44] sm:$0xf]
        %v1869 = vld [vmem:[%s2 + $0x48] sm:$0xf]
        %v1870 = vld [vmem:[%s2 + $0x4c] sm:$0xf]
        %v1871 = vld [vmem:[%s2 + $0x50] sm:$0xf]
        %v1872 = vld [vmem:[%s2 + $0x54] sm:$0xf]
        %v1873 = vld [vmem:[%s2 + $0x58] sm:$0xf]
        %v1874 = vld [vmem:[%s2 + $0x5c] sm:$0xf]
        %v1875 = vld [vmem:[%s2 + $0x60] sm:$0xf]
        %v1876 = vld [vmem:[%s2 + $0x64] sm:$0xf]
        %v1877 = vld [vmem:[%s2 + $0x68] sm:$0xf]
        %v1878 = vld [vmem:[%s2 + $0x6c] sm:$0xf]
        %v1879 = vld [vmem:[%s2 + $0x70] sm:$0xf]
        %v1880 = vld [vmem:[%s2 + $0x74] sm:$0xf]
        %v1881 = vld [vmem:[%s2 + $0x78] sm:$0xf]
        %v1882 = vld [vmem:[%s2 + $0x7c] sm:$0xf]
        %v1883 = vld [vmem:[%s2 + $0x80] sm:$0xf]
        %v1884 = vld [vmem:[%s2 + $0x84] sm:$0xf]
        %v1885 = vld [vmem:[%s2 + $0x88] sm:$0xf]
        %v1886 = vld [vmem:[%s2 + $0x8c] sm:$0xf]
        %v1887 = vld [vmem:[%s2 + $0x90] sm:$0xf]
        %v1888 = vld [vmem:[%s2 + $0x94] sm:$0xf]
        %v1889 = vld [vmem:[%s2 + $0x98] sm:$0xf]
        %v1890 = vld [vmem:[%s2 + $0x9c] sm:$0xf]
        %v1891 = vld [vmem:[%s2 + $0xa0] sm:$0xf]
        %v1892 = vld [vmem:[%s2 + $0xa4] sm:$0xf]
        %v1893 = vld [vmem:[%s2 + $0xa8] sm:$0xf]
        %v1894 = vld [vmem:[%s2 + $0xac] sm:$0xf]
        %v1895 = vld [vmem:[%s2 + $0xb0] sm:$0xf]
        %v1896 = vld [vmem:[%s2 + $0xb4] sm:$0xf]
        %v1897 = vld [vmem:[%s2 + $0xb8] sm:$0xf]
        %v1898 = vld [vmem:[%s2 + $0xbc] sm:$0xf]
        %v1899 = vld [vmem:[#allocation2 + $0x8] sm:$0xf]
        %v1900 = vld [vmem:[#allocation2 + $0x28] sm:$0xf]
        %v1901 = vld [vmem:[#allocation2 + $0x48] sm:$0xf]
        %v1902 = vld [vmem:[#allocation2 + $0x68] sm:$0xf]
        %v1903 = vld [vmem:[#allocation2 + $0x88] sm:$0xf]
        %v1904 = vld [vmem:[#allocation2 + $0xa8] sm:$0xf]
        %v1905 = vld [vmem:[#allocation2 + $0xc8] sm:$0xf]
        %v1906 = vld [vmem:[#allocation2 + $0xe8] sm:$0xf]
        %v1907 = vld [vmem:[#allocation2 + $0xc] sm:$0xf]
        %v1908 = vld [vmem:[#allocation2 + $0x2c] sm:$0xf]
        %v1909 = vld [vmem:[#allocation2 + $0x4c] sm:$0xf]
        %v1910 = vld [vmem:[#allocation2 + $0x6c] sm:$0xf]
        %v1911 = vld [vmem:[#allocation2 + $0x8c] sm:$0xf]
        %v1912 = vld [vmem:[#allocation2 + $0xac] sm:$0xf]
        %v1913 = vld [vmem:[#allocation2 + $0xcc] sm:$0xf]
        %v1914 = vld [vmem:[#allocation2 + $0xec] sm:$0xf]
        %v1915 = vld [vmem:[#allocation2 + $0x18] sm:$0x1]
        %v1916 = vld [vmem:[#allocation2 + $0x38] sm:$0x1]
        %v1917 = vld [vmem:[#allocation2 + $0x58] sm:$0x1]
        %v1918 = vld [vmem:[#allocation2 + $0x78] sm:$0x1]
        %v1919 = vld [vmem:[#allocation2 + $0x98] sm:$0x1]
        %v1920 = vld [vmem:[#allocation2 + $0xb8] sm:$0x1]
        %v1921 = vld [vmem:[#allocation2 + $0xd8] sm:$0x1]
        %v1922 = vld [vmem:[#allocation2 + $0xf8] sm:$0x1]
        %v1924 = vshrl.u32 %v1899, 16
        %v1926 = vrot.slane %v1924, 4
        %v1927 = vshll.u32 %v1899, 16
        %v1929 = vrot.slane %v1927, 5
        %v1930 = vor.u32 %v1926, %v1929
        %v1931 = vrot.slane %v1930, 4
        %v1933 = vshll.u32 %v1915, 16
        %v1935 = vrot.slane %v1933, 5
        %v1936 = vsel %vm1674, %v1931, %v1935
        %v1938 = vshrl.u32 %v1900, 16
        %v1940 = vrot.slane %v1938, 4
        %v1941 = vshll.u32 %v1900, 16
        %v1943 = vrot.slane %v1941, 5
        %v1944 = vor.u32 %v1940, %v1943
        %v1945 = vrot.slane %v1944, 4
        %v1947 = vshll.u32 %v1916, 16
        %v1949 = vrot.slane %v1947, 5
        %v1950 = vsel %vm1674, %v1945, %v1949
        %v1952 = vshrl.u32 %v1901, 16
        %v1954 = vrot.slane %v1952, 4
        %v1955 = vshll.u32 %v1901, 16
        %v1957 = vrot.slane %v1955, 5
        %v1958 = vor.u32 %v1954, %v1957
        %v1959 = vrot.slane %v1958, 4
        %v1961 = vshll.u32 %v1917, 16
        %v1963 = vrot.slane %v1961, 5
        %v1964 = vsel %vm1674, %v1959, %v1963
        %v1966 = vshrl.u32 %v1902, 16
        %v1968 = vrot.slane %v1966, 4
        %v1969 = vshll.u32 %v1902, 16
        %v1971 = vrot.slane %v1969, 5
        %v1972 = vor.u32 %v1968, %v1971
        %v1973 = vrot.slane %v1972, 4
        %v1975 = vshll.u32 %v1918, 16
        %v1977 = vrot.slane %v1975, 5
        %v1978 = vsel %vm1674, %v1973, %v1977
        %v1980 = vshrl.u32 %v1903, 16
        %v1982 = vrot.slane %v1980, 4
        %v1983 = vshll.u32 %v1903, 16
        %v1985 = vrot.slane %v1983, 5
        %v1986 = vor.u32 %v1982, %v1985
        %v1987 = vrot.slane %v1986, 4
        %v1989 = vshll.u32 %v1919, 16
        %v1991 = vrot.slane %v1989, 5
        %v1992 = vsel %vm1674, %v1987, %v1991
        %v1994 = vshrl.u32 %v1904, 16
        %v1996 = vrot.slane %v1994, 4
        %v1997 = vshll.u32 %v1904, 16
        %v1999 = vrot.slane %v1997, 5
        %v2000 = vor.u32 %v1996, %v1999
        %v2001 = vrot.slane %v2000, 4
        %v2003 = vshll.u32 %v1920, 16
        %v2005 = vrot.slane %v2003, 5
        %v2006 = vsel %vm1674, %v2001, %v2005
        %v2008 = vshrl.u32 %v1905, 16
        %v2010 = vrot.slane %v2008, 4
        %v2011 = vshll.u32 %v1905, 16
        %v2013 = vrot.slane %v2011, 5
        %v2014 = vor.u32 %v2010, %v2013
        %v2015 = vrot.slane %v2014, 4
        %v2017 = vshll.u32 %v1921, 16
        %v2019 = vrot.slane %v2017, 5
        %v2020 = vsel %vm1674, %v2015, %v2019
        %v2022 = vshrl.u32 %v1906, 16
        %v2024 = vrot.slane %v2022, 4
        %v2025 = vshll.u32 %v1906, 16
        %v2027 = vrot.slane %v2025, 5
        %v2028 = vor.u32 %v2024, %v2027
        %v2029 = vrot.slane %v2028, 4
        %v2031 = vshll.u32 %v1922, 16
        %v2033 = vrot.slane %v2031, 5
        %v2034 = vsel %vm1674, %v2029, %v2033
        %v2043 = vunpack.c.l.b16 %v1899
        %v2044 = vunpack.c.l.b16 %v1900
        %v2045 = vunpack.c.l.b16 %v1901
        %v2046 = vunpack.c.l.b16 %v1902
        %v2047 = vunpack.c.l.b16 %v1903
        %v2048 = vunpack.c.l.b16 %v1904
        %v2049 = vunpack.c.l.b16 %v1905
        %v2050 = vunpack.c.l.b16 %v1906
        %v2051 = vpack.c.b16 %v2044, %v2043
        %v2052 = vpack.c.b16 %v2046, %v2045
        %v2053 = vpack.c.b16 %v2048, %v2047
        %v2054 = vpack.c.b16 %v2050, %v2049
        %v2067 = vunpack.c.l.b16 %v1907
        %v2068 = vunpack.c.l.b16 %v1908
        %v2069 = vunpack.c.l.b16 %v1909
        %v2070 = vunpack.c.l.b16 %v1910
        %v2071 = vunpack.c.l.b16 %v1911
        %v2072 = vunpack.c.l.b16 %v1912
        %v2073 = vunpack.c.l.b16 %v1913
        %v2074 = vunpack.c.l.b16 %v1914
        %v2075 = vpack.c.b16 %v2068, %v2067
        %v2076 = vpack.c.b16 %v2070, %v2069
        %v2077 = vpack.c.b16 %v2072, %v2071
        %v2078 = vpack.c.b16 %v2074, %v2073
        %v2083 = vunpack.c.l.b16 %v1936
        %v2084 = vunpack.c.l.b16 %v1950
        %v2085 = vunpack.c.l.b16 %v1964
        %v2086 = vunpack.c.l.b16 %v1978
        %v2087 = vunpack.c.l.b16 %v1992
        %v2088 = vunpack.c.l.b16 %v2006
        %v2089 = vunpack.c.l.b16 %v2020
        %v2090 = vunpack.c.l.b16 %v2034
        %v2091 = vpack.c.b16 %v2084, %v2083
        %v2092 = vpack.c.b16 %v2086, %v2085
        %v2093 = vpack.c.b16 %v2088, %v2087
        %v2094 = vpack.c.b16 %v2090, %v2089
        %s2099 = scalar_lea.vmem %s2, 192
        %v2100 = vld [vmem:[%s2099] sm:$0xf]
        %v2101 = vld [vmem:[%s2099 + $0x4] sm:$0xf]
        %v2102 = vld [vmem:[%s2099 + $0x8] sm:$0xf]
        %v2103 = vld [vmem:[%s2099 + $0xc] sm:$0xf]
        %v2104 = vld [vmem:[%s2099 + $0x10] sm:$0xf]
        %v2105 = vld [vmem:[%s2099 + $0x14] sm:$0xf]
        %v2106 = vld [vmem:[%s2099 + $0x18] sm:$0xf]
        %v2107 = vld [vmem:[%s2099 + $0x1c] sm:$0xf]
        %v2108 = vld [vmem:[%s2099 + $0x20] sm:$0xf]
        %v2109 = vld [vmem:[%s2099 + $0x24] sm:$0xf]
        %v2110 = vld [vmem:[%s2099 + $0x28] sm:$0xf]
        %v2111 = vld [vmem:[%s2099 + $0x2c] sm:$0xf]
        %v2112 = vld [vmem:[%s2099 + $0x30] sm:$0xf]
        %v2113 = vld [vmem:[%s2099 + $0x34] sm:$0xf]
        %v2114 = vld [vmem:[%s2099 + $0x38] sm:$0xf]
        %v2115 = vld [vmem:[%s2099 + $0x3c] sm:$0xf]
        %v2116 = vld [vmem:[%s2099 + $0x40] sm:$0xf]
        %v2117 = vld [vmem:[%s2099 + $0x44] sm:$0xf]
        %v2118 = vld [vmem:[%s2099 + $0x48] sm:$0xf]
        %v2119 = vld [vmem:[%s2099 + $0x4c] sm:$0xf]
        %v2120 = vld [vmem:[%s2099 + $0x50] sm:$0xf]
        %v2121 = vld [vmem:[%s2099 + $0x54] sm:$0xf]
        %v2122 = vld [vmem:[%s2099 + $0x58] sm:$0xf]
        %v2123 = vld [vmem:[%s2099 + $0x5c] sm:$0xf]
        %v2124 = vld [vmem:[%s2099 + $0x60] sm:$0xf]
        %v2125 = vld [vmem:[%s2099 + $0x64] sm:$0xf]
        %v2126 = vld [vmem:[%s2099 + $0x68] sm:$0xf]
        %v2127 = vld [vmem:[%s2099 + $0x6c] sm:$0xf]
        %v2128 = vld [vmem:[%s2099 + $0x70] sm:$0xf]
        %v2129 = vld [vmem:[%s2099 + $0x74] sm:$0xf]
        %v2130 = vld [vmem:[%s2099 + $0x78] sm:$0xf]
        %v2131 = vld [vmem:[%s2099 + $0x7c] sm:$0xf]
        %v2132 = vld [vmem:[%s2099 + $0x80] sm:$0xf]
        %v2133 = vld [vmem:[%s2099 + $0x84] sm:$0xf]
        %v2134 = vld [vmem:[%s2099 + $0x88] sm:$0xf]
        %v2135 = vld [vmem:[%s2099 + $0x8c] sm:$0xf]
        %v2136 = vld [vmem:[%s2099 + $0x90] sm:$0xf]
        %v2137 = vld [vmem:[%s2099 + $0x94] sm:$0xf]
        %v2138 = vld [vmem:[%s2099 + $0x98] sm:$0xf]
        %v2139 = vld [vmem:[%s2099 + $0x9c] sm:$0xf]
        %v2140 = vld [vmem:[%s2099 + $0xa0] sm:$0xf]
        %v2141 = vld [vmem:[%s2099 + $0xa4] sm:$0xf]
        %v2142 = vld [vmem:[%s2099 + $0xa8] sm:$0xf]
        %v2143 = vld [vmem:[%s2099 + $0xac] sm:$0xf]
        %v2144 = vld [vmem:[%s2099 + $0xb0] sm:$0xf]
        %v2145 = vld [vmem:[%s2099 + $0xb4] sm:$0xf]
        %v2146 = vld [vmem:[%s2099 + $0xb8] sm:$0xf]
        %v2147 = vld [vmem:[%s2099 + $0xbc] sm:$0xf]
        %v2196 = vunpack.c.l.b16 %v2100
        %v2197 = vunpack.c.l.b16 %v2101
        %v2198 = vunpack.c.l.b16 %v2102
        %v2199 = vunpack.c.l.b16 %v2103
        %v2200 = vunpack.c.l.b16 %v2104
        %v2201 = vunpack.c.l.b16 %v2105
        %v2202 = vunpack.c.l.b16 %v2106
        %v2203 = vunpack.c.l.b16 %v2107
        %v2204 = vunpack.c.l.b16 %v2108
        %v2205 = vunpack.c.l.b16 %v2109
        %v2206 = vunpack.c.l.b16 %v2110
        %v2207 = vunpack.c.l.b16 %v2111
        %v2208 = vunpack.c.l.b16 %v2112
        %v2209 = vunpack.c.l.b16 %v2113
        %v2210 = vunpack.c.l.b16 %v2114
        %v2211 = vunpack.c.l.b16 %v2115
        %v2212 = vunpack.c.l.b16 %v2116
        %v2213 = vunpack.c.l.b16 %v2117
        %v2214 = vunpack.c.l.b16 %v2118
        %v2215 = vunpack.c.l.b16 %v2119
        %v2216 = vunpack.c.l.b16 %v2120
        %v2217 = vunpack.c.l.b16 %v2121
        %v2218 = vunpack.c.l.b16 %v2122
        %v2219 = vunpack.c.l.b16 %v2123
        %v2220 = vunpack.c.l.b16 %v2124
        %v2221 = vunpack.c.l.b16 %v2125
        %v2222 = vunpack.c.l.b16 %v2126
        %v2223 = vunpack.c.l.b16 %v2127
        %v2224 = vunpack.c.l.b16 %v2128
        %v2225 = vunpack.c.l.b16 %v2129
        %v2226 = vunpack.c.l.b16 %v2130
        %v2227 = vunpack.c.l.b16 %v2131
        %v2228 = vunpack.c.l.b16 %v2132
        %v2229 = vunpack.c.l.b16 %v2133
        %v2230 = vunpack.c.l.b16 %v2134
        %v2231 = vunpack.c.l.b16 %v2135
        %v2232 = vunpack.c.l.b16 %v2136
        %v2233 = vunpack.c.l.b16 %v2137
        %v2234 = vunpack.c.l.b16 %v2138
        %v2235 = vunpack.c.l.b16 %v2139
        %v2236 = vunpack.c.l.b16 %v2140
        %v2237 = vunpack.c.l.b16 %v2141
        %v2238 = vunpack.c.l.b16 %v2142
        %v2239 = vunpack.c.l.b16 %v2143
        %v2240 = vunpack.c.l.b16 %v2144
        %v2241 = vunpack.c.l.b16 %v2145
        %v2242 = vunpack.c.l.b16 %v2146
        %v2243 = vunpack.c.l.b16 %v2147
        %v2244 = vpack.c.b16 %v2197, %v2196
        %v2245 = vpack.c.b16 %v2199, %v2198
        %v2246 = vpack.c.b16 %v2201, %v2200
        %v2247 = vpack.c.b16 %v2203, %v2202
        %v2248 = vpack.c.b16 %v2205, %v2204
        %v2249 = vpack.c.b16 %v2207, %v2206
        %v2250 = vpack.c.b16 %v2209, %v2208
        %v2251 = vpack.c.b16 %v2211, %v2210
        %v2252 = vpack.c.b16 %v2213, %v2212
        %v2253 = vpack.c.b16 %v2215, %v2214
        %v2254 = vpack.c.b16 %v2217, %v2216
        %v2255 = vpack.c.b16 %v2219, %v2218
        %v2256 = vpack.c.b16 %v2221, %v2220
        %v2257 = vpack.c.b16 %v2223, %v2222
        %v2258 = vpack.c.b16 %v2225, %v2224
        %v2259 = vpack.c.b16 %v2227, %v2226
        %v2260 = vpack.c.b16 %v2229, %v2228
        %v2261 = vpack.c.b16 %v2231, %v2230
        %v2262 = vpack.c.b16 %v2233, %v2232
        %v2263 = vpack.c.b16 %v2235, %v2234
        %v2264 = vpack.c.b16 %v2237, %v2236
        %v2265 = vpack.c.b16 %v2239, %v2238
        %v2266 = vpack.c.b16 %v2241, %v2240
        %v2267 = vpack.c.b16 %v2243, %v2242
        %2292 = vmatprep.subr.bf16.mxu0 0
        %2293 = vmatpush1.bf16.msra.mxu0 %v2251
        %2294 = vmatprep.subr.bf16.mxu0 0
        %2295 = vmatpush1.bf16.msra.mxu0 %v2250
        %2296 = vmatprep.subr.bf16.mxu0 0
        %2297 = vmatpush1.bf16.msra.mxu0 %v2249
        %2298 = vmatprep.subr.bf16.mxu0 0
        %2299 = vmatpush1.bf16.msra.mxu0 %v2248
        %2300 = vmatprep.subr.bf16.mxu0 0
        %2301 = vmatpush1.bf16.msra.mxu0 %v2247
        %2302 = vmatprep.subr.bf16.mxu0 0
        %2303 = vmatpush1.bf16.msra.mxu0 %v2246
        %2304 = vmatprep.subr.bf16.mxu0 0
        %2305 = vmatpush1.bf16.msra.mxu0 %v2245
        %2306 = vmatprep.subr.bf16.mxu0 0
        %2307 = vmatpush1.bf16.msra.mxu0 %v2244
        %2308 = vmatprep.subr.bf16.mxu0 0
        %2309 = vmatpush2.bf16.msra.mxu0 %v2259
        %2310 = vmatprep.subr.bf16.mxu0 0
        %2311 = vmatpush2.bf16.msra.mxu0 %v2258
        %2312 = vmatprep.subr.bf16.mxu0 0
        %2313 = vmatpush2.bf16.msra.mxu0 %v2257
        %2314 = vmatprep.subr.bf16.mxu0 0
        %2315 = vmatpush2.bf16.msra.mxu0 %v2256
        %2316 = vmatprep.subr.bf16.mxu0 0
        %2317 = vmatpush2.bf16.msra.mxu0 %v2255
        %2318 = vmatprep.subr.bf16.mxu0 0
        %2319 = vmatpush2.bf16.msra.mxu0 %v2254
        %2320 = vmatprep.subr.bf16.mxu0 0
        %2321 = vmatpush2.bf16.msra.mxu0 %v2253
        %2322 = vmatprep.subr.bf16.mxu0 0
        %2323 = vmatpush2.bf16.msra.mxu0 %v2252
        %2324 = vmatprep.mubr.bf16.mxu0 %v2075
        %2325 = vmatmul.mubr.bf16.gmra.mxu0 %v2051
        %v2326 = vpop.f32.mrf.mxu0
        %v2327 = vadd.f32 0.0, %v2326
        %v2328 = vpop.f32.mrf.mxu0
        %v2329 = vpop.f32.mrf.mxu0
        %v2330 = vadd.f32 0.0, %v2329
        %v2331 = vpop.f32.mrf.mxu0
        %2332 = vmatprep.mubr.bf16.mxu0 %v2076
        %2333 = vmatmul.mubr.bf16.gmra.mxu0 %v2052
        %v2334 = vpop.f32.mrf.mxu0
        %v2335 = vadd.f32 0.0, %v2334
        %v2336 = vpop.f32.mrf.mxu0
        %v2337 = vpop.f32.mrf.mxu0
        %v2338 = vadd.f32 0.0, %v2337
        %v2339 = vpop.f32.mrf.mxu0
        %2340 = vmatprep.mubr.bf16.mxu0 %v2077
        %2341 = vmatmul.mubr.bf16.gmra.mxu0 %v2053
        %v2342 = vpop.f32.mrf.mxu0
        %v2343 = vadd.f32 0.0, %v2342
        %v2344 = vpop.f32.mrf.mxu0
        %v2345 = vpop.f32.mrf.mxu0
        %v2346 = vadd.f32 0.0, %v2345
        %v2347 = vpop.f32.mrf.mxu0
        %2348 = vmatprep.mubr.bf16.mxu0 %v2078
        %2349 = vmatmul.mubr.bf16.gmra.mxu0 %v2054
        %v2350 = vpop.f32.mrf.mxu0
        %v2351 = vadd.f32 0.0, %v2350
        %v2352 = vpop.f32.mrf.mxu0
        %v2353 = vpop.f32.mrf.mxu0
        %v2354 = vadd.f32 0.0, %v2353
        %v2355 = vpop.f32.mrf.mxu0
        %2356 = vdwg.mxu0
        %2357 = vmatprep.subr.bf16.mxu0 0
        %2358 = vmatpush1.bf16.msra.mxu0 %v2267
        %2359 = vmatprep.subr.bf16.mxu0 0
        %2360 = vmatpush1.bf16.msra.mxu0 %v2266
        %2361 = vmatprep.subr.bf16.mxu0 0
        %2362 = vmatpush1.bf16.msra.mxu0 %v2265
        %2363 = vmatprep.subr.bf16.mxu0 0
        %2364 = vmatpush1.bf16.msra.mxu0 %v2264
        %2365 = vmatprep.subr.bf16.mxu0 0
        %2366 = vmatpush1.bf16.msra.mxu0 %v2263
        %2367 = vmatprep.subr.bf16.mxu0 0
        %2368 = vmatpush1.bf16.msra.mxu0 %v2262
        %2369 = vmatprep.subr.bf16.mxu0 0
        %2370 = vmatpush1.bf16.msra.mxu0 %v2261
        %2371 = vmatprep.subr.bf16.mxu0 0
        %2372 = vmatpush1.bf16.msra.mxu0 %v2260
        %2373 = vmatprep.subr.bf16.mxu0 0
        %2374 = vmatpush2.bf16.msra.mxu0 0
        %2375 = vmatprep.subr.bf16.mxu0 0
        %2376 = vmatpush2.bf16.msra.mxu0 0
        %2377 = vmatprep.subr.bf16.mxu0 0
        %2378 = vmatpush2.bf16.msra.mxu0 0
        %2379 = vmatprep.subr.bf16.mxu0 0
        %2380 = vmatpush2.bf16.msra.mxu0 0
        %2381 = vmatprep.subr.bf16.mxu0 0
        %2382 = vmatpush2.bf16.msra.mxu0 0
        %2383 = vmatprep.subr.bf16.mxu0 0
        %2384 = vmatpush2.bf16.msra.mxu0 0
        %2385 = vmatprep.subr.bf16.mxu0 0
        %2386 = vmatpush2.bf16.msra.mxu0 0
        %2387 = vmatprep.subr.bf16.mxu0 0
        %2388 = vmatpush2.bf16.msra.mxu0 0
        %2389 = vmatprep.mubr.bf16.mxu0 0
        %2390 = vmatmul.mubr.bf16.gmra.mxu0 %v2091
        %v2391 = vpop.f32.mrf.mxu0
        %v2392 = vadd.f32 %v2327, %v2391
        %v2393 = vpop.f32.mrf.mxu0
        %v2394 = vpop.f32.mrf.mxu0
        %v2395 = vadd.f32 %v2330, %v2394
        %v2396 = vpop.f32.mrf.mxu0
        %2397 = vmatprep.mubr.bf16.mxu0 0
        %2398 = vmatmul.mubr.bf16.gmra.mxu0 %v2092
        %v2399 = vpop.f32.mrf.mxu0
        %v2400 = vadd.f32 %v2335, %v2399
        %v2401 = vpop.f32.mrf.mxu0
        %v2402 = vpop.f32.mrf.mxu0
        %v2403 = vadd.f32 %v2338, %v2402
        %v2404 = vpop.f32.mrf.mxu0
        %2405 = vmatprep.mubr.bf16.mxu0 0
        %2406 = vmatmul.mubr.bf16.gmra.mxu0 %v2093
        %v2407 = vpop.f32.mrf.mxu0
        %v2408 = vadd.f32 %v2343, %v2407
        %v2409 = vpop.f32.mrf.mxu0
        %v2410 = vpop.f32.mrf.mxu0
        %v2411 = vadd.f32 %v2346, %v2410
        %v2412 = vpop.f32.mrf.mxu0
        %2413 = vmatprep.mubr.bf16.mxu0 0
        %2414 = vmatmul.mubr.bf16.gmra.mxu0 %v2094
        %v2415 = vpop.f32.mrf.mxu0
        %v2416 = vadd.f32 %v2351, %v2415
        %v2417 = vpop.f32.mrf.mxu0
        %v2418 = vpop.f32.mrf.mxu0
        %v2419 = vadd.f32 %v2354, %v2418
        %v2420 = vpop.f32.mrf.mxu0
        %2421 = vdwg.mxu0
        %v2470 = vunpack.c.l.b16 %v1851
        %v2471 = vunpack.c.l.b16 %v1852
        %v2472 = vunpack.c.l.b16 %v1853
        %v2473 = vunpack.c.l.b16 %v1854
        %v2474 = vunpack.c.l.b16 %v1855
        %v2475 = vunpack.c.l.b16 %v1856
        %v2476 = vunpack.c.l.b16 %v1857
        %v2477 = vunpack.c.l.b16 %v1858
        %v2478 = vunpack.c.l.b16 %v1859
        %v2479 = vunpack.c.l.b16 %v1860
        %v2480 = vunpack.c.l.b16 %v1861
        %v2481 = vunpack.c.l.b16 %v1862
        %v2482 = vunpack.c.l.b16 %v1863
        %v2483 = vunpack.c.l.b16 %v1864
        %v2484 = vunpack.c.l.b16 %v1865
        %v2485 = vunpack.c.l.b16 %v1866
        %v2486 = vunpack.c.l.b16 %v1867
        %v2487 = vunpack.c.l.b16 %v1868
        %v2488 = vunpack.c.l.b16 %v1869
        %v2489 = vunpack.c.l.b16 %v1870
        %v2490 = vunpack.c.l.b16 %v1871
        %v2491 = vunpack.c.l.b16 %v1872
        %v2492 = vunpack.c.l.b16 %v1873
        %v2493 = vunpack.c.l.b16 %v1874
        %v2494 = vunpack.c.l.b16 %v1875
        %v2495 = vunpack.c.l.b16 %v1876
        %v2496 = vunpack.c.l.b16 %v1877
        %v2497 = vunpack.c.l.b16 %v1878
        %v2498 = vunpack.c.l.b16 %v1879
        %v2499 = vunpack.c.l.b16 %v1880
        %v2500 = vunpack.c.l.b16 %v1881
        %v2501 = vunpack.c.l.b16 %v1882
        %v2502 = vunpack.c.l.b16 %v1883
        %v2503 = vunpack.c.l.b16 %v1884
        %v2504 = vunpack.c.l.b16 %v1885
        %v2505 = vunpack.c.l.b16 %v1886
        %v2506 = vunpack.c.l.b16 %v1887
        %v2507 = vunpack.c.l.b16 %v1888
        %v2508 = vunpack.c.l.b16 %v1889
        %v2509 = vunpack.c.l.b16 %v1890
        %v2510 = vunpack.c.l.b16 %v1891
        %v2511 = vunpack.c.l.b16 %v1892
        %v2512 = vunpack.c.l.b16 %v1893
        %v2513 = vunpack.c.l.b16 %v1894
        %v2514 = vunpack.c.l.b16 %v1895
        %v2515 = vunpack.c.l.b16 %v1896
        %v2516 = vunpack.c.l.b16 %v1897
        %v2517 = vunpack.c.l.b16 %v1898
        %v2518 = vpack.c.b16 %v2471, %v2470
        %v2519 = vpack.c.b16 %v2473, %v2472
        %v2520 = vpack.c.b16 %v2475, %v2474
        %v2521 = vpack.c.b16 %v2477, %v2476
        %v2522 = vpack.c.b16 %v2479, %v2478
        %v2523 = vpack.c.b16 %v2481, %v2480
        %v2524 = vpack.c.b16 %v2483, %v2482
        %v2525 = vpack.c.b16 %v2485, %v2484
        %v2526 = vpack.c.b16 %v2487, %v2486
        %v2527 = vpack.c.b16 %v2489, %v2488
        %v2528 = vpack.c.b16 %v2491, %v2490
        %v2529 = vpack.c.b16 %v2493, %v2492
        %v2530 = vpack.c.b16 %v2495, %v2494
        %v2531 = vpack.c.b16 %v2497, %v2496
        %v2532 = vpack.c.b16 %v2499, %v2498
        %v2533 = vpack.c.b16 %v2501, %v2500
        %v2534 = vpack.c.b16 %v2503, %v2502
        %v2535 = vpack.c.b16 %v2505, %v2504
        %v2536 = vpack.c.b16 %v2507, %v2506
        %v2537 = vpack.c.b16 %v2509, %v2508
        %v2538 = vpack.c.b16 %v2511, %v2510
        %v2539 = vpack.c.b16 %v2513, %v2512
        %v2540 = vpack.c.b16 %v2515, %v2514
        %v2541 = vpack.c.b16 %v2517, %v2516
        %2566 = vmatprep.subr.bf16.mxu0 0
        %2567 = vmatpush1.bf16.msra.mxu0 %v2525
        %2568 = vmatprep.subr.bf16.mxu0 0
        %2569 = vmatpush1.bf16.msra.mxu0 %v2524
        %2570 = vmatprep.subr.bf16.mxu0 0
        %2571 = vmatpush1.bf16.msra.mxu0 %v2523
        %2572 = vmatprep.subr.bf16.mxu0 0
        %2573 = vmatpush1.bf16.msra.mxu0 %v2522
        %2574 = vmatprep.subr.bf16.mxu0 0
        %2575 = vmatpush1.bf16.msra.mxu0 %v2521
        %2576 = vmatprep.subr.bf16.mxu0 0
        %2577 = vmatpush1.bf16.msra.mxu0 %v2520
        %2578 = vmatprep.subr.bf16.mxu0 0
        %2579 = vmatpush1.bf16.msra.mxu0 %v2519
        %2580 = vmatprep.subr.bf16.mxu0 0
        %2581 = vmatpush1.bf16.msra.mxu0 %v2518
        %2582 = vmatprep.subr.bf16.mxu0 0
        %2583 = vmatpush2.bf16.msra.mxu0 %v2533
        %2584 = vmatprep.subr.bf16.mxu0 0
        %2585 = vmatpush2.bf16.msra.mxu0 %v2532
        %2586 = vmatprep.subr.bf16.mxu0 0
        %2587 = vmatpush2.bf16.msra.mxu0 %v2531
        %2588 = vmatprep.subr.bf16.mxu0 0
        %2589 = vmatpush2.bf16.msra.mxu0 %v2530
        %2590 = vmatprep.subr.bf16.mxu0 0
        %2591 = vmatpush2.bf16.msra.mxu0 %v2529
        %2592 = vmatprep.subr.bf16.mxu0 0
        %2593 = vmatpush2.bf16.msra.mxu0 %v2528
        %2594 = vmatprep.subr.bf16.mxu0 0
        %2595 = vmatpush2.bf16.msra.mxu0 %v2527
        %2596 = vmatprep.subr.bf16.mxu0 0
        %2597 = vmatpush2.bf16.msra.mxu0 %v2526
        %2598 = vmatprep.mubr.bf16.mxu0 %v1827
        %2599 = vmatmul.mubr.bf16.gmra.mxu0 %v1803
        %v2600 = vpop.f32.mrf.mxu0
        %v2601 = vadd.f32 %v2392, %v2600
        %v2602 = vpop.f32.mrf.mxu0
        %v2603 = vpop.f32.mrf.mxu0
        %v2604 = vadd.f32 %v2395, %v2603
        %v2605 = vpop.f32.mrf.mxu0
        %2606 = vmatprep.mubr.bf16.mxu0 %v1828
        %2607 = vmatmul.mubr.bf16.gmra.mxu0 %v1804
        %v2608 = vpop.f32.mrf.mxu0
        %v2609 = vadd.f32 %v2400, %v2608
        %v2610 = vpop.f32.mrf.mxu0
        %v2611 = vpop.f32.mrf.mxu0
        %v2612 = vadd.f32 %v2403, %v2611
        %v2613 = vpop.f32.mrf.mxu0
        %2614 = vmatprep.mubr.bf16.mxu0 %v1829
        %2615 = vmatmul.mubr.bf16.gmra.mxu0 %v1805
        %v2616 = vpop.f32.mrf.mxu0
        %v2617 = vadd.f32 %v2408, %v2616
        %v2618 = vpop.f32.mrf.mxu0
        %v2619 = vpop.f32.mrf.mxu0
        %v2620 = vadd.f32 %v2411, %v2619
        %v2621 = vpop.f32.mrf.mxu0
        %2622 = vmatprep.mubr.bf16.mxu0 %v1830
        %2623 = vmatmul.mubr.bf16.gmra.mxu0 %v1806
        %v2624 = vpop.f32.mrf.mxu0
        %v2625 = vadd.f32 %v2416, %v2624
        %v2626 = vpop.f32.mrf.mxu0
        %v2627 = vpop.f32.mrf.mxu0
        %v2628 = vadd.f32 %v2419, %v2627
        %v2629 = vpop.f32.mrf.mxu0
        %2630 = vdwg.mxu0
        %2631 = vmatprep.subr.bf16.mxu0 0
        %2632 = vmatpush1.bf16.msra.mxu0 %v2541
        %2633 = vmatprep.subr.bf16.mxu0 0
        %2634 = vmatpush1.bf16.msra.mxu0 %v2540
        %2635 = vmatprep.subr.bf16.mxu0 0
        %2636 = vmatpush1.bf16.msra.mxu0 %v2539
        %2637 = vmatprep.subr.bf16.mxu0 0
        %2638 = vmatpush1.bf16.msra.mxu0 %v2538
        %2639 = vmatprep.subr.bf16.mxu0 0
        %2640 = vmatpush1.bf16.msra.mxu0 %v2537
        %2641 = vmatprep.subr.bf16.mxu0 0
        %2642 = vmatpush1.bf16.msra.mxu0 %v2536
        %2643 = vmatprep.subr.bf16.mxu0 0
        %2644 = vmatpush1.bf16.msra.mxu0 %v2535
        %2645 = vmatprep.subr.bf16.mxu0 0
        %2646 = vmatpush1.bf16.msra.mxu0 %v2534
        %2647 = vmatprep.subr.bf16.mxu0 0
        %2648 = vmatpush2.bf16.msra.mxu0 0
        %2649 = vmatprep.subr.bf16.mxu0 0
        %2650 = vmatpush2.bf16.msra.mxu0 0
        %2651 = vmatprep.subr.bf16.mxu0 0
        %2652 = vmatpush2.bf16.msra.mxu0 0
        %2653 = vmatprep.subr.bf16.mxu0 0
        %2654 = vmatpush2.bf16.msra.mxu0 0
        %2655 = vmatprep.subr.bf16.mxu0 0
        %2656 = vmatpush2.bf16.msra.mxu0 0
        %2657 = vmatprep.subr.bf16.mxu0 0
        %2658 = vmatpush2.bf16.msra.mxu0 0
        %2659 = vmatprep.subr.bf16.mxu0 0
        %2660 = vmatpush2.bf16.msra.mxu0 0
        %2661 = vmatprep.subr.bf16.mxu0 0
        %2662 = vmatpush2.bf16.msra.mxu0 0
        %2663 = vmatprep.mubr.bf16.mxu0 0
        %2664 = vmatmul.mubr.bf16.gmra.mxu0 %v1843
        %v2665 = vpop.f32.mrf.mxu0
        %v2666 = vadd.f32 %v2601, %v2665
        %v2667 = vpop.f32.mrf.mxu0
        %v2668 = vpop.f32.mrf.mxu0
        %v2669 = vadd.f32 %v2604, %v2668
        %v2670 = vpop.f32.mrf.mxu0
        %2671 = vmatprep.mubr.bf16.mxu0 0
        %2672 = vmatmul.mubr.bf16.gmra.mxu0 %v1844
        %v2673 = vpop.f32.mrf.mxu0
        %v2674 = vadd.f32 %v2609, %v2673
        %v2675 = vpop.f32.mrf.mxu0
        %v2676 = vpop.f32.mrf.mxu0
        %v2677 = vadd.f32 %v2612, %v2676
        %v2678 = vpop.f32.mrf.mxu0
        %2679 = vmatprep.mubr.bf16.mxu0 0
        %2680 = vmatmul.mubr.bf16.gmra.mxu0 %v1845
        %v2681 = vpop.f32.mrf.mxu0
        %v2682 = vadd.f32 %v2617, %v2681
        %v2683 = vpop.f32.mrf.mxu0
        %v2684 = vpop.f32.mrf.mxu0
        %v2685 = vadd.f32 %v2620, %v2684
        %v2686 = vpop.f32.mrf.mxu0
        %2687 = vmatprep.mubr.bf16.mxu0 0
        %2688 = vmatmul.mubr.bf16.gmra.mxu0 %v1846
        %v2689 = vpop.f32.mrf.mxu0
        %v2690 = vadd.f32 %v2625, %v2689
        %v2691 = vpop.f32.mrf.mxu0
        %v2692 = vpop.f32.mrf.mxu0
        %v2693 = vadd.f32 %v2628, %v2692
        %v2694 = vpop.f32.mrf.mxu0
        %2695 = vdwg.mxu0
        %s2696 = scalar_lea.vmem [#allocation2], 32
        %v2697 = vld [vmem:[%s2696] sm:$0xf]
        %v2698 = vld [vmem:[%s2696 + $0x20] sm:$0xf]
        %v2699 = vld [vmem:[%s2696 + $0x40] sm:$0xf]
        %v2700 = vld [vmem:[%s2696 + $0x60] sm:$0xf]
        %v2701 = vld [vmem:[%s2696 + $0x80] sm:$0xf]
        %v2702 = vld [vmem:[%s2696 + $0xa0] sm:$0xf]
        %v2703 = vld [vmem:[%s2696 + $0xc0] sm:$0xf]
        %v2704 = vld [vmem:[%s2696 + $0xe0] sm:$0xf]
        %v2705 = vld [vmem:[%s2696 + $0x4] sm:$0xf]
        %v2706 = vld [vmem:[%s2696 + $0x24] sm:$0xf]
        %v2707 = vld [vmem:[%s2696 + $0x44] sm:$0xf]
        %v2708 = vld [vmem:[%s2696 + $0x64] sm:$0xf]
        %v2709 = vld [vmem:[%s2696 + $0x84] sm:$0xf]
        %v2710 = vld [vmem:[%s2696 + $0xa4] sm:$0xf]
        %v2711 = vld [vmem:[%s2696 + $0xc4] sm:$0xf]
        %v2712 = vld [vmem:[%s2696 + $0xe4] sm:$0xf]
        %v2713 = vld [vmem:[%s2696 + $0x10] sm:$0x1]
        %v2714 = vld [vmem:[%s2696 + $0x30] sm:$0x1]
        %v2715 = vld [vmem:[%s2696 + $0x50] sm:$0x1]
        %v2716 = vld [vmem:[%s2696 + $0x70] sm:$0x1]
        %v2717 = vld [vmem:[%s2696 + $0x90] sm:$0x1]
        %v2718 = vld [vmem:[%s2696 + $0xb0] sm:$0x1]
        %v2719 = vld [vmem:[%s2696 + $0xd0] sm:$0x1]
        %v2720 = vld [vmem:[%s2696 + $0xf0] sm:$0x1]
        %v2722 = vshrl.u32 %v2697, 16
        %v2724 = vrot.slane %v2722, 4
        %v2725 = vshll.u32 %v2697, 16
        %v2727 = vrot.slane %v2725, 5
        %v2728 = vor.u32 %v2724, %v2727
        %v2729 = vrot.slane %v2728, 4
        %v2731 = vshll.u32 %v2713, 16
        %v2733 = vrot.slane %v2731, 5
        %v2734 = vsel %vm1674, %v2729, %v2733
        %v2736 = vshrl.u32 %v2698, 16
        %v2738 = vrot.slane %v2736, 4
        %v2739 = vshll.u32 %v2698, 16
        %v2741 = vrot.slane %v2739, 5
        %v2742 = vor.u32 %v2738, %v2741
        %v2743 = vrot.slane %v2742, 4
        %v2745 = vshll.u32 %v2714, 16
        %v2747 = vrot.slane %v2745, 5
        %v2748 = vsel %vm1674, %v2743, %v2747
        %v2750 = vshrl.u32 %v2699, 16
        %v2752 = vrot.slane %v2750, 4
        %v2753 = vshll.u32 %v2699, 16
        %v2755 = vrot.slane %v2753, 5
        %v2756 = vor.u32 %v2752, %v2755
        %v2757 = vrot.slane %v2756, 4
        %v2759 = vshll.u32 %v2715, 16
        %v2761 = vrot.slane %v2759, 5
        %v2762 = vsel %vm1674, %v2757, %v2761
        %v2764 = vshrl.u32 %v2700, 16
        %v2766 = vrot.slane %v2764, 4
        %v2767 = vshll.u32 %v2700, 16
        %v2769 = vrot.slane %v2767, 5
        %v2770 = vor.u32 %v2766, %v2769
        %v2771 = vrot.slane %v2770, 4
        %v2773 = vshll.u32 %v2716, 16
        %v2775 = vrot.slane %v2773, 5
        %v2776 = vsel %vm1674, %v2771, %v2775
        %v2778 = vshrl.u32 %v2701, 16
        %v2780 = vrot.slane %v2778, 4
        %v2781 = vshll.u32 %v2701, 16
        %v2783 = vrot.slane %v2781, 5
        %v2784 = vor.u32 %v2780, %v2783
        %v2785 = vrot.slane %v2784, 4
        %v2787 = vshll.u32 %v2717, 16
        %v2789 = vrot.slane %v2787, 5
        %v2790 = vsel %vm1674, %v2785, %v2789
        %v2792 = vshrl.u32 %v2702, 16
        %v2794 = vrot.slane %v2792, 4
        %v2795 = vshll.u32 %v2702, 16
        %v2797 = vrot.slane %v2795, 5
        %v2798 = vor.u32 %v2794, %v2797
        %v2799 = vrot.slane %v2798, 4
        %v2801 = vshll.u32 %v2718, 16
        %v2803 = vrot.slane %v2801, 5
        %v2804 = vsel %vm1674, %v2799, %v2803
        %v2806 = vshrl.u32 %v2703, 16
        %v2808 = vrot.slane %v2806, 4
        %v2809 = vshll.u32 %v2703, 16
        %v2811 = vrot.slane %v2809, 5
        %v2812 = vor.u32 %v2808, %v2811
        %v2813 = vrot.slane %v2812, 4
        %v2815 = vshll.u32 %v2719, 16
        %v2817 = vrot.slane %v2815, 5
        %v2818 = vsel %vm1674, %v2813, %v2817
        %v2820 = vshrl.u32 %v2704, 16
        %v2822 = vrot.slane %v2820, 4
        %v2823 = vshll.u32 %v2704, 16
        %v2825 = vrot.slane %v2823, 5
        %v2826 = vor.u32 %v2822, %v2825
        %v2827 = vrot.slane %v2826, 4
        %v2829 = vshll.u32 %v2720, 16
        %v2831 = vrot.slane %v2829, 5
        %v2832 = vsel %vm1674, %v2827, %v2831
        %v2841 = vunpack.c.l.b16 %v2697
        %v2842 = vunpack.c.l.b16 %v2698
        %v2843 = vunpack.c.l.b16 %v2699
        %v2844 = vunpack.c.l.b16 %v2700
        %v2845 = vunpack.c.l.b16 %v2701
        %v2846 = vunpack.c.l.b16 %v2702
        %v2847 = vunpack.c.l.b16 %v2703
        %v2848 = vunpack.c.l.b16 %v2704
        %v2849 = vpack.c.b16 %v2842, %v2841
        %v2850 = vpack.c.b16 %v2844, %v2843
        %v2851 = vpack.c.b16 %v2846, %v2845
        %v2852 = vpack.c.b16 %v2848, %v2847
        %v2865 = vunpack.c.l.b16 %v2705
        %v2866 = vunpack.c.l.b16 %v2706
        %v2867 = vunpack.c.l.b16 %v2707
        %v2868 = vunpack.c.l.b16 %v2708
        %v2869 = vunpack.c.l.b16 %v2709
        %v2870 = vunpack.c.l.b16 %v2710
        %v2871 = vunpack.c.l.b16 %v2711
        %v2872 = vunpack.c.l.b16 %v2712
        %v2873 = vpack.c.b16 %v2866, %v2865
        %v2874 = vpack.c.b16 %v2868, %v2867
        %v2875 = vpack.c.b16 %v2870, %v2869
        %v2876 = vpack.c.b16 %v2872, %v2871
        %v2881 = vunpack.c.l.b16 %v2734
        %v2882 = vunpack.c.l.b16 %v2748
        %v2883 = vunpack.c.l.b16 %v2762
        %v2884 = vunpack.c.l.b16 %v2776
        %v2885 = vunpack.c.l.b16 %v2790
        %v2886 = vunpack.c.l.b16 %v2804
        %v2887 = vunpack.c.l.b16 %v2818
        %v2888 = vunpack.c.l.b16 %v2832
        %v2889 = vpack.c.b16 %v2882, %v2881
        %v2890 = vpack.c.b16 %v2884, %v2883
        %v2891 = vpack.c.b16 %v2886, %v2885
        %v2892 = vpack.c.b16 %v2888, %v2887
        %s2897 = scalar_lea.vmem %s2, 384
        %v2898 = vld [vmem:[%s2897] sm:$0xf]
        %v2899 = vld [vmem:[%s2897 + $0x4] sm:$0xf]
        %v2900 = vld [vmem:[%s2897 + $0x8] sm:$0xf]
        %v2901 = vld [vmem:[%s2897 + $0xc] sm:$0xf]
        %v2902 = vld [vmem:[%s2897 + $0x10] sm:$0xf]
        %v2903 = vld [vmem:[%s2897 + $0x14] sm:$0xf]
        %v2904 = vld [vmem:[%s2897 + $0x18] sm:$0xf]
        %v2905 = vld [vmem:[%s2897 + $0x1c] sm:$0xf]
        %v2906 = vld [vmem:[%s2897 + $0x20] sm:$0xf]
        %v2907 = vld [vmem:[%s2897 + $0x24] sm:$0xf]
        %v2908 = vld [vmem:[%s2897 + $0x28] sm:$0xf]
        %v2909 = vld [vmem:[%s2897 + $0x2c] sm:$0xf]
        %v2910 = vld [vmem:[%s2897 + $0x30] sm:$0xf]
        %v2911 = vld [vmem:[%s2897 + $0x34] sm:$0xf]
        %v2912 = vld [vmem:[%s2897 + $0x38] sm:$0xf]
        %v2913 = vld [vmem:[%s2897 + $0x3c] sm:$0xf]
        %v2914 = vld [vmem:[%s2897 + $0x40] sm:$0xf]
        %v2915 = vld [vmem:[%s2897 + $0x44] sm:$0xf]
        %v2916 = vld [vmem:[%s2897 + $0x48] sm:$0xf]
        %v2917 = vld [vmem:[%s2897 + $0x4c] sm:$0xf]
        %v2918 = vld [vmem:[%s2897 + $0x50] sm:$0xf]
        %v2919 = vld [vmem:[%s2897 + $0x54] sm:$0xf]
        %v2920 = vld [vmem:[%s2897 + $0x58] sm:$0xf]
        %v2921 = vld [vmem:[%s2897 + $0x5c] sm:$0xf]
        %v2922 = vld [vmem:[%s2897 + $0x60] sm:$0xf]
        %v2923 = vld [vmem:[%s2897 + $0x64] sm:$0xf]
        %v2924 = vld [vmem:[%s2897 + $0x68] sm:$0xf]
        %v2925 = vld [vmem:[%s2897 + $0x6c] sm:$0xf]
        %v2926 = vld [vmem:[%s2897 + $0x70] sm:$0xf]
        %v2927 = vld [vmem:[%s2897 + $0x74] sm:$0xf]
        %v2928 = vld [vmem:[%s2897 + $0x78] sm:$0xf]
        %v2929 = vld [vmem:[%s2897 + $0x7c] sm:$0xf]
        %v2930 = vld [vmem:[%s2897 + $0x80] sm:$0xf]
        %v2931 = vld [vmem:[%s2897 + $0x84] sm:$0xf]
        %v2932 = vld [vmem:[%s2897 + $0x88] sm:$0xf]
        %v2933 = vld [vmem:[%s2897 + $0x8c] sm:$0xf]
        %v2934 = vld [vmem:[%s2897 + $0x90] sm:$0xf]
        %v2935 = vld [vmem:[%s2897 + $0x94] sm:$0xf]
        %v2936 = vld [vmem:[%s2897 + $0x98] sm:$0xf]
        %v2937 = vld [vmem:[%s2897 + $0x9c] sm:$0xf]
        %v2938 = vld [vmem:[%s2897 + $0xa0] sm:$0xf]
        %v2939 = vld [vmem:[%s2897 + $0xa4] sm:$0xf]
        %v2940 = vld [vmem:[%s2897 + $0xa8] sm:$0xf]
        %v2941 = vld [vmem:[%s2897 + $0xac] sm:$0xf]
        %v2942 = vld [vmem:[%s2897 + $0xb0] sm:$0xf]
        %v2943 = vld [vmem:[%s2897 + $0xb4] sm:$0xf]
        %v2944 = vld [vmem:[%s2897 + $0xb8] sm:$0xf]
        %v2945 = vld [vmem:[%s2897 + $0xbc] sm:$0xf]
        %v2994 = vunpack.c.l.b16 %v2898
        %v2995 = vunpack.c.l.b16 %v2899
        %v2996 = vunpack.c.l.b16 %v2900
        %v2997 = vunpack.c.l.b16 %v2901
        %v2998 = vunpack.c.l.b16 %v2902
        %v2999 = vunpack.c.l.b16 %v2903
        %v3000 = vunpack.c.l.b16 %v2904
        %v3001 = vunpack.c.l.b16 %v2905
        %v3002 = vunpack.c.l.b16 %v2906
        %v3003 = vunpack.c.l.b16 %v2907
        %v3004 = vunpack.c.l.b16 %v2908
        %v3005 = vunpack.c.l.b16 %v2909
        %v3006 = vunpack.c.l.b16 %v2910
        %v3007 = vunpack.c.l.b16 %v2911
        %v3008 = vunpack.c.l.b16 %v2912
        %v3009 = vunpack.c.l.b16 %v2913
        %v3010 = vunpack.c.l.b16 %v2914
        %v3011 = vunpack.c.l.b16 %v2915
        %v3012 = vunpack.c.l.b16 %v2916
        %v3013 = vunpack.c.l.b16 %v2917
        %v3014 = vunpack.c.l.b16 %v2918
        %v3015 = vunpack.c.l.b16 %v2919
        %v3016 = vunpack.c.l.b16 %v2920
        %v3017 = vunpack.c.l.b16 %v2921
        %v3018 = vunpack.c.l.b16 %v2922
        %v3019 = vunpack.c.l.b16 %v2923
        %v3020 = vunpack.c.l.b16 %v2924
        %v3021 = vunpack.c.l.b16 %v2925
        %v3022 = vunpack.c.l.b16 %v2926
        %v3023 = vunpack.c.l.b16 %v2927
        %v3024 = vunpack.c.l.b16 %v2928
        %v3025 = vunpack.c.l.b16 %v2929
        %v3026 = vunpack.c.l.b16 %v2930
        %v3027 = vunpack.c.l.b16 %v2931
        %v3028 = vunpack.c.l.b16 %v2932
        %v3029 = vunpack.c.l.b16 %v2933
        %v3030 = vunpack.c.l.b16 %v2934
        %v3031 = vunpack.c.l.b16 %v2935
        %v3032 = vunpack.c.l.b16 %v2936
        %v3033 = vunpack.c.l.b16 %v2937
        %v3034 = vunpack.c.l.b16 %v2938
        %v3035 = vunpack.c.l.b16 %v2939
        %v3036 = vunpack.c.l.b16 %v2940
        %v3037 = vunpack.c.l.b16 %v2941
        %v3038 = vunpack.c.l.b16 %v2942
        %v3039 = vunpack.c.l.b16 %v2943
        %v3040 = vunpack.c.l.b16 %v2944
        %v3041 = vunpack.c.l.b16 %v2945
        %v3042 = vpack.c.b16 %v2995, %v2994
        %v3043 = vpack.c.b16 %v2997, %v2996
        %v3044 = vpack.c.b16 %v2999, %v2998
        %v3045 = vpack.c.b16 %v3001, %v3000
        %v3046 = vpack.c.b16 %v3003, %v3002
        %v3047 = vpack.c.b16 %v3005, %v3004
        %v3048 = vpack.c.b16 %v3007, %v3006
        %v3049 = vpack.c.b16 %v3009, %v3008
        %v3050 = vpack.c.b16 %v3011, %v3010
        %v3051 = vpack.c.b16 %v3013, %v3012
        %v3052 = vpack.c.b16 %v3015, %v3014
        %v3053 = vpack.c.b16 %v3017, %v3016
        %v3054 = vpack.c.b16 %v3019, %v3018
        %v3055 = vpack.c.b16 %v3021, %v3020
        %v3056 = vpack.c.b16 %v3023, %v3022
        %v3057 = vpack.c.b16 %v3025, %v3024
        %v3058 = vpack.c.b16 %v3027, %v3026
        %v3059 = vpack.c.b16 %v3029, %v3028
        %v3060 = vpack.c.b16 %v3031, %v3030
        %v3061 = vpack.c.b16 %v3033, %v3032
        %v3062 = vpack.c.b16 %v3035, %v3034
        %v3063 = vpack.c.b16 %v3037, %v3036
        %v3064 = vpack.c.b16 %v3039, %v3038
        %v3065 = vpack.c.b16 %v3041, %v3040
        %3090 = vmatprep.subr.bf16.mxu0 0
        %3091 = vmatpush1.bf16.msra.mxu0 %v3049
        %3092 = vmatprep.subr.bf16.mxu0 0
        %3093 = vmatpush1.bf16.msra.mxu0 %v3048
        %3094 = vmatprep.subr.bf16.mxu0 0
        %3095 = vmatpush1.bf16.msra.mxu0 %v3047
        %3096 = vmatprep.subr.bf16.mxu0 0
        %3097 = vmatpush1.bf16.msra.mxu0 %v3046
        %3098 = vmatprep.subr.bf16.mxu0 0
        %3099 = vmatpush1.bf16.msra.mxu0 %v3045
        %3100 = vmatprep.subr.bf16.mxu0 0
        %3101 = vmatpush1.bf16.msra.mxu0 %v3044
        %3102 = vmatprep.subr.bf16.mxu0 0
        %3103 = vmatpush1.bf16.msra.mxu0 %v3043
        %3104 = vmatprep.subr.bf16.mxu0 0
        %3105 = vmatpush1.bf16.msra.mxu0 %v3042
        %3106 = vmatprep.subr.bf16.mxu0 0
        %3107 = vmatpush2.bf16.msra.mxu0 %v3057
        %3108 = vmatprep.subr.bf16.mxu0 0
        %3109 = vmatpush2.bf16.msra.mxu0 %v3056
        %3110 = vmatprep.subr.bf16.mxu0 0
        %3111 = vmatpush2.bf16.msra.mxu0 %v3055
        %3112 = vmatprep.subr.bf16.mxu0 0
        %3113 = vmatpush2.bf16.msra.mxu0 %v3054
        %3114 = vmatprep.subr.bf16.mxu0 0
        %3115 = vmatpush2.bf16.msra.mxu0 %v3053
        %3116 = vmatprep.subr.bf16.mxu0 0
        %3117 = vmatpush2.bf16.msra.mxu0 %v3052
        %3118 = vmatprep.subr.bf16.mxu0 0
        %3119 = vmatpush2.bf16.msra.mxu0 %v3051
        %3120 = vmatprep.subr.bf16.mxu0 0
        %3121 = vmatpush2.bf16.msra.mxu0 %v3050
        %3122 = vmatprep.mubr.bf16.mxu0 %v2873
        %3123 = vmatmul.mubr.bf16.gmra.mxu0 %v2849
        %v3124 = vpop.f32.mrf.mxu0
        %v3125 = vadd.f32 0.0, %v3124
        %v3126 = vpop.f32.mrf.mxu0
        %v3127 = vpop.f32.mrf.mxu0
        %v3128 = vadd.f32 0.0, %v3127
        %v3129 = vpop.f32.mrf.mxu0
        %3130 = vmatprep.mubr.bf16.mxu0 %v2874
        %3131 = vmatmul.mubr.bf16.gmra.mxu0 %v2850
        %v3132 = vpop.f32.mrf.mxu0
        %v3133 = vadd.f32 0.0, %v3132
        %v3134 = vpop.f32.mrf.mxu0
        %v3135 = vpop.f32.mrf.mxu0
        %v3136 = vadd.f32 0.0, %v3135
        %v3137 = vpop.f32.mrf.mxu0
        %3138 = vmatprep.mubr.bf16.mxu0 %v2875
        %3139 = vmatmul.mubr.bf16.gmra.mxu0 %v2851
        %v3140 = vpop.f32.mrf.mxu0
        %v3141 = vadd.f32 0.0, %v3140
        %v3142 = vpop.f32.mrf.mxu0
        %v3143 = vpop.f32.mrf.mxu0
        %v3144 = vadd.f32 0.0, %v3143
        %v3145 = vpop.f32.mrf.mxu0
        %3146 = vmatprep.mubr.bf16.mxu0 %v2876
        %3147 = vmatmul.mubr.bf16.gmra.mxu0 %v2852
        %v3148 = vpop.f32.mrf.mxu0
        %v3149 = vadd.f32 0.0, %v3148
        %v3150 = vpop.f32.mrf.mxu0
        %v3151 = vpop.f32.mrf.mxu0
        %v3152 = vadd.f32 0.0, %v3151
        %v3153 = vpop.f32.mrf.mxu0
        %3154 = vdwg.mxu0
        %3155 = vmatprep.subr.bf16.mxu0 0
        %3156 = vmatpush1.bf16.msra.mxu0 %v3065
        %3157 = vmatprep.subr.bf16.mxu0 0
        %3158 = vmatpush1.bf16.msra.mxu0 %v3064
        %3159 = vmatprep.subr.bf16.mxu0 0
        %3160 = vmatpush1.bf16.msra.mxu0 %v3063
        %3161 = vmatprep.subr.bf16.mxu0 0
        %3162 = vmatpush1.bf16.msra.mxu0 %v3062
        %3163 = vmatprep.subr.bf16.mxu0 0
        %3164 = vmatpush1.bf16.msra.mxu0 %v3061
        %3165 = vmatprep.subr.bf16.mxu0 0
        %3166 = vmatpush1.bf16.msra.mxu0 %v3060
        %3167 = vmatprep.subr.bf16.mxu0 0
        %3168 = vmatpush1.bf16.msra.mxu0 %v3059
        %3169 = vmatprep.subr.bf16.mxu0 0
        %3170 = vmatpush1.bf16.msra.mxu0 %v3058
        %3171 = vmatprep.subr.bf16.mxu0 0
        %3172 = vmatpush2.bf16.msra.mxu0 0
        %3173 = vmatprep.subr.bf16.mxu0 0
        %3174 = vmatpush2.bf16.msra.mxu0 0
        %3175 = vmatprep.subr.bf16.mxu0 0
        %3176 = vmatpush2.bf16.msra.mxu0 0
        %3177 = vmatprep.subr.bf16.mxu0 0
        %3178 = vmatpush2.bf16.msra.mxu0 0
        %3179 = vmatprep.subr.bf16.mxu0 0
        %3180 = vmatpush2.bf16.msra.mxu0 0
        %3181 = vmatprep.subr.bf16.mxu0 0
        %3182 = vmatpush2.bf16.msra.mxu0 0
        %3183 = vmatprep.subr.bf16.mxu0 0
        %3184 = vmatpush2.bf16.msra.mxu0 0
        %3185 = vmatprep.subr.bf16.mxu0 0
        %3186 = vmatpush2.bf16.msra.mxu0 0
        %3187 = vmatprep.mubr.bf16.mxu0 0
        %3188 = vmatmul.mubr.bf16.gmra.mxu0 %v2889
        %v3189 = vpop.f32.mrf.mxu0
        %v3190 = vadd.f32 %v3125, %v3189
        %v3191 = vpop.f32.mrf.mxu0
        %v3192 = vpop.f32.mrf.mxu0
        %v3193 = vadd.f32 %v3128, %v3192
        %v3194 = vpop.f32.mrf.mxu0
        %3195 = vmatprep.mubr.bf16.mxu0 0
        %3196 = vmatmul.mubr.bf16.gmra.mxu0 %v2890
        %v3197 = vpop.f32.mrf.mxu0
        %v3198 = vadd.f32 %v3133, %v3197
        %v3199 = vpop.f32.mrf.mxu0
        %v3200 = vpop.f32.mrf.mxu0
        %v3201 = vadd.f32 %v3136, %v3200
        %v3202 = vpop.f32.mrf.mxu0
        %3203 = vmatprep.mubr.bf16.mxu0 0
        %3204 = vmatmul.mubr.bf16.gmra.mxu0 %v2891
        %v3205 = vpop.f32.mrf.mxu0
        %v3206 = vadd.f32 %v3141, %v3205
        %v3207 = vpop.f32.mrf.mxu0
        %v3208 = vpop.f32.mrf.mxu0
        %v3209 = vadd.f32 %v3144, %v3208
        %v3210 = vpop.f32.mrf.mxu0
        %3211 = vmatprep.mubr.bf16.mxu0 0
        %3212 = vmatmul.mubr.bf16.gmra.mxu0 %v2892
        %v3213 = vpop.f32.mrf.mxu0
        %v3214 = vadd.f32 %v3149, %v3213
        %v3215 = vpop.f32.mrf.mxu0
        %v3216 = vpop.f32.mrf.mxu0
        %v3217 = vadd.f32 %v3152, %v3216
        %v3218 = vpop.f32.mrf.mxu0
        %3219 = vdwg.mxu0
        %v3220 = vadd.f32 %v2666, %v3190
        %v3221 = vadd.f32 %v2669, %v3193
        %v3222 = vadd.f32 %v2674, %v3198
        %v3223 = vadd.f32 %v2677, %v3201
        %v3224 = vadd.f32 %v2682, %v3206
        %v3225 = vadd.f32 %v2685, %v3209
        %v3226 = vadd.f32 %v2690, %v3214
        %v3227 = vadd.f32 %v2693, %v3217
        %v3228 = vld [vmem:[%s5] sm:$0x1]
        %v3230 = vlaneseq
        %v3231 = vshrl.u32 %v3230, 7
        %v3232 = vsub.s32 0, %v3231
        %v3233 = vrot.slane %v3228, %v3232
        %v3235 = vmul.f32 %v3220, %v3233
        %v3236 = vmul.f32 %v3221, %v3233
        %v3237 = vmul.f32 %v3222, %v3233
        %v3238 = vmul.f32 %v3223, %v3233
        %v3239 = vmul.f32 %v3224, %v3233
        %v3240 = vmul.f32 %v3225, %v3233
        %v3241 = vmul.f32 %v3226, %v3233
        %v3242 = vmul.f32 %v3227, %v3233
        %v3243 = vld [vmem:[%s6] sm:$0x1]
        %v3245 = vlaneseq
        %v3246 = vshrl.u32 %v3245, 7
        %v3247 = vsub.s32 0, %v3246
        %v3248 = vrot.slane %v3243, %v3247
        %v3250 = vadd.f32 %v3235, %v3248
        %v3251 = vadd.f32 %v3236, %v3248
        %v3252 = vadd.f32 %v3237, %v3248
        %v3253 = vadd.f32 %v3238, %v3248
        %v3254 = vadd.f32 %v3239, %v3248
        %v3255 = vadd.f32 %v3240, %v3248
        %v3256 = vadd.f32 %v3241, %v3248
        %v3257 = vadd.f32 %v3242, %v3248
        %v3258 = vmax.f32 %v3250, 0.0
        %v3259 = vmax.f32 %v3251, 0.0
        %v3260 = vmax.f32 %v3252, 0.0
        %v3261 = vmax.f32 %v3253, 0.0
        %v3262 = vmax.f32 %v3254, 0.0
        %v3263 = vmax.f32 %v3255, 0.0
        %v3264 = vmax.f32 %v3256, 0.0
        %v3265 = vmax.f32 %v3257, 0.0
        %3266 = vst [vmem:[#allocation3] sm:$0xf] 0
        %3267 = vst [vmem:[#allocation3 + $0x4] sm:$0x1] 0
        %s3268 = scalar_lea.vmem [#allocation3], 72
        %3269 = vst [vmem:[%s3268] sm:$0xf] 0
        %3270 = vst [vmem:[%s3268 + $0x4] sm:$0x1] 0
        %s3271 = scalar_lea.vmem [#allocation3], 8
        %v3272 = vld [vmem:[%s3271] sm:$0x1]
        %v3273 = vsel %vm637, 0, %v3272
        %3274 = vst [vmem:[%s3271] sm:$0x1] %v3273
        %v3275 = vld [vmem:[%s3271 + $0x8] sm:$0x1]
        %v3276 = vsel %vm637, 0, %v3275
        %3277 = vst [vmem:[%s3271 + $0x8] sm:$0x1] %v3276
        %v3278 = vld [vmem:[%s3271 + $0x10] sm:$0x1]
        %v3279 = vsel %vm637, 0, %v3278
        %3280 = vst [vmem:[%s3271 + $0x10] sm:$0x1] %v3279
        %v3281 = vld [vmem:[%s3271 + $0x18] sm:$0x1]
        %v3282 = vsel %vm637, 0, %v3281
        %3283 = vst [vmem:[%s3271 + $0x18] sm:$0x1] %v3282
        %v3284 = vld [vmem:[%s3271 + $0x20] sm:$0x1]
        %v3285 = vsel %vm637, 0, %v3284
        %3286 = vst [vmem:[%s3271 + $0x20] sm:$0x1] %v3285
        %v3287 = vld [vmem:[%s3271 + $0x28] sm:$0x1]
        %v3288 = vsel %vm637, 0, %v3287
        %3289 = vst [vmem:[%s3271 + $0x28] sm:$0x1] %v3288
        %v3290 = vld [vmem:[%s3271 + $0x30] sm:$0x1]
        %v3291 = vsel %vm637, 0, %v3290
        %3292 = vst [vmem:[%s3271 + $0x30] sm:$0x1] %v3291
        %v3293 = vld [vmem:[%s3271 + $0x38] sm:$0x1]
        %v3294 = vsel %vm637, 0, %v3293
        %3295 = vst [vmem:[%s3271 + $0x38] sm:$0x1] %v3294
        %vm3296 = vsmask.f32 7938
        %vm3297 = vmand %vm635, %vm3296
        %v3298 = vld [vmem:[%s3271 + $0x4] sm:$0x1]
        %v3299 = vsel %vm3297, 0, %v3298
        %3300 = vst [vmem:[%s3271 + $0x4] sm:$0x1] %v3299
        %v3301 = vld [vmem:[%s3271 + $0xc] sm:$0x1]
        %v3302 = vsel %vm3297, 0, %v3301
        %3303 = vst [vmem:[%s3271 + $0xc] sm:$0x1] %v3302
        %v3304 = vld [vmem:[%s3271 + $0x14] sm:$0x1]
        %v3305 = vsel %vm3297, 0, %v3304
        %3306 = vst [vmem:[%s3271 + $0x14] sm:$0x1] %v3305
        %v3307 = vld [vmem:[%s3271 + $0x1c] sm:$0x1]
        %v3308 = vsel %vm3297, 0, %v3307
        %3309 = vst [vmem:[%s3271 + $0x1c] sm:$0x1] %v3308
        %v3310 = vld [vmem:[%s3271 + $0x24] sm:$0x1]
        %v3311 = vsel %vm3297, 0, %v3310
        %3312 = vst [vmem:[%s3271 + $0x24] sm:$0x1] %v3311
        %v3313 = vld [vmem:[%s3271 + $0x2c] sm:$0x1]
        %v3314 = vsel %vm3297, 0, %v3313
        %3315 = vst [vmem:[%s3271 + $0x2c] sm:$0x1] %v3314
        %v3316 = vld [vmem:[%s3271 + $0x34] sm:$0x1]
        %v3317 = vsel %vm3297, 0, %v3316
        %3318 = vst [vmem:[%s3271 + $0x34] sm:$0x1] %v3317
        %v3319 = vld [vmem:[%s3271 + $0x3c] sm:$0x1]
        %v3320 = vsel %vm3297, 0, %v3319
        %3321 = vst [vmem:[%s3271 + $0x3c] sm:$0x1] %v3320
        %v3322 = vpack.c.bf16 %v3258, %v3258
        %v3323 = vpack.c.bf16 %v3259, %v3259
        %v3324 = vpack.c.bf16 %v3260, %v3260
        %v3325 = vpack.c.bf16 %v3261, %v3261
        %v3326 = vpack.c.bf16 %v3262, %v3262
        %v3327 = vpack.c.bf16 %v3263, %v3263
        %v3328 = vpack.c.bf16 %v3264, %v3264
        %v3329 = vpack.c.bf16 %v3265, %v3265
        %v3338 = vunpack.c.l.b16 %v3322
        %v3339 = vunpack.c.l.b16 %v3323
        %v3340 = vunpack.c.l.b16 %v3324
        %v3341 = vunpack.c.l.b16 %v3325
        %v3342 = vunpack.c.l.b16 %v3326
        %v3343 = vunpack.c.l.b16 %v3327
        %v3344 = vunpack.c.l.b16 %v3328
        %v3345 = vunpack.c.l.b16 %v3329
        %v3346 = vpack.c.b16 %v3338, %v3338
        %v3347 = vpack.c.b16 %v3339, %v3339
        %v3348 = vpack.c.b16 %v3340, %v3340
        %v3349 = vpack.c.b16 %v3341, %v3341
        %v3350 = vpack.c.b16 %v3342, %v3342
        %v3351 = vpack.c.b16 %v3343, %v3343
        %v3352 = vpack.c.b16 %v3344, %v3344
        %v3353 = vpack.c.b16 %v3345, %v3345
        %v3355 = vshrl.u32 %v3346, 16
        %v3357 = vrot.slane %v3355, 7
        %v3358 = vshll.u32 %v3346, 16
        %v3360 = vor.u32 %v3357, %v3358
        %v3361 = vrot.slane %v3357, 4
        %v3363 = vshrl.u32 %v3347, 16
        %v3365 = vrot.slane %v3363, 7
        %v3366 = vshll.u32 %v3347, 16
        %v3368 = vor.u32 %v3365, %v3366
        %v3369 = vrot.slane %v3365, 4
        %v3371 = vshrl.u32 %v3348, 16
        %v3373 = vrot.slane %v3371, 7
        %v3374 = vshll.u32 %v3348, 16
        %v3376 = vor.u32 %v3373, %v3374
        %v3377 = vrot.slane %v3373, 4
        %v3379 = vshrl.u32 %v3349, 16
        %v3381 = vrot.slane %v3379, 7
        %v3382 = vshll.u32 %v3349, 16
        %v3384 = vor.u32 %v3381, %v3382
        %v3385 = vrot.slane %v3381, 4
        %v3387 = vshrl.u32 %v3350, 16
        %v3389 = vrot.slane %v3387, 7
        %v3390 = vshll.u32 %v3350, 16
        %v3392 = vor.u32 %v3389, %v3390
        %v3393 = vrot.slane %v3389, 4
        %v3395 = vshrl.u32 %v3351, 16
        %v3397 = vrot.slane %v3395, 7
        %v3398 = vshll.u32 %v3351, 16
        %v3400 = vor.u32 %v3397, %v3398
        %v3401 = vrot.slane %v3397, 4
        %v3403 = vshrl.u32 %v3352, 16
        %v3405 = vrot.slane %v3403, 7
        %v3406 = vshll.u32 %v3352, 16
        %v3408 = vor.u32 %v3405, %v3406
        %v3409 = vrot.slane %v3405, 4
        %v3411 = vshrl.u32 %v3353, 16
        %v3413 = vrot.slane %v3411, 7
        %v3414 = vshll.u32 %v3353, 16
        %v3416 = vor.u32 %v3413, %v3414
        %v3417 = vrot.slane %v3413, 4
        %vm3434 = vcmask 1043456
        %vm3435 = vmand %vm3434, %vm3296
        %v3436 = vld [vmem:[%s3271] sm:$0xf]
        %v3437 = vsel %vm3435, %v3360, %v3436
        %3438 = vst [vmem:[%s3271] sm:$0xf] %v3437
        %v3439 = vld [vmem:[%s3271 + $0x4] sm:$0x1]
        %v3440 = vsel %vm637, %v3361, %v3439
        %3441 = vst [vmem:[%s3271 + $0x4] sm:$0x1] %v3440
        %v3442 = vld [vmem:[%s3271 + $0x8] sm:$0xf]
        %v3443 = vsel %vm3435, %v3368, %v3442
        %3444 = vst [vmem:[%s3271 + $0x8] sm:$0xf] %v3443
        %v3445 = vld [vmem:[%s3271 + $0xc] sm:$0x1]
        %v3446 = vsel %vm637, %v3369, %v3445
        %3447 = vst [vmem:[%s3271 + $0xc] sm:$0x1] %v3446
        %v3448 = vld [vmem:[%s3271 + $0x10] sm:$0xf]
        %v3449 = vsel %vm3435, %v3376, %v3448
        %3450 = vst [vmem:[%s3271 + $0x10] sm:$0xf] %v3449
        %v3451 = vld [vmem:[%s3271 + $0x14] sm:$0x1]
        %v3452 = vsel %vm637, %v3377, %v3451
        %3453 = vst [vmem:[%s3271 + $0x14] sm:$0x1] %v3452
        %v3454 = vld [vmem:[%s3271 + $0x18] sm:$0xf]
        %v3455 = vsel %vm3435, %v3384, %v3454
        %3456 = vst [vmem:[%s3271 + $0x18] sm:$0xf] %v3455
        %v3457 = vld [vmem:[%s3271 + $0x1c] sm:$0x1]
        %v3458 = vsel %vm637, %v3385, %v3457
        %3459 = vst [vmem:[%s3271 + $0x1c] sm:$0x1] %v3458
        %v3460 = vld [vmem:[%s3271 + $0x20] sm:$0xf]
        %v3461 = vsel %vm3435, %v3392, %v3460
        %3462 = vst [vmem:[%s3271 + $0x20] sm:$0xf] %v3461
        %v3463 = vld [vmem:[%s3271 + $0x24] sm:$0x1]
        %v3464 = vsel %vm637, %v3393, %v3463
        %3465 = vst [vmem:[%s3271 + $0x24] sm:$0x1] %v3464
        %v3466 = vld [vmem:[%s3271 + $0x28] sm:$0xf]
        %v3467 = vsel %vm3435, %v3400, %v3466
        %3468 = vst [vmem:[%s3271 + $0x28] sm:$0xf] %v3467
        %v3469 = vld [vmem:[%s3271 + $0x2c] sm:$0x1]
        %v3470 = vsel %vm637, %v3401, %v3469
        %3471 = vst [vmem:[%s3271 + $0x2c] sm:$0x1] %v3470
        %v3472 = vld [vmem:[%s3271 + $0x30] sm:$0xf]
        %v3473 = vsel %vm3435, %v3408, %v3472
        %3474 = vst [vmem:[%s3271 + $0x30] sm:$0xf] %v3473
        %v3475 = vld [vmem:[%s3271 + $0x34] sm:$0x1]
        %v3476 = vsel %vm637, %v3409, %v3475
        %3477 = vst [vmem:[%s3271 + $0x34] sm:$0x1] %v3476
        %v3478 = vld [vmem:[%s3271 + $0x38] sm:$0xf]
        %v3479 = vsel %vm3435, %v3416, %v3478
        %3480 = vst [vmem:[%s3271 + $0x38] sm:$0xf] %v3479
        %v3481 = vld [vmem:[%s3271 + $0x3c] sm:$0x1]
        %v3482 = vsel %vm637, %v3417, %v3481
        %3483 = vst [vmem:[%s3271 + $0x3c] sm:$0x1] %v3482
        %v3484 = vld [vmem:[#allocation3] sm:$0xf]
        %v3485 = vld [vmem:[#allocation3 + $0x8] sm:$0xf]
        %v3486 = vld [vmem:[#allocation3 + $0x10] sm:$0xf]
        %v3487 = vld [vmem:[#allocation3 + $0x18] sm:$0xf]
        %v3488 = vld [vmem:[#allocation3 + $0x20] sm:$0xf]
        %v3489 = vld [vmem:[#allocation3 + $0x28] sm:$0xf]
        %v3490 = vld [vmem:[#allocation3 + $0x30] sm:$0xf]
        %v3491 = vld [vmem:[#allocation3 + $0x38] sm:$0xf]
        %v3492 = vld [vmem:[#allocation3 + $0x4] sm:$0x1]
        %v3493 = vld [vmem:[#allocation3 + $0xc] sm:$0x1]
        %v3494 = vld [vmem:[#allocation3 + $0x14] sm:$0x1]
        %v3495 = vld [vmem:[#allocation3 + $0x1c] sm:$0x1]
        %v3496 = vld [vmem:[#allocation3 + $0x24] sm:$0x1]
        %v3497 = vld [vmem:[#allocation3 + $0x2c] sm:$0x1]
        %v3498 = vld [vmem:[#allocation3 + $0x34] sm:$0x1]
        %v3499 = vld [vmem:[#allocation3 + $0x3c] sm:$0x1]
        %v3501 = vshrl.u32 %v3484, 16
        %v3503 = vrot.slane %v3501, 4
        %v3504 = vshll.u32 %v3484, 16
        %v3506 = vrot.slane %v3504, 5
        %v3507 = vor.u32 %v3503, %v3506
        %v3508 = vrot.slane %v3507, 4
        %v3510 = vshll.u32 %v3492, 16
        %v3512 = vrot.slane %v3510, 5
        %v3513 = vsel %vm1674, %v3508, %v3512
        %v3515 = vshrl.u32 %v3485, 16
        %v3517 = vrot.slane %v3515, 4
        %v3518 = vshll.u32 %v3485, 16
        %v3520 = vrot.slane %v3518, 5
        %v3521 = vor.u32 %v3517, %v3520
        %v3522 = vrot.slane %v3521, 4
        %v3524 = vshll.u32 %v3493, 16
        %v3526 = vrot.slane %v3524, 5
        %v3527 = vsel %vm1674, %v3522, %v3526
        %v3529 = vshrl.u32 %v3486, 16
        %v3531 = vrot.slane %v3529, 4
        %v3532 = vshll.u32 %v3486, 16
        %v3534 = vrot.slane %v3532, 5
        %v3535 = vor.u32 %v3531, %v3534
        %v3536 = vrot.slane %v3535, 4
        %v3538 = vshll.u32 %v3494, 16
        %v3540 = vrot.slane %v3538, 5
        %v3541 = vsel %vm1674, %v3536, %v3540
        %v3543 = vshrl.u32 %v3487, 16
        %v3545 = vrot.slane %v3543, 4
        %v3546 = vshll.u32 %v3487, 16
        %v3548 = vrot.slane %v3546, 5
        %v3549 = vor.u32 %v3545, %v3548
        %v3550 = vrot.slane %v3549, 4
        %v3552 = vshll.u32 %v3495, 16
        %v3554 = vrot.slane %v3552, 5
        %v3555 = vsel %vm1674, %v3550, %v3554
        %v3557 = vshrl.u32 %v3488, 16
        %v3559 = vrot.slane %v3557, 4
        %v3560 = vshll.u32 %v3488, 16
        %v3562 = vrot.slane %v3560, 5
        %v3563 = vor.u32 %v3559, %v3562
        %v3564 = vrot.slane %v3563, 4
        %v3566 = vshll.u32 %v3496, 16
        %v3568 = vrot.slane %v3566, 5
        %v3569 = vsel %vm1674, %v3564, %v3568
        %v3571 = vshrl.u32 %v3489, 16
        %v3573 = vrot.slane %v3571, 4
        %v3574 = vshll.u32 %v3489, 16
        %v3576 = vrot.slane %v3574, 5
        %v3577 = vor.u32 %v3573, %v3576
        %v3578 = vrot.slane %v3577, 4
        %v3580 = vshll.u32 %v3497, 16
        %v3582 = vrot.slane %v3580, 5
        %v3583 = vsel %vm1674, %v3578, %v3582
        %v3585 = vshrl.u32 %v3490, 16
        %v3587 = vrot.slane %v3585, 4
        %v3588 = vshll.u32 %v3490, 16
        %v3590 = vrot.slane %v3588, 5
        %v3591 = vor.u32 %v3587, %v3590
        %v3592 = vrot.slane %v3591, 4
        %v3594 = vshll.u32 %v3498, 16
        %v3596 = vrot.slane %v3594, 5
        %v3597 = vsel %vm1674, %v3592, %v3596
        %v3599 = vshrl.u32 %v3491, 16
        %v3601 = vrot.slane %v3599, 4
        %v3602 = vshll.u32 %v3491, 16
        %v3604 = vrot.slane %v3602, 5
        %v3605 = vor.u32 %v3601, %v3604
        %v3606 = vrot.slane %v3605, 4
        %v3608 = vshll.u32 %v3499, 16
        %v3610 = vrot.slane %v3608, 5
        %v3611 = vsel %vm1674, %v3606, %v3610
        %v3612 = vld [vmem:[#allocation3] sm:$0xe]
        %v3613 = vld [vmem:[#allocation3 + $0x8] sm:$0xe]
        %v3614 = vld [vmem:[#allocation3 + $0x10] sm:$0xe]
        %v3615 = vld [vmem:[#allocation3 + $0x18] sm:$0xe]
        %v3616 = vld [vmem:[#allocation3 + $0x20] sm:$0xe]
        %v3617 = vld [vmem:[#allocation3 + $0x28] sm:$0xe]
        %v3618 = vld [vmem:[#allocation3 + $0x30] sm:$0xe]
        %v3619 = vld [vmem:[#allocation3 + $0x38] sm:$0xe]
        %vm3636 = vcmask 1042432
        %vm3637 = vcmask 1046532
        %vm3638 = vmor %vm3636, %vm3637
        %v3639 = vrot.slane %v3612, 5
        %v3640 = vrot.slane %v3639, 4
        %v3641 = vrot.slane %v3492, 5
        %v3642 = vsel %vm3638, %v3640, %v3641
        %v3643 = vrot.slane %v3613, 5
        %v3644 = vrot.slane %v3643, 4
        %v3645 = vrot.slane %v3493, 5
        %v3646 = vsel %vm3638, %v3644, %v3645
        %v3647 = vrot.slane %v3614, 5
        %v3648 = vrot.slane %v3647, 4
        %v3649 = vrot.slane %v3494, 5
        %v3650 = vsel %vm3638, %v3648, %v3649
        %v3651 = vrot.slane %v3615, 5
        %v3652 = vrot.slane %v3651, 4
        %v3653 = vrot.slane %v3495, 5
        %v3654 = vsel %vm3638, %v3652, %v3653
        %v3655 = vrot.slane %v3616, 5
        %v3656 = vrot.slane %v3655, 4
        %v3657 = vrot.slane %v3496, 5
        %v3658 = vsel %vm3638, %v3656, %v3657
        %v3659 = vrot.slane %v3617, 5
        %v3660 = vrot.slane %v3659, 4
        %v3661 = vrot.slane %v3497, 5
        %v3662 = vsel %vm3638, %v3660, %v3661
        %v3663 = vrot.slane %v3618, 5
        %v3664 = vrot.slane %v3663, 4
        %v3665 = vrot.slane %v3498, 5
        %v3666 = vsel %vm3638, %v3664, %v3665
        %v3667 = vrot.slane %v3619, 5
        %v3668 = vrot.slane %v3667, 4
        %v3669 = vrot.slane %v3499, 5
        %v3670 = vsel %vm3638, %v3668, %v3669
        %v3679 = vunpack.c.l.b16 %v3484
        %v3680 = vunpack.c.l.b16 %v3485
        %v3681 = vunpack.c.l.b16 %v3486
        %v3682 = vunpack.c.l.b16 %v3487
        %v3683 = vunpack.c.l.b16 %v3488
        %v3684 = vunpack.c.l.b16 %v3489
        %v3685 = vunpack.c.l.b16 %v3490
        %v3686 = vunpack.c.l.b16 %v3491
        %v3687 = vpack.c.b16 %v3680, %v3679
        %v3688 = vpack.c.b16 %v3682, %v3681
        %v3689 = vpack.c.b16 %v3684, %v3683
        %v3690 = vpack.c.b16 %v3686, %v3685
        %v3695 = vunpack.c.l.b16 %v3513
        %v3696 = vunpack.c.l.b16 %v3527
        %v3697 = vunpack.c.l.b16 %v3541
        %v3698 = vunpack.c.l.b16 %v3555
        %v3699 = vunpack.c.l.b16 %v3569
        %v3700 = vunpack.c.l.b16 %v3583
        %v3701 = vunpack.c.l.b16 %v3597
        %v3702 = vunpack.c.l.b16 %v3611
        %v3703 = vpack.c.b16 %v3696, %v3695
        %v3704 = vpack.c.b16 %v3698, %v3697
        %v3705 = vpack.c.b16 %v3700, %v3699
        %v3706 = vpack.c.b16 %v3702, %v3701
        %v3711 = vunpack.c.l.b16 %v3642
        %v3712 = vunpack.c.l.b16 %v3646
        %v3713 = vunpack.c.l.b16 %v3650
        %v3714 = vunpack.c.l.b16 %v3654
        %v3715 = vunpack.c.l.b16 %v3658
        %v3716 = vunpack.c.l.b16 %v3662
        %v3717 = vunpack.c.l.b16 %v3666
        %v3718 = vunpack.c.l.b16 %v3670
        %v3719 = vpack.c.b16 %v3712, %v3711
        %v3720 = vpack.c.b16 %v3714, %v3713
        %v3721 = vpack.c.b16 %v3716, %v3715
        %v3722 = vpack.c.b16 %v3718, %v3717
        %v3727 = vld [vmem:[%s7] sm:$0xf]
        %v3728 = vld [vmem:[%s7 + $0x4] sm:$0xf]
        %v3729 = vld [vmem:[%s7 + $0x8] sm:$0xf]
        %v3730 = vld [vmem:[%s7 + $0xc] sm:$0xf]
        %v3731 = vld [vmem:[%s7 + $0x10] sm:$0xf]
        %v3732 = vld [vmem:[%s7 + $0x14] sm:$0xf]
        %v3733 = vld [vmem:[%s7 + $0x18] sm:$0xf]
        %v3734 = vld [vmem:[%s7 + $0x1c] sm:$0xf]
        %v3735 = vld [vmem:[%s7 + $0x20] sm:$0xf]
        %v3736 = vld [vmem:[%s7 + $0x24] sm:$0xf]
        %v3737 = vld [vmem:[%s7 + $0x28] sm:$0xf]
        %v3738 = vld [vmem:[%s7 + $0x2c] sm:$0xf]
        %v3739 = vld [vmem:[%s7 + $0x30] sm:$0xf]
        %v3740 = vld [vmem:[%s7 + $0x34] sm:$0xf]
        %v3741 = vld [vmem:[%s7 + $0x38] sm:$0xf]
        %v3742 = vld [vmem:[%s7 + $0x3c] sm:$0xf]
        %v3743 = vld [vmem:[%s7 + $0x40] sm:$0xf]
        %v3744 = vld [vmem:[%s7 + $0x44] sm:$0xf]
        %v3745 = vld [vmem:[%s7 + $0x48] sm:$0xf]
        %v3746 = vld [vmem:[%s7 + $0x4c] sm:$0xf]
        %v3747 = vld [vmem:[%s7 + $0x50] sm:$0xf]
        %v3748 = vld [vmem:[%s7 + $0x54] sm:$0xf]
        %v3749 = vld [vmem:[%s7 + $0x58] sm:$0xf]
        %v3750 = vld [vmem:[%s7 + $0x5c] sm:$0xf]
        %v3751 = vld [vmem:[%s7 + $0x60] sm:$0xf]
        %v3752 = vld [vmem:[%s7 + $0x64] sm:$0xf]
        %v3753 = vld [vmem:[%s7 + $0x68] sm:$0xf]
        %v3754 = vld [vmem:[%s7 + $0x6c] sm:$0xf]
        %v3755 = vld [vmem:[%s7 + $0x70] sm:$0xf]
        %v3756 = vld [vmem:[%s7 + $0x74] sm:$0xf]
        %v3757 = vld [vmem:[%s7 + $0x78] sm:$0xf]
        %v3758 = vld [vmem:[%s7 + $0x7c] sm:$0xf]
        %v3759 = vld [vmem:[%s7 + $0x80] sm:$0xf]
        %v3760 = vld [vmem:[%s7 + $0x84] sm:$0xf]
        %v3761 = vld [vmem:[%s7 + $0x88] sm:$0xf]
        %v3762 = vld [vmem:[%s7 + $0x8c] sm:$0xf]
        %v3763 = vld [vmem:[%s7 + $0x90] sm:$0xf]
        %v3764 = vld [vmem:[%s7 + $0x94] sm:$0xf]
        %v3765 = vld [vmem:[%s7 + $0x98] sm:$0xf]
        %v3766 = vld [vmem:[%s7 + $0x9c] sm:$0xf]
        %v3767 = vld [vmem:[%s7 + $0xa0] sm:$0xf]
        %v3768 = vld [vmem:[%s7 + $0xa4] sm:$0xf]
        %v3769 = vld [vmem:[%s7 + $0xa8] sm:$0xf]
        %v3770 = vld [vmem:[%s7 + $0xac] sm:$0xf]
        %v3771 = vld [vmem:[%s7 + $0xb0] sm:$0xf]
        %v3772 = vld [vmem:[%s7 + $0xb4] sm:$0xf]
        %v3773 = vld [vmem:[%s7 + $0xb8] sm:$0xf]
        %v3774 = vld [vmem:[%s7 + $0xbc] sm:$0xf]
        %v3775 = vld [vmem:[%s3271] sm:$0xf]
        %v3776 = vld [vmem:[%s3271 + $0x8] sm:$0xf]
        %v3777 = vld [vmem:[%s3271 + $0x10] sm:$0xf]
        %v3778 = vld [vmem:[%s3271 + $0x18] sm:$0xf]
        %v3779 = vld [vmem:[%s3271 + $0x20] sm:$0xf]
        %v3780 = vld [vmem:[%s3271 + $0x28] sm:$0xf]
        %v3781 = vld [vmem:[%s3271 + $0x30] sm:$0xf]
        %v3782 = vld [vmem:[%s3271 + $0x38] sm:$0xf]
        %v3783 = vld [vmem:[%s3271 + $0x4] sm:$0x1]
        %v3784 = vld [vmem:[%s3271 + $0xc] sm:$0x1]
        %v3785 = vld [vmem:[%s3271 + $0x14] sm:$0x1]
        %v3786 = vld [vmem:[%s3271 + $0x1c] sm:$0x1]
        %v3787 = vld [vmem:[%s3271 + $0x24] sm:$0x1]
        %v3788 = vld [vmem:[%s3271 + $0x2c] sm:$0x1]
        %v3789 = vld [vmem:[%s3271 + $0x34] sm:$0x1]
        %v3790 = vld [vmem:[%s3271 + $0x3c] sm:$0x1]
        %v3792 = vshrl.u32 %v3775, 16
        %v3794 = vrot.slane %v3792, 4
        %v3795 = vshll.u32 %v3775, 16
        %v3797 = vrot.slane %v3795, 5
        %v3798 = vor.u32 %v3794, %v3797
        %v3799 = vrot.slane %v3798, 4
        %v3801 = vshll.u32 %v3783, 16
        %v3803 = vrot.slane %v3801, 5
        %v3804 = vsel %vm1674, %v3799, %v3803
        %v3806 = vshrl.u32 %v3776, 16
        %v3808 = vrot.slane %v3806, 4
        %v3809 = vshll.u32 %v3776, 16
        %v3811 = vrot.slane %v3809, 5
        %v3812 = vor.u32 %v3808, %v3811
        %v3813 = vrot.slane %v3812, 4
        %v3815 = vshll.u32 %v3784, 16
        %v3817 = vrot.slane %v3815, 5
        %v3818 = vsel %vm1674, %v3813, %v3817
        %v3820 = vshrl.u32 %v3777, 16
        %v3822 = vrot.slane %v3820, 4
        %v3823 = vshll.u32 %v3777, 16
        %v3825 = vrot.slane %v3823, 5
        %v3826 = vor.u32 %v3822, %v3825
        %v3827 = vrot.slane %v3826, 4
        %v3829 = vshll.u32 %v3785, 16
        %v3831 = vrot.slane %v3829, 5
        %v3832 = vsel %vm1674, %v3827, %v3831
        %v3834 = vshrl.u32 %v3778, 16
        %v3836 = vrot.slane %v3834, 4
        %v3837 = vshll.u32 %v3778, 16
        %v3839 = vrot.slane %v3837, 5
        %v3840 = vor.u32 %v3836, %v3839
        %v3841 = vrot.slane %v3840, 4
        %v3843 = vshll.u32 %v3786, 16
        %v3845 = vrot.slane %v3843, 5
        %v3846 = vsel %vm1674, %v3841, %v3845
        %v3848 = vshrl.u32 %v3779, 16
        %v3850 = vrot.slane %v3848, 4
        %v3851 = vshll.u32 %v3779, 16
        %v3853 = vrot.slane %v3851, 5
        %v3854 = vor.u32 %v3850, %v3853
        %v3855 = vrot.slane %v3854, 4
        %v3857 = vshll.u32 %v3787, 16
        %v3859 = vrot.slane %v3857, 5
        %v3860 = vsel %vm1674, %v3855, %v3859
        %v3862 = vshrl.u32 %v3780, 16
        %v3864 = vrot.slane %v3862, 4
        %v3865 = vshll.u32 %v3780, 16
        %v3867 = vrot.slane %v3865, 5
        %v3868 = vor.u32 %v3864, %v3867
        %v3869 = vrot.slane %v3868, 4
        %v3871 = vshll.u32 %v3788, 16
        %v3873 = vrot.slane %v3871, 5
        %v3874 = vsel %vm1674, %v3869, %v3873
        %v3876 = vshrl.u32 %v3781, 16
        %v3878 = vrot.slane %v3876, 4
        %v3879 = vshll.u32 %v3781, 16
        %v3881 = vrot.slane %v3879, 5
        %v3882 = vor.u32 %v3878, %v3881
        %v3883 = vrot.slane %v3882, 4
        %v3885 = vshll.u32 %v3789, 16
        %v3887 = vrot.slane %v3885, 5
        %v3888 = vsel %vm1674, %v3883, %v3887
        %v3890 = vshrl.u32 %v3782, 16
        %v3892 = vrot.slane %v3890, 4
        %v3893 = vshll.u32 %v3782, 16
        %v3895 = vrot.slane %v3893, 5
        %v3896 = vor.u32 %v3892, %v3895
        %v3897 = vrot.slane %v3896, 4
        %v3899 = vshll.u32 %v3790, 16
        %v3901 = vrot.slane %v3899, 5
        %v3902 = vsel %vm1674, %v3897, %v3901
        %v3903 = vld [vmem:[%s3271] sm:$0xe]
        %v3904 = vld [vmem:[%s3271 + $0x8] sm:$0xe]
        %v3905 = vld [vmem:[%s3271 + $0x10] sm:$0xe]
        %v3906 = vld [vmem:[%s3271 + $0x18] sm:$0xe]
        %v3907 = vld [vmem:[%s3271 + $0x20] sm:$0xe]
        %v3908 = vld [vmem:[%s3271 + $0x28] sm:$0xe]
        %v3909 = vld [vmem:[%s3271 + $0x30] sm:$0xe]
        %v3910 = vld [vmem:[%s3271 + $0x38] sm:$0xe]
        %v3927 = vrot.slane %v3903, 5
        %v3928 = vrot.slane %v3927, 4
        %v3929 = vrot.slane %v3783, 5
        %v3930 = vsel %vm3638, %v3928, %v3929
        %v3931 = vrot.slane %v3904, 5
        %v3932 = vrot.slane %v3931, 4
        %v3933 = vrot.slane %v3784, 5
        %v3934 = vsel %vm3638, %v3932, %v3933
        %v3935 = vrot.slane %v3905, 5
        %v3936 = vrot.slane %v3935, 4
        %v3937 = vrot.slane %v3785, 5
        %v3938 = vsel %vm3638, %v3936, %v3937
        %v3939 = vrot.slane %v3906, 5
        %v3940 = vrot.slane %v3939, 4
        %v3941 = vrot.slane %v3786, 5
        %v3942 = vsel %vm3638, %v3940, %v3941
        %v3943 = vrot.slane %v3907, 5
        %v3944 = vrot.slane %v3943, 4
        %v3945 = vrot.slane %v3787, 5
        %v3946 = vsel %vm3638, %v3944, %v3945
        %v3947 = vrot.slane %v3908, 5
        %v3948 = vrot.slane %v3947, 4
        %v3949 = vrot.slane %v3788, 5
        %v3950 = vsel %vm3638, %v3948, %v3949
        %v3951 = vrot.slane %v3909, 5
        %v3952 = vrot.slane %v3951, 4
        %v3953 = vrot.slane %v3789, 5
        %v3954 = vsel %vm3638, %v3952, %v3953
        %v3955 = vrot.slane %v3910, 5
        %v3956 = vrot.slane %v3955, 4
        %v3957 = vrot.slane %v3790, 5
        %v3958 = vsel %vm3638, %v3956, %v3957
        %v3967 = vunpack.c.l.b16 %v3775
        %v3968 = vunpack.c.l.b16 %v3776
        %v3969 = vunpack.c.l.b16 %v3777
        %v3970 = vunpack.c.l.b16 %v3778
        %v3971 = vunpack.c.l.b16 %v3779
        %v3972 = vunpack.c.l.b16 %v3780
        %v3973 = vunpack.c.l.b16 %v3781
        %v3974 = vunpack.c.l.b16 %v3782
        %v3975 = vpack.c.b16 %v3968, %v3967
        %v3976 = vpack.c.b16 %v3970, %v3969
        %v3977 = vpack.c.b16 %v3972, %v3971
        %v3978 = vpack.c.b16 %v3974, %v3973
        %v3983 = vunpack.c.l.b16 %v3804
        %v3984 = vunpack.c.l.b16 %v3818
        %v3985 = vunpack.c.l.b16 %v3832
        %v3986 = vunpack.c.l.b16 %v3846
        %v3987 = vunpack.c.l.b16 %v3860
        %v3988 = vunpack.c.l.b16 %v3874
        %v3989 = vunpack.c.l.b16 %v3888
        %v3990 = vunpack.c.l.b16 %v3902
        %v3991 = vpack.c.b16 %v3984, %v3983
        %v3992 = vpack.c.b16 %v3986, %v3985
        %v3993 = vpack.c.b16 %v3988, %v3987
        %v3994 = vpack.c.b16 %v3990, %v3989
        %v3999 = vunpack.c.l.b16 %v3930
        %v4000 = vunpack.c.l.b16 %v3934
        %v4001 = vunpack.c.l.b16 %v3938
        %v4002 = vunpack.c.l.b16 %v3942
        %v4003 = vunpack.c.l.b16 %v3946
        %v4004 = vunpack.c.l.b16 %v3950
        %v4005 = vunpack.c.l.b16 %v3954
        %v4006 = vunpack.c.l.b16 %v3958
        %v4007 = vpack.c.b16 %v4000, %v3999
        %v4008 = vpack.c.b16 %v4002, %v4001
        %v4009 = vpack.c.b16 %v4004, %v4003
        %v4010 = vpack.c.b16 %v4006, %v4005
        %s4015 = scalar_lea.vmem %s7, 192
        %v4016 = vld [vmem:[%s4015] sm:$0xf]
        %v4017 = vld [vmem:[%s4015 + $0x4] sm:$0xf]
        %v4018 = vld [vmem:[%s4015 + $0x8] sm:$0xf]
        %v4019 = vld [vmem:[%s4015 + $0xc] sm:$0xf]
        %v4020 = vld [vmem:[%s4015 + $0x10] sm:$0xf]
        %v4021 = vld [vmem:[%s4015 + $0x14] sm:$0xf]
        %v4022 = vld [vmem:[%s4015 + $0x18] sm:$0xf]
        %v4023 = vld [vmem:[%s4015 + $0x1c] sm:$0xf]
        %v4024 = vld [vmem:[%s4015 + $0x20] sm:$0xf]
        %v4025 = vld [vmem:[%s4015 + $0x24] sm:$0xf]
        %v4026 = vld [vmem:[%s4015 + $0x28] sm:$0xf]
        %v4027 = vld [vmem:[%s4015 + $0x2c] sm:$0xf]
        %v4028 = vld [vmem:[%s4015 + $0x30] sm:$0xf]
        %v4029 = vld [vmem:[%s4015 + $0x34] sm:$0xf]
        %v4030 = vld [vmem:[%s4015 + $0x38] sm:$0xf]
        %v4031 = vld [vmem:[%s4015 + $0x3c] sm:$0xf]
        %v4032 = vld [vmem:[%s4015 + $0x40] sm:$0xf]
        %v4033 = vld [vmem:[%s4015 + $0x44] sm:$0xf]
        %v4034 = vld [vmem:[%s4015 + $0x48] sm:$0xf]
        %v4035 = vld [vmem:[%s4015 + $0x4c] sm:$0xf]
        %v4036 = vld [vmem:[%s4015 + $0x50] sm:$0xf]
        %v4037 = vld [vmem:[%s4015 + $0x54] sm:$0xf]
        %v4038 = vld [vmem:[%s4015 + $0x58] sm:$0xf]
        %v4039 = vld [vmem:[%s4015 + $0x5c] sm:$0xf]
        %v4040 = vld [vmem:[%s4015 + $0x60] sm:$0xf]
        %v4041 = vld [vmem:[%s4015 + $0x64] sm:$0xf]
        %v4042 = vld [vmem:[%s4015 + $0x68] sm:$0xf]
        %v4043 = vld [vmem:[%s4015 + $0x6c] sm:$0xf]
        %v4044 = vld [vmem:[%s4015 + $0x70] sm:$0xf]
        %v4045 = vld [vmem:[%s4015 + $0x74] sm:$0xf]
        %v4046 = vld [vmem:[%s4015 + $0x78] sm:$0xf]
        %v4047 = vld [vmem:[%s4015 + $0x7c] sm:$0xf]
        %v4048 = vld [vmem:[%s4015 + $0x80] sm:$0xf]
        %v4049 = vld [vmem:[%s4015 + $0x84] sm:$0xf]
        %v4050 = vld [vmem:[%s4015 + $0x88] sm:$0xf]
        %v4051 = vld [vmem:[%s4015 + $0x8c] sm:$0xf]
        %v4052 = vld [vmem:[%s4015 + $0x90] sm:$0xf]
        %v4053 = vld [vmem:[%s4015 + $0x94] sm:$0xf]
        %v4054 = vld [vmem:[%s4015 + $0x98] sm:$0xf]
        %v4055 = vld [vmem:[%s4015 + $0x9c] sm:$0xf]
        %v4056 = vld [vmem:[%s4015 + $0xa0] sm:$0xf]
        %v4057 = vld [vmem:[%s4015 + $0xa4] sm:$0xf]
        %v4058 = vld [vmem:[%s4015 + $0xa8] sm:$0xf]
        %v4059 = vld [vmem:[%s4015 + $0xac] sm:$0xf]
        %v4060 = vld [vmem:[%s4015 + $0xb0] sm:$0xf]
        %v4061 = vld [vmem:[%s4015 + $0xb4] sm:$0xf]
        %v4062 = vld [vmem:[%s4015 + $0xb8] sm:$0xf]
        %v4063 = vld [vmem:[%s4015 + $0xbc] sm:$0xf]
        %v4112 = vunpack.c.l.b16 %v4016
        %v4113 = vunpack.c.l.b16 %v4017
        %v4114 = vunpack.c.l.b16 %v4018
        %v4115 = vunpack.c.l.b16 %v4019
        %v4116 = vunpack.c.l.b16 %v4020
        %v4117 = vunpack.c.l.b16 %v4021
        %v4118 = vunpack.c.l.b16 %v4022
        %v4119 = vunpack.c.l.b16 %v4023
        %v4120 = vunpack.c.l.b16 %v4024
        %v4121 = vunpack.c.l.b16 %v4025
        %v4122 = vunpack.c.l.b16 %v4026
        %v4123 = vunpack.c.l.b16 %v4027
        %v4124 = vunpack.c.l.b16 %v4028
        %v4125 = vunpack.c.l.b16 %v4029
        %v4126 = vunpack.c.l.b16 %v4030
        %v4127 = vunpack.c.l.b16 %v4031
        %v4128 = vunpack.c.l.b16 %v4032
        %v4129 = vunpack.c.l.b16 %v4033
        %v4130 = vunpack.c.l.b16 %v4034
        %v4131 = vunpack.c.l.b16 %v4035
        %v4132 = vunpack.c.l.b16 %v4036
        %v4133 = vunpack.c.l.b16 %v4037
        %v4134 = vunpack.c.l.b16 %v4038
        %v4135 = vunpack.c.l.b16 %v4039
        %v4136 = vunpack.c.l.b16 %v4040
        %v4137 = vunpack.c.l.b16 %v4041
        %v4138 = vunpack.c.l.b16 %v4042
        %v4139 = vunpack.c.l.b16 %v4043
        %v4140 = vunpack.c.l.b16 %v4044
        %v4141 = vunpack.c.l.b16 %v4045
        %v4142 = vunpack.c.l.b16 %v4046
        %v4143 = vunpack.c.l.b16 %v4047
        %v4144 = vunpack.c.l.b16 %v4048
        %v4145 = vunpack.c.l.b16 %v4049
        %v4146 = vunpack.c.l.b16 %v4050
        %v4147 = vunpack.c.l.b16 %v4051
        %v4148 = vunpack.c.l.b16 %v4052
        %v4149 = vunpack.c.l.b16 %v4053
        %v4150 = vunpack.c.l.b16 %v4054
        %v4151 = vunpack.c.l.b16 %v4055
        %v4152 = vunpack.c.l.b16 %v4056
        %v4153 = vunpack.c.l.b16 %v4057
        %v4154 = vunpack.c.l.b16 %v4058
        %v4155 = vunpack.c.l.b16 %v4059
        %v4156 = vunpack.c.l.b16 %v4060
        %v4157 = vunpack.c.l.b16 %v4061
        %v4158 = vunpack.c.l.b16 %v4062
        %v4159 = vunpack.c.l.b16 %v4063
        %v4160 = vpack.c.b16 %v4113, %v4112
        %v4161 = vpack.c.b16 %v4115, %v4114
        %v4162 = vpack.c.b16 %v4117, %v4116
        %v4163 = vpack.c.b16 %v4119, %v4118
        %v4164 = vpack.c.b16 %v4121, %v4120
        %v4165 = vpack.c.b16 %v4123, %v4122
        %v4166 = vpack.c.b16 %v4125, %v4124
        %v4167 = vpack.c.b16 %v4127, %v4126
        %v4168 = vpack.c.b16 %v4129, %v4128
        %v4169 = vpack.c.b16 %v4131, %v4130
        %v4170 = vpack.c.b16 %v4133, %v4132
        %v4171 = vpack.c.b16 %v4135, %v4134
        %v4172 = vpack.c.b16 %v4137, %v4136
        %v4173 = vpack.c.b16 %v4139, %v4138
        %v4174 = vpack.c.b16 %v4141, %v4140
        %v4175 = vpack.c.b16 %v4143, %v4142
        %v4176 = vpack.c.b16 %v4145, %v4144
        %v4177 = vpack.c.b16 %v4147, %v4146
        %v4178 = vpack.c.b16 %v4149, %v4148
        %v4179 = vpack.c.b16 %v4151, %v4150
        %v4180 = vpack.c.b16 %v4153, %v4152
        %v4181 = vpack.c.b16 %v4155, %v4154
        %v4182 = vpack.c.b16 %v4157, %v4156
        %v4183 = vpack.c.b16 %v4159, %v4158
        %4208 = vmatprep.subr.bf16.mxu0 0
        %4209 = vmatpush1.bf16.msra.mxu0 %v4167
        %4210 = vmatprep.subr.bf16.mxu0 0
        %4211 = vmatpush1.bf16.msra.mxu0 %v4166
        %4212 = vmatprep.subr.bf16.mxu0 0
        %4213 = vmatpush1.bf16.msra.mxu0 %v4165
        %4214 = vmatprep.subr.bf16.mxu0 0
        %4215 = vmatpush1.bf16.msra.mxu0 %v4164
        %4216 = vmatprep.subr.bf16.mxu0 0
        %4217 = vmatpush1.bf16.msra.mxu0 %v4163
        %4218 = vmatprep.subr.bf16.mxu0 0
        %4219 = vmatpush1.bf16.msra.mxu0 %v4162
        %4220 = vmatprep.subr.bf16.mxu0 0
        %4221 = vmatpush1.bf16.msra.mxu0 %v4161
        %4222 = vmatprep.subr.bf16.mxu0 0
        %4223 = vmatpush1.bf16.msra.mxu0 %v4160
        %4224 = vmatprep.subr.bf16.mxu0 0
        %4225 = vmatpush2.bf16.msra.mxu0 %v4175
        %4226 = vmatprep.subr.bf16.mxu0 0
        %4227 = vmatpush2.bf16.msra.mxu0 %v4174
        %4228 = vmatprep.subr.bf16.mxu0 0
        %4229 = vmatpush2.bf16.msra.mxu0 %v4173
        %4230 = vmatprep.subr.bf16.mxu0 0
        %4231 = vmatpush2.bf16.msra.mxu0 %v4172
        %4232 = vmatprep.subr.bf16.mxu0 0
        %4233 = vmatpush2.bf16.msra.mxu0 %v4171
        %4234 = vmatprep.subr.bf16.mxu0 0
        %4235 = vmatpush2.bf16.msra.mxu0 %v4170
        %4236 = vmatprep.subr.bf16.mxu0 0
        %4237 = vmatpush2.bf16.msra.mxu0 %v4169
        %4238 = vmatprep.subr.bf16.mxu0 0
        %4239 = vmatpush2.bf16.msra.mxu0 %v4168
        %4240 = vmatprep.mubr.bf16.mxu0 %v3991
        %4241 = vmatmul.mubr.bf16.gmra.mxu0 %v3975
        %v4242 = vpop.f32.mrf.mxu0
        %v4243 = vadd.f32 0.0, %v4242
        %v4244 = vpop.f32.mrf.mxu0
        %v4245 = vpop.f32.mrf.mxu0
        %v4246 = vadd.f32 0.0, %v4245
        %v4247 = vpop.f32.mrf.mxu0
        %4248 = vmatprep.mubr.bf16.mxu0 %v3992
        %4249 = vmatmul.mubr.bf16.gmra.mxu0 %v3976
        %v4250 = vpop.f32.mrf.mxu0
        %v4251 = vadd.f32 0.0, %v4250
        %v4252 = vpop.f32.mrf.mxu0
        %v4253 = vpop.f32.mrf.mxu0
        %v4254 = vadd.f32 0.0, %v4253
        %v4255 = vpop.f32.mrf.mxu0
        %4256 = vmatprep.mubr.bf16.mxu0 %v3993
        %4257 = vmatmul.mubr.bf16.gmra.mxu0 %v3977
        %v4258 = vpop.f32.mrf.mxu0
        %v4259 = vadd.f32 0.0, %v4258
        %v4260 = vpop.f32.mrf.mxu0
        %v4261 = vpop.f32.mrf.mxu0
        %v4262 = vadd.f32 0.0, %v4261
        %v4263 = vpop.f32.mrf.mxu0
        %4264 = vmatprep.mubr.bf16.mxu0 %v3994
        %4265 = vmatmul.mubr.bf16.gmra.mxu0 %v3978
        %v4266 = vpop.f32.mrf.mxu0
        %v4267 = vadd.f32 0.0, %v4266
        %v4268 = vpop.f32.mrf.mxu0
        %v4269 = vpop.f32.mrf.mxu0
        %v4270 = vadd.f32 0.0, %v4269
        %v4271 = vpop.f32.mrf.mxu0
        %4272 = vdwg.mxu0
        %4273 = vmatprep.subr.bf16.mxu0 0
        %4274 = vmatpush1.bf16.msra.mxu0 %v4183
        %4275 = vmatprep.subr.bf16.mxu0 0
        %4276 = vmatpush1.bf16.msra.mxu0 %v4182
        %4277 = vmatprep.subr.bf16.mxu0 0
        %4278 = vmatpush1.bf16.msra.mxu0 %v4181
        %4279 = vmatprep.subr.bf16.mxu0 0
        %4280 = vmatpush1.bf16.msra.mxu0 %v4180
        %4281 = vmatprep.subr.bf16.mxu0 0
        %4282 = vmatpush1.bf16.msra.mxu0 %v4179
        %4283 = vmatprep.subr.bf16.mxu0 0
        %4284 = vmatpush1.bf16.msra.mxu0 %v4178
        %4285 = vmatprep.subr.bf16.mxu0 0
        %4286 = vmatpush1.bf16.msra.mxu0 %v4177
        %4287 = vmatprep.subr.bf16.mxu0 0
        %4288 = vmatpush1.bf16.msra.mxu0 %v4176
        %4289 = vmatprep.subr.bf16.mxu0 0
        %4290 = vmatpush2.bf16.msra.mxu0 0
        %4291 = vmatprep.subr.bf16.mxu0 0
        %4292 = vmatpush2.bf16.msra.mxu0 0
        %4293 = vmatprep.subr.bf16.mxu0 0
        %4294 = vmatpush2.bf16.msra.mxu0 0
        %4295 = vmatprep.subr.bf16.mxu0 0
        %4296 = vmatpush2.bf16.msra.mxu0 0
        %4297 = vmatprep.subr.bf16.mxu0 0
        %4298 = vmatpush2.bf16.msra.mxu0 0
        %4299 = vmatprep.subr.bf16.mxu0 0
        %4300 = vmatpush2.bf16.msra.mxu0 0
        %4301 = vmatprep.subr.bf16.mxu0 0
        %4302 = vmatpush2.bf16.msra.mxu0 0
        %4303 = vmatprep.subr.bf16.mxu0 0
        %4304 = vmatpush2.bf16.msra.mxu0 0
        %4305 = vmatprep.mubr.bf16.mxu0 0
        %4306 = vmatmul.mubr.bf16.gmra.mxu0 %v4007
        %v4307 = vpop.f32.mrf.mxu0
        %v4308 = vadd.f32 %v4243, %v4307
        %v4309 = vpop.f32.mrf.mxu0
        %v4310 = vpop.f32.mrf.mxu0
        %v4311 = vadd.f32 %v4246, %v4310
        %v4312 = vpop.f32.mrf.mxu0
        %4313 = vmatprep.mubr.bf16.mxu0 0
        %4314 = vmatmul.mubr.bf16.gmra.mxu0 %v4008
        %v4315 = vpop.f32.mrf.mxu0
        %v4316 = vadd.f32 %v4251, %v4315
        %v4317 = vpop.f32.mrf.mxu0
        %v4318 = vpop.f32.mrf.mxu0
        %v4319 = vadd.f32 %v4254, %v4318
        %v4320 = vpop.f32.mrf.mxu0
        %4321 = vmatprep.mubr.bf16.mxu0 0
        %4322 = vmatmul.mubr.bf16.gmra.mxu0 %v4009
        %v4323 = vpop.f32.mrf.mxu0
        %v4324 = vadd.f32 %v4259, %v4323
        %v4325 = vpop.f32.mrf.mxu0
        %v4326 = vpop.f32.mrf.mxu0
        %v4327 = vadd.f32 %v4262, %v4326
        %v4328 = vpop.f32.mrf.mxu0
        %4329 = vmatprep.mubr.bf16.mxu0 0
        %4330 = vmatmul.mubr.bf16.gmra.mxu0 %v4010
        %v4331 = vpop.f32.mrf.mxu0
        %v4332 = vadd.f32 %v4267, %v4331
        %v4333 = vpop.f32.mrf.mxu0
        %v4334 = vpop.f32.mrf.mxu0
        %v4335 = vadd.f32 %v4270, %v4334
        %v4336 = vpop.f32.mrf.mxu0
        %4337 = vdwg.mxu0
        %v4386 = vunpack.c.l.b16 %v3727
        %v4387 = vunpack.c.l.b16 %v3728
        %v4388 = vunpack.c.l.b16 %v3729
        %v4389 = vunpack.c.l.b16 %v3730
        %v4390 = vunpack.c.l.b16 %v3731
        %v4391 = vunpack.c.l.b16 %v3732
        %v4392 = vunpack.c.l.b16 %v3733
        %v4393 = vunpack.c.l.b16 %v3734
        %v4394 = vunpack.c.l.b16 %v3735
        %v4395 = vunpack.c.l.b16 %v3736
        %v4396 = vunpack.c.l.b16 %v3737
        %v4397 = vunpack.c.l.b16 %v3738
        %v4398 = vunpack.c.l.b16 %v3739
        %v4399 = vunpack.c.l.b16 %v3740
        %v4400 = vunpack.c.l.b16 %v3741
        %v4401 = vunpack.c.l.b16 %v3742
        %v4402 = vunpack.c.l.b16 %v3743
        %v4403 = vunpack.c.l.b16 %v3744
        %v4404 = vunpack.c.l.b16 %v3745
        %v4405 = vunpack.c.l.b16 %v3746
        %v4406 = vunpack.c.l.b16 %v3747
        %v4407 = vunpack.c.l.b16 %v3748
        %v4408 = vunpack.c.l.b16 %v3749
        %v4409 = vunpack.c.l.b16 %v3750
        %v4410 = vunpack.c.l.b16 %v3751
        %v4411 = vunpack.c.l.b16 %v3752
        %v4412 = vunpack.c.l.b16 %v3753
        %v4413 = vunpack.c.l.b16 %v3754
        %v4414 = vunpack.c.l.b16 %v3755
        %v4415 = vunpack.c.l.b16 %v3756
        %v4416 = vunpack.c.l.b16 %v3757
        %v4417 = vunpack.c.l.b16 %v3758
        %v4418 = vunpack.c.l.b16 %v3759
        %v4419 = vunpack.c.l.b16 %v3760
        %v4420 = vunpack.c.l.b16 %v3761
        %v4421 = vunpack.c.l.b16 %v3762
        %v4422 = vunpack.c.l.b16 %v3763
        %v4423 = vunpack.c.l.b16 %v3764
        %v4424 = vunpack.c.l.b16 %v3765
        %v4425 = vunpack.c.l.b16 %v3766
        %v4426 = vunpack.c.l.b16 %v3767
        %v4427 = vunpack.c.l.b16 %v3768
        %v4428 = vunpack.c.l.b16 %v3769
        %v4429 = vunpack.c.l.b16 %v3770
        %v4430 = vunpack.c.l.b16 %v3771
        %v4431 = vunpack.c.l.b16 %v3772
        %v4432 = vunpack.c.l.b16 %v3773
        %v4433 = vunpack.c.l.b16 %v3774
        %v4434 = vpack.c.b16 %v4387, %v4386
        %v4435 = vpack.c.b16 %v4389, %v4388
        %v4436 = vpack.c.b16 %v4391, %v4390
        %v4437 = vpack.c.b16 %v4393, %v4392
        %v4438 = vpack.c.b16 %v4395, %v4394
        %v4439 = vpack.c.b16 %v4397, %v4396
        %v4440 = vpack.c.b16 %v4399, %v4398
        %v4441 = vpack.c.b16 %v4401, %v4400
        %v4442 = vpack.c.b16 %v4403, %v4402
        %v4443 = vpack.c.b16 %v4405, %v4404
        %v4444 = vpack.c.b16 %v4407, %v4406
        %v4445 = vpack.c.b16 %v4409, %v4408
        %v4446 = vpack.c.b16 %v4411, %v4410
        %v4447 = vpack.c.b16 %v4413, %v4412
        %v4448 = vpack.c.b16 %v4415, %v4414
        %v4449 = vpack.c.b16 %v4417, %v4416
        %v4450 = vpack.c.b16 %v4419, %v4418
        %v4451 = vpack.c.b16 %v4421, %v4420
        %v4452 = vpack.c.b16 %v4423, %v4422
        %v4453 = vpack.c.b16 %v4425, %v4424
        %v4454 = vpack.c.b16 %v4427, %v4426
        %v4455 = vpack.c.b16 %v4429, %v4428
        %v4456 = vpack.c.b16 %v4431, %v4430
        %v4457 = vpack.c.b16 %v4433, %v4432
        %4482 = vmatprep.subr.bf16.mxu0 0
        %4483 = vmatpush1.bf16.msra.mxu0 %v4441
        %4484 = vmatprep.subr.bf16.mxu0 0
        %4485 = vmatpush1.bf16.msra.mxu0 %v4440
        %4486 = vmatprep.subr.bf16.mxu0 0
        %4487 = vmatpush1.bf16.msra.mxu0 %v4439
        %4488 = vmatprep.subr.bf16.mxu0 0
        %4489 = vmatpush1.bf16.msra.mxu0 %v4438
        %4490 = vmatprep.subr.bf16.mxu0 0
        %4491 = vmatpush1.bf16.msra.mxu0 %v4437
        %4492 = vmatprep.subr.bf16.mxu0 0
        %4493 = vmatpush1.bf16.msra.mxu0 %v4436
        %4494 = vmatprep.subr.bf16.mxu0 0
        %4495 = vmatpush1.bf16.msra.mxu0 %v4435
        %4496 = vmatprep.subr.bf16.mxu0 0
        %4497 = vmatpush1.bf16.msra.mxu0 %v4434
        %4498 = vmatprep.subr.bf16.mxu0 0
        %4499 = vmatpush2.bf16.msra.mxu0 %v4449
        %4500 = vmatprep.subr.bf16.mxu0 0
        %4501 = vmatpush2.bf16.msra.mxu0 %v4448
        %4502 = vmatprep.subr.bf16.mxu0 0
        %4503 = vmatpush2.bf16.msra.mxu0 %v4447
        %4504 = vmatprep.subr.bf16.mxu0 0
        %4505 = vmatpush2.bf16.msra.mxu0 %v4446
        %4506 = vmatprep.subr.bf16.mxu0 0
        %4507 = vmatpush2.bf16.msra.mxu0 %v4445
        %4508 = vmatprep.subr.bf16.mxu0 0
        %4509 = vmatpush2.bf16.msra.mxu0 %v4444
        %4510 = vmatprep.subr.bf16.mxu0 0
        %4511 = vmatpush2.bf16.msra.mxu0 %v4443
        %4512 = vmatprep.subr.bf16.mxu0 0
        %4513 = vmatpush2.bf16.msra.mxu0 %v4442
        %4514 = vmatprep.mubr.bf16.mxu0 %v3703
        %4515 = vmatmul.mubr.bf16.gmra.mxu0 %v3687
        %v4516 = vpop.f32.mrf.mxu0
        %v4517 = vadd.f32 %v4308, %v4516
        %v4518 = vpop.f32.mrf.mxu0
        %v4519 = vpop.f32.mrf.mxu0
        %v4520 = vadd.f32 %v4311, %v4519
        %v4521 = vpop.f32.mrf.mxu0
        %4522 = vmatprep.mubr.bf16.mxu0 %v3704
        %4523 = vmatmul.mubr.bf16.gmra.mxu0 %v3688
        %v4524 = vpop.f32.mrf.mxu0
        %v4525 = vadd.f32 %v4316, %v4524
        %v4526 = vpop.f32.mrf.mxu0
        %v4527 = vpop.f32.mrf.mxu0
        %v4528 = vadd.f32 %v4319, %v4527
        %v4529 = vpop.f32.mrf.mxu0
        %4530 = vmatprep.mubr.bf16.mxu0 %v3705
        %4531 = vmatmul.mubr.bf16.gmra.mxu0 %v3689
        %v4532 = vpop.f32.mrf.mxu0
        %v4533 = vadd.f32 %v4324, %v4532
        %v4534 = vpop.f32.mrf.mxu0
        %v4535 = vpop.f32.mrf.mxu0
        %v4536 = vadd.f32 %v4327, %v4535
        %v4537 = vpop.f32.mrf.mxu0
        %4538 = vmatprep.mubr.bf16.mxu0 %v3706
        %4539 = vmatmul.mubr.bf16.gmra.mxu0 %v3690
        %v4540 = vpop.f32.mrf.mxu0
        %v4541 = vadd.f32 %v4332, %v4540
        %v4542 = vpop.f32.mrf.mxu0
        %v4543 = vpop.f32.mrf.mxu0
        %v4544 = vadd.f32 %v4335, %v4543
        %v4545 = vpop.f32.mrf.mxu0
        %4546 = vdwg.mxu0
        %4547 = vmatprep.subr.bf16.mxu0 0
        %4548 = vmatpush1.bf16.msra.mxu0 %v4457
        %4549 = vmatprep.subr.bf16.mxu0 0
        %4550 = vmatpush1.bf16.msra.mxu0 %v4456
        %4551 = vmatprep.subr.bf16.mxu0 0
        %4552 = vmatpush1.bf16.msra.mxu0 %v4455
        %4553 = vmatprep.subr.bf16.mxu0 0
        %4554 = vmatpush1.bf16.msra.mxu0 %v4454
        %4555 = vmatprep.subr.bf16.mxu0 0
        %4556 = vmatpush1.bf16.msra.mxu0 %v4453
        %4557 = vmatprep.subr.bf16.mxu0 0
        %4558 = vmatpush1.bf16.msra.mxu0 %v4452
        %4559 = vmatprep.subr.bf16.mxu0 0
        %4560 = vmatpush1.bf16.msra.mxu0 %v4451
        %4561 = vmatprep.subr.bf16.mxu0 0
        %4562 = vmatpush1.bf16.msra.mxu0 %v4450
        %4563 = vmatprep.subr.bf16.mxu0 0
        %4564 = vmatpush2.bf16.msra.mxu0 0
        %4565 = vmatprep.subr.bf16.mxu0 0
        %4566 = vmatpush2.bf16.msra.mxu0 0
        %4567 = vmatprep.subr.bf16.mxu0 0
        %4568 = vmatpush2.bf16.msra.mxu0 0
        %4569 = vmatprep.subr.bf16.mxu0 0
        %4570 = vmatpush2.bf16.msra.mxu0 0
        %4571 = vmatprep.subr.bf16.mxu0 0
        %4572 = vmatpush2.bf16.msra.mxu0 0
        %4573 = vmatprep.subr.bf16.mxu0 0
        %4574 = vmatpush2.bf16.msra.mxu0 0
        %4575 = vmatprep.subr.bf16.mxu0 0
        %4576 = vmatpush2.bf16.msra.mxu0 0
        %4577 = vmatprep.subr.bf16.mxu0 0
        %4578 = vmatpush2.bf16.msra.mxu0 0
        %4579 = vmatprep.mubr.bf16.mxu0 0
        %4580 = vmatmul.mubr.bf16.gmra.mxu0 %v3719
        %v4581 = vpop.f32.mrf.mxu0
        %v4582 = vadd.f32 %v4517, %v4581
        %v4583 = vpop.f32.mrf.mxu0
        %v4584 = vpop.f32.mrf.mxu0
        %v4585 = vadd.f32 %v4520, %v4584
        %v4586 = vpop.f32.mrf.mxu0
        %4587 = vmatprep.mubr.bf16.mxu0 0
        %4588 = vmatmul.mubr.bf16.gmra.mxu0 %v3720
        %v4589 = vpop.f32.mrf.mxu0
        %v4590 = vadd.f32 %v4525, %v4589
        %v4591 = vpop.f32.mrf.mxu0
        %v4592 = vpop.f32.mrf.mxu0
        %v4593 = vadd.f32 %v4528, %v4592
        %v4594 = vpop.f32.mrf.mxu0
        %4595 = vmatprep.mubr.bf16.mxu0 0
        %4596 = vmatmul.mubr.bf16.gmra.mxu0 %v3721
        %v4597 = vpop.f32.mrf.mxu0
        %v4598 = vadd.f32 %v4533, %v4597
        %v4599 = vpop.f32.mrf.mxu0
        %v4600 = vpop.f32.mrf.mxu0
        %v4601 = vadd.f32 %v4536, %v4600
        %v4602 = vpop.f32.mrf.mxu0
        %4603 = vmatprep.mubr.bf16.mxu0 0
        %4604 = vmatmul.mubr.bf16.gmra.mxu0 %v3722
        %v4605 = vpop.f32.mrf.mxu0
        %v4606 = vadd.f32 %v4541, %v4605
        %v4607 = vpop.f32.mrf.mxu0
        %v4608 = vpop.f32.mrf.mxu0
        %v4609 = vadd.f32 %v4544, %v4608
        %v4610 = vpop.f32.mrf.mxu0
        %4611 = vdwg.mxu0
        %s4612 = scalar_lea.vmem [#allocation3], 16
        %v4613 = vld [vmem:[%s4612] sm:$0xf]
        %v4614 = vld [vmem:[%s4612 + $0x8] sm:$0xf]
        %v4615 = vld [vmem:[%s4612 + $0x10] sm:$0xf]
        %v4616 = vld [vmem:[%s4612 + $0x18] sm:$0xf]
        %v4617 = vld [vmem:[%s4612 + $0x20] sm:$0xf]
        %v4618 = vld [vmem:[%s4612 + $0x28] sm:$0xf]
        %v4619 = vld [vmem:[%s4612 + $0x30] sm:$0xf]
        %v4620 = vld [vmem:[%s4612 + $0x38] sm:$0xf]
        %v4621 = vld [vmem:[%s4612 + $0x4] sm:$0x1]
        %v4622 = vld [vmem:[%s4612 + $0xc] sm:$0x1]
        %v4623 = vld [vmem:[%s4612 + $0x14] sm:$0x1]
        %v4624 = vld [vmem:[%s4612 + $0x1c] sm:$0x1]
        %v4625 = vld [vmem:[%s4612 + $0x24] sm:$0x1]
        %v4626 = vld [vmem:[%s4612 + $0x2c] sm:$0x1]
        %v4627 = vld [vmem:[%s4612 + $0x34] sm:$0x1]
        %v4628 = vld [vmem:[%s4612 + $0x3c] sm:$0x1]
        %v4630 = vshrl.u32 %v4613, 16
        %v4632 = vrot.slane %v4630, 4
        %v4633 = vshll.u32 %v4613, 16
        %v4635 = vrot.slane %v4633, 5
        %v4636 = vor.u32 %v4632, %v4635
        %v4637 = vrot.slane %v4636, 4
        %v4639 = vshll.u32 %v4621, 16
        %v4641 = vrot.slane %v4639, 5
        %v4642 = vsel %vm1674, %v4637, %v4641
        %v4644 = vshrl.u32 %v4614, 16
        %v4646 = vrot.slane %v4644, 4
        %v4647 = vshll.u32 %v4614, 16
        %v4649 = vrot.slane %v4647, 5
        %v4650 = vor.u32 %v4646, %v4649
        %v4651 = vrot.slane %v4650, 4
        %v4653 = vshll.u32 %v4622, 16
        %v4655 = vrot.slane %v4653, 5
        %v4656 = vsel %vm1674, %v4651, %v4655
        %v4658 = vshrl.u32 %v4615, 16
        %v4660 = vrot.slane %v4658, 4
        %v4661 = vshll.u32 %v4615, 16
        %v4663 = vrot.slane %v4661, 5
        %v4664 = vor.u32 %v4660, %v4663
        %v4665 = vrot.slane %v4664, 4
        %v4667 = vshll.u32 %v4623, 16
        %v4669 = vrot.slane %v4667, 5
        %v4670 = vsel %vm1674, %v4665, %v4669
        %v4672 = vshrl.u32 %v4616, 16
        %v4674 = vrot.slane %v4672, 4
        %v4675 = vshll.u32 %v4616, 16
        %v4677 = vrot.slane %v4675, 5
        %v4678 = vor.u32 %v4674, %v4677
        %v4679 = vrot.slane %v4678, 4
        %v4681 = vshll.u32 %v4624, 16
        %v4683 = vrot.slane %v4681, 5
        %v4684 = vsel %vm1674, %v4679, %v4683
        %v4686 = vshrl.u32 %v4617, 16
        %v4688 = vrot.slane %v4686, 4
        %v4689 = vshll.u32 %v4617, 16
        %v4691 = vrot.slane %v4689, 5
        %v4692 = vor.u32 %v4688, %v4691
        %v4693 = vrot.slane %v4692, 4
        %v4695 = vshll.u32 %v4625, 16
        %v4697 = vrot.slane %v4695, 5
        %v4698 = vsel %vm1674, %v4693, %v4697
        %v4700 = vshrl.u32 %v4618, 16
        %v4702 = vrot.slane %v4700, 4
        %v4703 = vshll.u32 %v4618, 16
        %v4705 = vrot.slane %v4703, 5
        %v4706 = vor.u32 %v4702, %v4705
        %v4707 = vrot.slane %v4706, 4
        %v4709 = vshll.u32 %v4626, 16
        %v4711 = vrot.slane %v4709, 5
        %v4712 = vsel %vm1674, %v4707, %v4711
        %v4714 = vshrl.u32 %v4619, 16
        %v4716 = vrot.slane %v4714, 4
        %v4717 = vshll.u32 %v4619, 16
        %v4719 = vrot.slane %v4717, 5
        %v4720 = vor.u32 %v4716, %v4719
        %v4721 = vrot.slane %v4720, 4
        %v4723 = vshll.u32 %v4627, 16
        %v4725 = vrot.slane %v4723, 5
        %v4726 = vsel %vm1674, %v4721, %v4725
        %v4728 = vshrl.u32 %v4620, 16
        %v4730 = vrot.slane %v4728, 4
        %v4731 = vshll.u32 %v4620, 16
        %v4733 = vrot.slane %v4731, 5
        %v4734 = vor.u32 %v4730, %v4733
        %v4735 = vrot.slane %v4734, 4
        %v4737 = vshll.u32 %v4628, 16
        %v4739 = vrot.slane %v4737, 5
        %v4740 = vsel %vm1674, %v4735, %v4739
        %v4741 = vld [vmem:[%s4612] sm:$0xe]
        %v4742 = vld [vmem:[%s4612 + $0x8] sm:$0xe]
        %v4743 = vld [vmem:[%s4612 + $0x10] sm:$0xe]
        %v4744 = vld [vmem:[%s4612 + $0x18] sm:$0xe]
        %v4745 = vld [vmem:[%s4612 + $0x20] sm:$0xe]
        %v4746 = vld [vmem:[%s4612 + $0x28] sm:$0xe]
        %v4747 = vld [vmem:[%s4612 + $0x30] sm:$0xe]
        %v4748 = vld [vmem:[%s4612 + $0x38] sm:$0xe]
        %v4765 = vrot.slane %v4741, 5
        %v4766 = vrot.slane %v4765, 4
        %v4767 = vrot.slane %v4621, 5
        %v4768 = vsel %vm3638, %v4766, %v4767
        %v4769 = vrot.slane %v4742, 5
        %v4770 = vrot.slane %v4769, 4
        %v4771 = vrot.slane %v4622, 5
        %v4772 = vsel %vm3638, %v4770, %v4771
        %v4773 = vrot.slane %v4743, 5
        %v4774 = vrot.slane %v4773, 4
        %v4775 = vrot.slane %v4623, 5
        %v4776 = vsel %vm3638, %v4774, %v4775
        %v4777 = vrot.slane %v4744, 5
        %v4778 = vrot.slane %v4777, 4
        %v4779 = vrot.slane %v4624, 5
        %v4780 = vsel %vm3638, %v4778, %v4779
        %v4781 = vrot.slane %v4745, 5
        %v4782 = vrot.slane %v4781, 4
        %v4783 = vrot.slane %v4625, 5
        %v4784 = vsel %vm3638, %v4782, %v4783
        %v4785 = vrot.slane %v4746, 5
        %v4786 = vrot.slane %v4785, 4
        %v4787 = vrot.slane %v4626, 5
        %v4788 = vsel %vm3638, %v4786, %v4787
        %v4789 = vrot.slane %v4747, 5
        %v4790 = vrot.slane %v4789, 4
        %v4791 = vrot.slane %v4627, 5
        %v4792 = vsel %vm3638, %v4790, %v4791
        %v4793 = vrot.slane %v4748, 5
        %v4794 = vrot.slane %v4793, 4
        %v4795 = vrot.slane %v4628, 5
        %v4796 = vsel %vm3638, %v4794, %v4795
        %v4805 = vunpack.c.l.b16 %v4613
        %v4806 = vunpack.c.l.b16 %v4614
        %v4807 = vunpack.c.l.b16 %v4615
        %v4808 = vunpack.c.l.b16 %v4616
        %v4809 = vunpack.c.l.b16 %v4617
        %v4810 = vunpack.c.l.b16 %v4618
        %v4811 = vunpack.c.l.b16 %v4619
        %v4812 = vunpack.c.l.b16 %v4620
        %v4813 = vpack.c.b16 %v4806, %v4805
        %v4814 = vpack.c.b16 %v4808, %v4807
        %v4815 = vpack.c.b16 %v4810, %v4809
        %v4816 = vpack.c.b16 %v4812, %v4811
        %v4821 = vunpack.c.l.b16 %v4642
        %v4822 = vunpack.c.l.b16 %v4656
        %v4823 = vunpack.c.l.b16 %v4670
        %v4824 = vunpack.c.l.b16 %v4684
        %v4825 = vunpack.c.l.b16 %v4698
        %v4826 = vunpack.c.l.b16 %v4712
        %v4827 = vunpack.c.l.b16 %v4726
        %v4828 = vunpack.c.l.b16 %v4740
        %v4829 = vpack.c.b16 %v4822, %v4821
        %v4830 = vpack.c.b16 %v4824, %v4823
        %v4831 = vpack.c.b16 %v4826, %v4825
        %v4832 = vpack.c.b16 %v4828, %v4827
        %v4837 = vunpack.c.l.b16 %v4768
        %v4838 = vunpack.c.l.b16 %v4772
        %v4839 = vunpack.c.l.b16 %v4776
        %v4840 = vunpack.c.l.b16 %v4780
        %v4841 = vunpack.c.l.b16 %v4784
        %v4842 = vunpack.c.l.b16 %v4788
        %v4843 = vunpack.c.l.b16 %v4792
        %v4844 = vunpack.c.l.b16 %v4796
        %v4845 = vpack.c.b16 %v4838, %v4837
        %v4846 = vpack.c.b16 %v4840, %v4839
        %v4847 = vpack.c.b16 %v4842, %v4841
        %v4848 = vpack.c.b16 %v4844, %v4843
        %s4853 = scalar_lea.vmem %s7, 384
        %v4854 = vld [vmem:[%s4853] sm:$0xf]
        %v4855 = vld [vmem:[%s4853 + $0x4] sm:$0xf]
        %v4856 = vld [vmem:[%s4853 + $0x8] sm:$0xf]
        %v4857 = vld [vmem:[%s4853 + $0xc] sm:$0xf]
        %v4858 = vld [vmem:[%s4853 + $0x10] sm:$0xf]
        %v4859 = vld [vmem:[%s4853 + $0x14] sm:$0xf]
        %v4860 = vld [vmem:[%s4853 + $0x18] sm:$0xf]
        %v4861 = vld [vmem:[%s4853 + $0x1c] sm:$0xf]
        %v4862 = vld [vmem:[%s4853 + $0x20] sm:$0xf]
        %v4863 = vld [vmem:[%s4853 + $0x24] sm:$0xf]
        %v4864 = vld [vmem:[%s4853 + $0x28] sm:$0xf]
        %v4865 = vld [vmem:[%s4853 + $0x2c] sm:$0xf]
        %v4866 = vld [vmem:[%s4853 + $0x30] sm:$0xf]
        %v4867 = vld [vmem:[%s4853 + $0x34] sm:$0xf]
        %v4868 = vld [vmem:[%s4853 + $0x38] sm:$0xf]
        %v4869 = vld [vmem:[%s4853 + $0x3c] sm:$0xf]
        %v4870 = vld [vmem:[%s4853 + $0x40] sm:$0xf]
        %v4871 = vld [vmem:[%s4853 + $0x44] sm:$0xf]
        %v4872 = vld [vmem:[%s4853 + $0x48] sm:$0xf]
        %v4873 = vld [vmem:[%s4853 + $0x4c] sm:$0xf]
        %v4874 = vld [vmem:[%s4853 + $0x50] sm:$0xf]
        %v4875 = vld [vmem:[%s4853 + $0x54] sm:$0xf]
        %v4876 = vld [vmem:[%s4853 + $0x58] sm:$0xf]
        %v4877 = vld [vmem:[%s4853 + $0x5c] sm:$0xf]
        %v4878 = vld [vmem:[%s4853 + $0x60] sm:$0xf]
        %v4879 = vld [vmem:[%s4853 + $0x64] sm:$0xf]
        %v4880 = vld [vmem:[%s4853 + $0x68] sm:$0xf]
        %v4881 = vld [vmem:[%s4853 + $0x6c] sm:$0xf]
        %v4882 = vld [vmem:[%s4853 + $0x70] sm:$0xf]
        %v4883 = vld [vmem:[%s4853 + $0x74] sm:$0xf]
        %v4884 = vld [vmem:[%s4853 + $0x78] sm:$0xf]
        %v4885 = vld [vmem:[%s4853 + $0x7c] sm:$0xf]
        %v4886 = vld [vmem:[%s4853 + $0x80] sm:$0xf]
        %v4887 = vld [vmem:[%s4853 + $0x84] sm:$0xf]
        %v4888 = vld [vmem:[%s4853 + $0x88] sm:$0xf]
        %v4889 = vld [vmem:[%s4853 + $0x8c] sm:$0xf]
        %v4890 = vld [vmem:[%s4853 + $0x90] sm:$0xf]
        %v4891 = vld [vmem:[%s4853 + $0x94] sm:$0xf]
        %v4892 = vld [vmem:[%s4853 + $0x98] sm:$0xf]
        %v4893 = vld [vmem:[%s4853 + $0x9c] sm:$0xf]
        %v4894 = vld [vmem:[%s4853 + $0xa0] sm:$0xf]
        %v4895 = vld [vmem:[%s4853 + $0xa4] sm:$0xf]
        %v4896 = vld [vmem:[%s4853 + $0xa8] sm:$0xf]
        %v4897 = vld [vmem:[%s4853 + $0xac] sm:$0xf]
        %v4898 = vld [vmem:[%s4853 + $0xb0] sm:$0xf]
        %v4899 = vld [vmem:[%s4853 + $0xb4] sm:$0xf]
        %v4900 = vld [vmem:[%s4853 + $0xb8] sm:$0xf]
        %v4901 = vld [vmem:[%s4853 + $0xbc] sm:$0xf]
        %v4950 = vunpack.c.l.b16 %v4854
        %v4951 = vunpack.c.l.b16 %v4855
        %v4952 = vunpack.c.l.b16 %v4856
        %v4953 = vunpack.c.l.b16 %v4857
        %v4954 = vunpack.c.l.b16 %v4858
        %v4955 = vunpack.c.l.b16 %v4859
        %v4956 = vunpack.c.l.b16 %v4860
        %v4957 = vunpack.c.l.b16 %v4861
        %v4958 = vunpack.c.l.b16 %v4862
        %v4959 = vunpack.c.l.b16 %v4863
        %v4960 = vunpack.c.l.b16 %v4864
        %v4961 = vunpack.c.l.b16 %v4865
        %v4962 = vunpack.c.l.b16 %v4866
        %v4963 = vunpack.c.l.b16 %v4867
        %v4964 = vunpack.c.l.b16 %v4868
        %v4965 = vunpack.c.l.b16 %v4869
        %v4966 = vunpack.c.l.b16 %v4870
        %v4967 = vunpack.c.l.b16 %v4871
        %v4968 = vunpack.c.l.b16 %v4872
        %v4969 = vunpack.c.l.b16 %v4873
        %v4970 = vunpack.c.l.b16 %v4874
        %v4971 = vunpack.c.l.b16 %v4875
        %v4972 = vunpack.c.l.b16 %v4876
        %v4973 = vunpack.c.l.b16 %v4877
        %v4974 = vunpack.c.l.b16 %v4878
        %v4975 = vunpack.c.l.b16 %v4879
        %v4976 = vunpack.c.l.b16 %v4880
        %v4977 = vunpack.c.l.b16 %v4881
        %v4978 = vunpack.c.l.b16 %v4882
        %v4979 = vunpack.c.l.b16 %v4883
        %v4980 = vunpack.c.l.b16 %v4884
        %v4981 = vunpack.c.l.b16 %v4885
        %v4982 = vunpack.c.l.b16 %v4886
        %v4983 = vunpack.c.l.b16 %v4887
        %v4984 = vunpack.c.l.b16 %v4888
        %v4985 = vunpack.c.l.b16 %v4889
        %v4986 = vunpack.c.l.b16 %v4890
        %v4987 = vunpack.c.l.b16 %v4891
        %v4988 = vunpack.c.l.b16 %v4892
        %v4989 = vunpack.c.l.b16 %v4893
        %v4990 = vunpack.c.l.b16 %v4894
        %v4991 = vunpack.c.l.b16 %v4895
        %v4992 = vunpack.c.l.b16 %v4896
        %v4993 = vunpack.c.l.b16 %v4897
        %v4994 = vunpack.c.l.b16 %v4898
        %v4995 = vunpack.c.l.b16 %v4899
        %v4996 = vunpack.c.l.b16 %v4900
        %v4997 = vunpack.c.l.b16 %v4901
        %v4998 = vpack.c.b16 %v4951, %v4950
        %v4999 = vpack.c.b16 %v4953, %v4952
        %v5000 = vpack.c.b16 %v4955, %v4954
        %v5001 = vpack.c.b16 %v4957, %v4956
        %v5002 = vpack.c.b16 %v4959, %v4958
        %v5003 = vpack.c.b16 %v4961, %v4960
        %v5004 = vpack.c.b16 %v4963, %v4962
        %v5005 = vpack.c.b16 %v4965, %v4964
        %v5006 = vpack.c.b16 %v4967, %v4966
        %v5007 = vpack.c.b16 %v4969, %v4968
        %v5008 = vpack.c.b16 %v4971, %v4970
        %v5009 = vpack.c.b16 %v4973, %v4972
        %v5010 = vpack.c.b16 %v4975, %v4974
        %v5011 = vpack.c.b16 %v4977, %v4976
        %v5012 = vpack.c.b16 %v4979, %v4978
        %v5013 = vpack.c.b16 %v4981, %v4980
        %v5014 = vpack.c.b16 %v4983, %v4982
        %v5015 = vpack.c.b16 %v4985, %v4984
        %v5016 = vpack.c.b16 %v4987, %v4986
        %v5017 = vpack.c.b16 %v4989, %v4988
        %v5018 = vpack.c.b16 %v4991, %v4990
        %v5019 = vpack.c.b16 %v4993, %v4992
        %v5020 = vpack.c.b16 %v4995, %v4994
        %v5021 = vpack.c.b16 %v4997, %v4996
        %5046 = vmatprep.subr.bf16.mxu0 0
        %5047 = vmatpush1.bf16.msra.mxu0 %v5005
        %5048 = vmatprep.subr.bf16.mxu0 0
        %5049 = vmatpush1.bf16.msra.mxu0 %v5004
        %5050 = vmatprep.subr.bf16.mxu0 0
        %5051 = vmatpush1.bf16.msra.mxu0 %v5003
        %5052 = vmatprep.subr.bf16.mxu0 0
        %5053 = vmatpush1.bf16.msra.mxu0 %v5002
        %5054 = vmatprep.subr.bf16.mxu0 0
        %5055 = vmatpush1.bf16.msra.mxu0 %v5001
        %5056 = vmatprep.subr.bf16.mxu0 0
        %5057 = vmatpush1.bf16.msra.mxu0 %v5000
        %5058 = vmatprep.subr.bf16.mxu0 0
        %5059 = vmatpush1.bf16.msra.mxu0 %v4999
        %5060 = vmatprep.subr.bf16.mxu0 0
        %5061 = vmatpush1.bf16.msra.mxu0 %v4998
        %5062 = vmatprep.subr.bf16.mxu0 0
        %5063 = vmatpush2.bf16.msra.mxu0 %v5013
        %5064 = vmatprep.subr.bf16.mxu0 0
        %5065 = vmatpush2.bf16.msra.mxu0 %v5012
        %5066 = vmatprep.subr.bf16.mxu0 0
        %5067 = vmatpush2.bf16.msra.mxu0 %v5011
        %5068 = vmatprep.subr.bf16.mxu0 0
        %5069 = vmatpush2.bf16.msra.mxu0 %v5010
        %5070 = vmatprep.subr.bf16.mxu0 0
        %5071 = vmatpush2.bf16.msra.mxu0 %v5009
        %5072 = vmatprep.subr.bf16.mxu0 0
        %5073 = vmatpush2.bf16.msra.mxu0 %v5008
        %5074 = vmatprep.subr.bf16.mxu0 0
        %5075 = vmatpush2.bf16.msra.mxu0 %v5007
        %5076 = vmatprep.subr.bf16.mxu0 0
        %5077 = vmatpush2.bf16.msra.mxu0 %v5006
        %5078 = vmatprep.mubr.bf16.mxu0 %v4829
        %5079 = vmatmul.mubr.bf16.gmra.mxu0 %v4813
        %v5080 = vpop.f32.mrf.mxu0
        %v5081 = vadd.f32 0.0, %v5080
        %v5082 = vpop.f32.mrf.mxu0
        %v5083 = vpop.f32.mrf.mxu0
        %v5084 = vadd.f32 0.0, %v5083
        %v5085 = vpop.f32.mrf.mxu0
        %5086 = vmatprep.mubr.bf16.mxu0 %v4830
        %5087 = vmatmul.mubr.bf16.gmra.mxu0 %v4814
        %v5088 = vpop.f32.mrf.mxu0
        %v5089 = vadd.f32 0.0, %v5088
        %v5090 = vpop.f32.mrf.mxu0
        %v5091 = vpop.f32.mrf.mxu0
        %v5092 = vadd.f32 0.0, %v5091
        %v5093 = vpop.f32.mrf.mxu0
        %5094 = vmatprep.mubr.bf16.mxu0 %v4831
        %5095 = vmatmul.mubr.bf16.gmra.mxu0 %v4815
        %v5096 = vpop.f32.mrf.mxu0
        %v5097 = vadd.f32 0.0, %v5096
        %v5098 = vpop.f32.mrf.mxu0
        %v5099 = vpop.f32.mrf.mxu0
        %v5100 = vadd.f32 0.0, %v5099
        %v5101 = vpop.f32.mrf.mxu0
        %5102 = vmatprep.mubr.bf16.mxu0 %v4832
        %5103 = vmatmul.mubr.bf16.gmra.mxu0 %v4816
        %v5104 = vpop.f32.mrf.mxu0
        %v5105 = vadd.f32 0.0, %v5104
        %v5106 = vpop.f32.mrf.mxu0
        %v5107 = vpop.f32.mrf.mxu0
        %v5108 = vadd.f32 0.0, %v5107
        %v5109 = vpop.f32.mrf.mxu0
        %5110 = vdwg.mxu0
        %5111 = vmatprep.subr.bf16.mxu0 0
        %5112 = vmatpush1.bf16.msra.mxu0 %v5021
        %5113 = vmatprep.subr.bf16.mxu0 0
        %5114 = vmatpush1.bf16.msra.mxu0 %v5020
        %5115 = vmatprep.subr.bf16.mxu0 0
        %5116 = vmatpush1.bf16.msra.mxu0 %v5019
        %5117 = vmatprep.subr.bf16.mxu0 0
        %5118 = vmatpush1.bf16.msra.mxu0 %v5018
        %5119 = vmatprep.subr.bf16.mxu0 0
        %5120 = vmatpush1.bf16.msra.mxu0 %v5017
        %5121 = vmatprep.subr.bf16.mxu0 0
        %5122 = vmatpush1.bf16.msra.mxu0 %v5016
        %5123 = vmatprep.subr.bf16.mxu0 0
        %5124 = vmatpush1.bf16.msra.mxu0 %v5015
        %5125 = vmatprep.subr.bf16.mxu0 0
        %5126 = vmatpush1.bf16.msra.mxu0 %v5014
        %5127 = vmatprep.subr.bf16.mxu0 0
        %5128 = vmatpush2.bf16.msra.mxu0 0
        %5129 = vmatprep.subr.bf16.mxu0 0
        %5130 = vmatpush2.bf16.msra.mxu0 0
        %5131 = vmatprep.subr.bf16.mxu0 0
        %5132 = vmatpush2.bf16.msra.mxu0 0
        %5133 = vmatprep.subr.bf16.mxu0 0
        %5134 = vmatpush2.bf16.msra.mxu0 0
        %5135 = vmatprep.subr.bf16.mxu0 0
        %5136 = vmatpush2.bf16.msra.mxu0 0
        %5137 = vmatprep.subr.bf16.mxu0 0
        %5138 = vmatpush2.bf16.msra.mxu0 0
        %5139 = vmatprep.subr.bf16.mxu0 0
        %5140 = vmatpush2.bf16.msra.mxu0 0
        %5141 = vmatprep.subr.bf16.mxu0 0
        %5142 = vmatpush2.bf16.msra.mxu0 0
        %5143 = vmatprep.mubr.bf16.mxu0 0
        %5144 = vmatmul.mubr.bf16.gmra.mxu0 %v4845
        %v5145 = vpop.f32.mrf.mxu0
        %v5146 = vadd.f32 %v5081, %v5145
        %v5147 = vpop.f32.mrf.mxu0
        %v5148 = vpop.f32.mrf.mxu0
        %v5149 = vadd.f32 %v5084, %v5148
        %v5150 = vpop.f32.mrf.mxu0
        %5151 = vmatprep.mubr.bf16.mxu0 0
        %5152 = vmatmul.mubr.bf16.gmra.mxu0 %v4846
        %v5153 = vpop.f32.mrf.mxu0
        %v5154 = vadd.f32 %v5089, %v5153
        %v5155 = vpop.f32.mrf.mxu0
        %v5156 = vpop.f32.mrf.mxu0
        %v5157 = vadd.f32 %v5092, %v5156
        %v5158 = vpop.f32.mrf.mxu0
        %5159 = vmatprep.mubr.bf16.mxu0 0
        %5160 = vmatmul.mubr.bf16.gmra.mxu0 %v4847
        %v5161 = vpop.f32.mrf.mxu0
        %v5162 = vadd.f32 %v5097, %v5161
        %v5163 = vpop.f32.mrf.mxu0
        %v5164 = vpop.f32.mrf.mxu0
        %v5165 = vadd.f32 %v5100, %v5164
        %v5166 = vpop.f32.mrf.mxu0
        %5167 = vmatprep.mubr.bf16.mxu0 0
        %5168 = vmatmul.mubr.bf16.gmra.mxu0 %v4848
        %v5169 = vpop.f32.mrf.mxu0
        %v5170 = vadd.f32 %v5105, %v5169
        %v5171 = vpop.f32.mrf.mxu0
        %v5172 = vpop.f32.mrf.mxu0
        %v5173 = vadd.f32 %v5108, %v5172
        %v5174 = vpop.f32.mrf.mxu0
        %5175 = vdwg.mxu0
        %v5176 = vadd.f32 %v4582, %v5146
        %v5177 = vadd.f32 %v4585, %v5149
        %v5178 = vadd.f32 %v4590, %v5154
        %v5179 = vadd.f32 %v4593, %v5157
        %v5180 = vadd.f32 %v4598, %v5162
        %v5181 = vadd.f32 %v4601, %v5165
        %v5182 = vadd.f32 %v4606, %v5170
        %v5183 = vadd.f32 %v4609, %v5173
        %v5184 = vld [vmem:[%s330 + $0xc] sm:$0xf]
        %v5185 = vld [vmem:[%s330 + $0x2c] sm:$0xf]
        %v5186 = vld [vmem:[%s330 + $0x4c] sm:$0xf]
        %v5187 = vld [vmem:[%s330 + $0x6c] sm:$0xf]
        %v5188 = vld [vmem:[%s330 + $0x8c] sm:$0xf]
        %v5189 = vld [vmem:[%s330 + $0xac] sm:$0xf]
        %v5190 = vld [vmem:[%s330 + $0xcc] sm:$0xf]
        %v5191 = vld [vmem:[%s330 + $0xec] sm:$0xf]
        %v5192 = vld [vmem:[%s8] sm:$0xf]
        %v5193 = vld [vmem:[%s8 + $0x4] sm:$0xf]
        %v5194 = vld [vmem:[%s8 + $0x8] sm:$0xf]
        %v5195 = vld [vmem:[%s8 + $0xc] sm:$0xf]
        %v5196 = vld [vmem:[%s8 + $0x10] sm:$0xf]
        %v5197 = vld [vmem:[%s8 + $0x14] sm:$0xf]
        %v5198 = vld [vmem:[%s8 + $0x18] sm:$0xf]
        %v5199 = vld [vmem:[%s8 + $0x1c] sm:$0xf]
        %v5200 = vld [vmem:[%s8 + $0x20] sm:$0xf]
        %v5201 = vld [vmem:[%s8 + $0x24] sm:$0xf]
        %v5202 = vld [vmem:[%s8 + $0x28] sm:$0xf]
        %v5203 = vld [vmem:[%s8 + $0x2c] sm:$0xf]
        %v5204 = vld [vmem:[%s8 + $0x30] sm:$0xf]
        %v5205 = vld [vmem:[%s8 + $0x34] sm:$0xf]
        %v5206 = vld [vmem:[%s8 + $0x38] sm:$0xf]
        %v5207 = vld [vmem:[%s8 + $0x3c] sm:$0xf]
        %v5216 = vunpack.c.l.b16 %v5184
        %v5217 = vunpack.c.l.b16 %v5185
        %v5218 = vunpack.c.l.b16 %v5186
        %v5219 = vunpack.c.l.b16 %v5187
        %v5220 = vunpack.c.l.b16 %v5188
        %v5221 = vunpack.c.l.b16 %v5189
        %v5222 = vunpack.c.l.b16 %v5190
        %v5223 = vunpack.c.l.b16 %v5191
        %v5224 = vpack.c.b16 %v5217, %v5216
        %v5225 = vpack.c.b16 %v5219, %v5218
        %v5226 = vpack.c.b16 %v5221, %v5220
        %v5227 = vpack.c.b16 %v5223, %v5222
        %v5248 = vunpack.c.l.b16 %v5192
        %v5249 = vunpack.c.l.b16 %v5193
        %v5250 = vunpack.c.l.b16 %v5194
        %v5251 = vunpack.c.l.b16 %v5195
        %v5252 = vunpack.c.l.b16 %v5196
        %v5253 = vunpack.c.l.b16 %v5197
        %v5254 = vunpack.c.l.b16 %v5198
        %v5255 = vunpack.c.l.b16 %v5199
        %v5256 = vunpack.c.l.b16 %v5200
        %v5257 = vunpack.c.l.b16 %v5201
        %v5258 = vunpack.c.l.b16 %v5202
        %v5259 = vunpack.c.l.b16 %v5203
        %v5260 = vunpack.c.l.b16 %v5204
        %v5261 = vunpack.c.l.b16 %v5205
        %v5262 = vunpack.c.l.b16 %v5206
        %v5263 = vunpack.c.l.b16 %v5207
        %v5264 = vpack.c.b16 %v5249, %v5248
        %v5265 = vpack.c.b16 %v5251, %v5250
        %v5266 = vpack.c.b16 %v5253, %v5252
        %v5267 = vpack.c.b16 %v5255, %v5254
        %v5268 = vpack.c.b16 %v5257, %v5256
        %v5269 = vpack.c.b16 %v5259, %v5258
        %v5270 = vpack.c.b16 %v5261, %v5260
        %v5271 = vpack.c.b16 %v5263, %v5262
        %5280 = vmatprep.subr.bf16.mxu0 0
        %5281 = vmatpush1.bf16.msra.mxu0 %v5271
        %5282 = vmatprep.subr.bf16.mxu0 0
        %5283 = vmatpush1.bf16.msra.mxu0 %v5270
        %5284 = vmatprep.subr.bf16.mxu0 0
        %5285 = vmatpush1.bf16.msra.mxu0 %v5269
        %5286 = vmatprep.subr.bf16.mxu0 0
        %5287 = vmatpush1.bf16.msra.mxu0 %v5268
        %5288 = vmatprep.subr.bf16.mxu0 0
        %5289 = vmatpush1.bf16.msra.mxu0 %v5267
        %5290 = vmatprep.subr.bf16.mxu0 0
        %5291 = vmatpush1.bf16.msra.mxu0 %v5266
        %5292 = vmatprep.subr.bf16.mxu0 0
        %5293 = vmatpush1.bf16.msra.mxu0 %v5265
        %5294 = vmatprep.subr.bf16.mxu0 0
        %5295 = vmatpush1.bf16.msra.mxu0 %v5264
        %5296 = vmatprep.subr.bf16.mxu0 0
        %5297 = vmatpush2.bf16.msra.mxu0 0
        %5298 = vmatprep.subr.bf16.mxu0 0
        %5299 = vmatpush2.bf16.msra.mxu0 0
        %5300 = vmatprep.subr.bf16.mxu0 0
        %5301 = vmatpush2.bf16.msra.mxu0 0
        %5302 = vmatprep.subr.bf16.mxu0 0
        %5303 = vmatpush2.bf16.msra.mxu0 0
        %5304 = vmatprep.subr.bf16.mxu0 0
        %5305 = vmatpush2.bf16.msra.mxu0 0
        %5306 = vmatprep.subr.bf16.mxu0 0
        %5307 = vmatpush2.bf16.msra.mxu0 0
        %5308 = vmatprep.subr.bf16.mxu0 0
        %5309 = vmatpush2.bf16.msra.mxu0 0
        %5310 = vmatprep.subr.bf16.mxu0 0
        %5311 = vmatpush2.bf16.msra.mxu0 0
        %5312 = vmatprep.mubr.bf16.mxu0 0
        %5313 = vmatmul.mubr.bf16.gmra.mxu0 %v5224
        %v5314 = vpop.f32.mrf.mxu0
        %v5315 = vadd.f32 0.0, %v5314
        %v5316 = vpop.f32.mrf.mxu0
        %v5317 = vpop.f32.mrf.mxu0
        %v5318 = vadd.f32 0.0, %v5317
        %v5319 = vpop.f32.mrf.mxu0
        %5320 = vmatprep.mubr.bf16.mxu0 0
        %5321 = vmatmul.mubr.bf16.gmra.mxu0 %v5225
        %v5322 = vpop.f32.mrf.mxu0
        %v5323 = vadd.f32 0.0, %v5322
        %v5324 = vpop.f32.mrf.mxu0
        %v5325 = vpop.f32.mrf.mxu0
        %v5326 = vadd.f32 0.0, %v5325
        %v5327 = vpop.f32.mrf.mxu0
        %5328 = vmatprep.mubr.bf16.mxu0 0
        %5329 = vmatmul.mubr.bf16.gmra.mxu0 %v5226
        %v5330 = vpop.f32.mrf.mxu0
        %v5331 = vadd.f32 0.0, %v5330
        %v5332 = vpop.f32.mrf.mxu0
        %v5333 = vpop.f32.mrf.mxu0
        %v5334 = vadd.f32 0.0, %v5333
        %v5335 = vpop.f32.mrf.mxu0
        %5336 = vmatprep.mubr.bf16.mxu0 0
        %5337 = vmatmul.mubr.bf16.gmra.mxu0 %v5227
        %v5338 = vpop.f32.mrf.mxu0
        %v5339 = vadd.f32 0.0, %v5338
        %v5340 = vpop.f32.mrf.mxu0
        %v5341 = vpop.f32.mrf.mxu0
        %v5342 = vadd.f32 0.0, %v5341
        %v5343 = vpop.f32.mrf.mxu0
        %5344 = vdwg.mxu0
        %v5345 = vadd.f32 %v5176, %v5315
        %v5346 = vadd.f32 %v5177, %v5318
        %v5347 = vadd.f32 %v5178, %v5323
        %v5348 = vadd.f32 %v5179, %v5326
        %v5349 = vadd.f32 %v5180, %v5331
        %v5350 = vadd.f32 %v5181, %v5334
        %v5351 = vadd.f32 %v5182, %v5339
        %v5352 = vadd.f32 %v5183, %v5342
        %v5353 = vpack.c.bf16 %v5345, %v5345
        %v5354 = vpack.c.bf16 %v5346, %v5346
        %v5355 = vpack.c.bf16 %v5347, %v5347
        %v5356 = vpack.c.bf16 %v5348, %v5348
        %v5357 = vpack.c.bf16 %v5349, %v5349
        %v5358 = vpack.c.bf16 %v5350, %v5350
        %v5359 = vpack.c.bf16 %v5351, %v5351
        %v5360 = vpack.c.bf16 %v5352, %v5352
        %5361 = vst [vmem:[%s325] sm:$0xf] %v5353
        %5362 = vst [vmem:[%s325 + $0x4] sm:$0xf] %v5354
        %5363 = vst [vmem:[%s325 + $0x8] sm:$0xf] %v5355
        %5364 = vst [vmem:[%s325 + $0xc] sm:$0xf] %v5356
        %5365 = vst [vmem:[%s325 + $0x10] sm:$0xf] %v5357
        %5366 = vst [vmem:[%s325 + $0x14] sm:$0xf] %v5358
        %5367 = vst [vmem:[%s325 + $0x18] sm:$0xf] %v5359
        %5368 = vst [vmem:[%s325 + $0x1c] sm:$0xf] %v5360
        %s5369 = sand.u32 %s225, 1
        %s5370 = scalar_lea.sflag [#allocation5], %s5369
        %s5371 = sand.u32 %s225, 1
        %s5372 = smul.addr %s5371, 32
        %s5373 = scalar_lea.vmem [#allocation4], %s5372
        // Predicated region
        $region57: #{tpu_custom_call.1} parent=55 // pred_check
          %p5374 = pneg %p235
        $region58: #{tpu_custom_call.1} parent=55 // pred_check_branch
          %5376 = sbr.rel (%p5374) target = $region60
        $region59: #{tpu_custom_call.1} parent=55 // pred_region
          %s5378 = ssub.s32 512, 512
          %5379 = vsyncadd %s5370, %s5378
          %s5380 = smul.addr %s23, 8
          %s5381 = smul.addr %s5380, 64
          %s5382 = scalar_lea.hbm %s9, %s5381
          %s5383 = sshll.u32 %s5373, 4
          %s5384 = int_to_ptr.vmem [resolvable:$true] %s5383
          %5389 = dma.vmem_to_hbm [thread:$0]  %s5384, 512, %s5382, %s5370, 64, 64, 4
        $region60: #{tpu_custom_call.1} parent=55 // pred_fallthru
          _
      $region56: #{tpu_custom_call.1} parent=5 // pred_fallthru
        _
      %p5390 = scmp.le.s32.totalorder 2, %s18
      // Predicated region
      $region61: #{tpu_custom_call.1} parent=5 // pred_check
        %p5391 = pneg %p5390
      $region62: #{tpu_custom_call.1} parent=5 // pred_check_branch
        %5393 = sbr.rel (%p5391) target = $region64
      $region63: #{tpu_custom_call.1} parent=5 // pred_region
        %s5394 = ssub.s32 %s18, 2
        // Predicated region
        $region65: #{tpu_custom_call.1} parent=63 // pred_check
          %p5395 = pneg %p241
        $region66: #{tpu_custom_call.1} parent=63 // pred_check_branch
          %5397 = sbr.rel (%p5395) target = $region68
        $region67: #{tpu_custom_call.1} parent=63 // pred_region
          %s5398 = sand.u32 %s226, 1
          %s5399 = scalar_lea.sflag [#allocation5], %s5398
          %s5400 = sand.u32 %s226, 1
          %s5401 = smul.addr %s5400, 32
          %s5402 = scalar_lea.vmem [#allocation4], %s5401
          %5403 = dma.done %s5399, 512
        $region68: #{tpu_custom_call.1} parent=63 // pred_fallthru
          _
      $region64: #{tpu_custom_call.1} parent=5 // pred_fallthru
        _
    $region6: #{tpu_custom_call.1} parent=1 // loop_footer
      %s22 = sadd.s32 1, %s18
    $region7: #{tpu_custom_call.1} parent=1 // loop_footer_branch
      %17 = sbr.rel target = $region3
    $region8: #{tpu_custom_call.1} parent=1 // loop_exit
      _
    %5404 = vsyncpa [#allocation5], 1
    %s5405 = scalar_lea.sflag [#allocation5], 1
    %5406 = vsyncpa %s5405, 1

</llo_original>
